<compile_context>
chip_gen: v5e
topology: v5e:2x2
jax: 0.10.0
libtpu: 0.0.40
codegen_flags: <defaults>
</compile_context>

<pallas_src>
import jax
import jax.numpy as jnp
from jax.experimental import pallas as pl
from jax.experimental.pallas import tpu as pltpu

NUM_BACKBONE_FEATURES = 1000
NUM_BACKBONE_FEATURES_PAD = 1024     # 1000 -> next multiple of 128 (lane-dense)
HIDDEN = 512
NUM_CLASSES = 27
NUM_CLASSES_PAD = 128                # 27 -> 128 (lane-dense output store, no vst.msk)
LANE = 128
SUBLANE_BF16 = 16                    # bf16 packs 2 rows/sublane -> 16-row dense tiles
B_TILE_MAX = 512                     # larger tile amortizes per-step MXU weight pushes
MIN_SPLIT_BATCH = 2 * SUBLANE_BF16   # split into >=2 tiles (v7x has 2 TCs) when possible
FUSE_PROJECTION_MIN_C = 256          # tiny C -> projection K is ~all zero padding; keep in XLA


def _round_up(n, m):
    return ((n + m - 1) // m) * m


def _cdiv(a, b):
    return -(-a // b)


def _batch_tiling(batch):
    """Pick a 16-aligned batch tile that (a) stays <= B_TILE_MAX, (b) yields >=2
    grid steps when the batch allows (so both v7x TensorCores get work), and
    (c) is balanced so the final tile is not mostly zero padding."""
    n_tiles = max(1, _cdiv(batch, B_TILE_MAX))
    if batch >= MIN_SPLIT_BATCH:
        n_tiles = max(n_tiles, 2)
    b_tile = _round_up(_cdiv(batch, n_tiles), SUBLANE_BF16)
    b_pad = _round_up(batch, b_tile)
    return b_tile, b_pad


# ----------------------------------------------------------------------------- kernels


def _head_kernel(z_ref, w1_ref, b1_ref, w2_ref, b2_ref, o_ref):
    # z = backbone logits (bf16, padded to 1024 lanes)
    # ReLU -> Dropout(0.5, eval => identity) -> Linear(1000 -> 512)
    h = jnp.maximum(z_ref[...], 0).astype(jnp.bfloat16)
    h = jnp.dot(h, w1_ref[...], preferred_element_type=jnp.float32) + b1_ref[...]
    # ReLU -> Dropout(0.5, eval => identity) -> Linear(512 -> 27, padded to 128)
    h = jnp.maximum(h, 0.0).astype(jnp.bfloat16)
    out = jnp.dot(h, w2_ref[...], preferred_element_type=jnp.float32) + b2_ref[...]
    o_ref[...] = out.astype(o_ref.dtype)                  # lane-dense store


def _fused_kernel(feat_ref, wp_ref, bp_ref, w1_ref, b1_ref, w2_ref, b2_ref, o_ref):
    # Stand-in backbone projection Linear(C_pad -> 1024), bf16 x bf16 -> f32 acc.
    z = jnp.dot(feat_ref[...], wp_ref[...], preferred_element_type=jnp.float32)
    z = z + bp_ref[...]
    # Head (same as _head_kernel)
    h = jnp.maximum(z, 0.0).astype(jnp.bfloat16)
    h = jnp.dot(h, w1_ref[...], preferred_element_type=jnp.float32) + b1_ref[...]
    h = jnp.maximum(h, 0.0).astype(jnp.bfloat16)
    out = jnp.dot(h, w2_ref[...], preferred_element_type=jnp.float32) + b2_ref[...]
    o_ref[...] = out.astype(o_ref.dtype)


# ----------------------------------------------------------------------------- launch


def _invariant_spec(shape, pipeline_mode):
    """BlockSpec for a grid-invariant operand (constant index_map)."""
    ndim = len(shape)
    index_map = lambda i: (0,) * ndim
    if pipeline_mode is None:
        return pl.BlockSpec(shape, index_map)
    return pl.BlockSpec(shape, index_map, pipeline_mode=pipeline_mode)


def _launch(kernel, data, data_block, weights, b_tile, b_pad, flops, bytes_accessed):
    grid = (b_pad // b_tile,)
    weight_bytes = sum(int(w.size) * w.dtype.itemsize for w in weights)
    in_tile_bytes = b_tile * data.shape[1] * data.dtype.itemsize
    out_tile_bytes = b_tile * NUM_CLASSES_PAD * 4
    # f32 + bf16 activation intermediates the compiler keeps in VMEM scratch.
    act_bytes = b_tile * (NUM_BACKBONE_FEATURES_PAD * 6 + HIDDEN * 6 + NUM_CLASSES_PAD * 8)

    def attempt(single_buffer_weights):
        buffered = getattr(pl, "Buffered", None)
        mode = buffered(1) if (single_buffer_weights and buffered is not None) else None
        wfac = 1 if mode is not None else 2
        need = wfac * weight_bytes + 2 * (in_tile_bytes + out_tile_bytes) + act_bytes
        vmem_limit = int(min(48 << 20, max(8 << 20, (3 * need) // 2 + (2 << 20))))

        in_specs = [pl.BlockSpec(data_block, lambda i: (i, 0))]
        in_specs += [_invariant_spec(w.shape, mode) for w in weights]

        call = pl.pallas_call(
            kernel,
            out_shape=jax.ShapeDtypeStruct((b_pad, NUM_CLASSES_PAD), jnp.float32),
            grid=grid,
            in_specs=in_specs,
            out_specs=pl.BlockSpec((b_tile, NUM_CLASSES_PAD), lambda i: (i, 0)),
            compiler_params=pltpu.CompilerParams(
                dimension_semantics=("parallel",),
                vmem_limit_bytes=vmem_limit,
            ),
            cost_estimate=pl.CostEstimate(
                flops=int(flops), transcendentals=0, bytes_accessed=int(bytes_accessed)),
        )
        return jax.block_until_ready(call(data, *weights))

    try:
        # Single-buffer the never-refetched weights (index_map is constant).
        return attempt(True)
    except Exception:
        # pipeline_mode=pl.Buffered(1) unsupported on this build: fall back to the
        # default double-buffered (still re-fetch-free) weight blocks.
        return attempt(False)


# ----------------------------------------------------------------------------- forward


def classifier_forward(x_nchw, params):
    wp, bp, w1, b1, w2, b2 = params   # padded; weights bf16, biases f32
    B, C, H, W = x_nchw.shape
    c_pad = wp.shape[0]

    # Stand-in backbone GAP hoisted into XLA: x[B,C,H*W] never enters VMEM.
    feat = jnp.mean(x_nchw.astype(jnp.float32).reshape(B, C, H * W), axis=-1)   # [B, C]

    b_tile, b_pad = _batch_tiling(B)

    head_flops = 2 * b_pad * (NUM_BACKBONE_FEATURES_PAD * HIDDEN + HIDDEN * NUM_CLASSES_PAD)
    head_weight_bytes = sum(int(a.size) * a.dtype.itemsize for a in (w1, b1, w2, b2))
    out_bytes = b_pad * NUM_CLASSES_PAD * 4

    if C < FUSE_PROJECTION_MIN_C:
        # Tiny channel count (demo): the C->1000 projection would be ~all
        # zero-padded K on the MXU, so do it in XLA and run only the head kernel.
        z = jnp.dot(feat.astype(jnp.bfloat16), wp[:C],
                    preferred_element_type=jnp.float32) + bp                     # [B, 1024] f32
        z = jnp.pad(z.astype(jnp.bfloat16), ((0, b_pad - B), (0, 0)))            # bf16 before pad
        bytes_accessed = int(z.size) * 2 + head_weight_bytes + out_bytes
        out = _launch(_head_kernel, z, (b_tile, NUM_BACKBONE_FEATURES_PAD),
                      (w1, b1, w2, b2), b_tile, b_pad, head_flops, bytes_accessed)
    else:
        # Realistic backbone width: fuse the projection into the kernel.
        feat = jnp.pad(feat.astype(jnp.bfloat16), ((0, b_pad - B), (0, c_pad - C)))
        flops = head_flops + 2 * b_pad * c_pad * NUM_BACKBONE_FEATURES_PAD
        weight_bytes = head_weight_bytes + int(wp.size) * 2 + int(bp.size) * 4
        bytes_accessed = int(feat.size) * 2 + weight_bytes + out_bytes
        out = _launch(_fused_kernel, feat, (b_tile, c_pad),
                      (wp, bp, w1, b1, w2, b2), b_tile, b_pad, flops, bytes_accessed)

    # Strip batch + class padding.
    return out[:B, :NUM_CLASSES]


# ----------------------------------------------------------------------------- params / ref


def init_params(key, in_channels):
    """MXU-aligned parameters.

    Logical shapes (PyTorch head + GAP->Linear backbone stand-in):
      wp:[C,1000] bp:[1000]  w1:[1000,512] b1:[512]  w2:[512,27] b2:[27]
    Stored zero-padded (C->128k, 1000->1024, 27->128); weights bf16, biases f32.
    Zero padding keeps the math identical to the unpadded module.
    """
    k = jax.random.split(key, 6)
    scale = 0.02
    c_pad = _round_up(in_channels, LANE)

    wp = jnp.zeros((c_pad, NUM_BACKBONE_FEATURES_PAD), jnp.float32)
    wp = wp.at[:in_channels, :NUM_BACKBONE_FEATURES].set(
        scale * jax.random.normal(k[0], (in_channels, NUM_BACKBONE_FEATURES), jnp.float32))
    bp = jnp.zeros((1, NUM_BACKBONE_FEATURES_PAD), jnp.float32)
    bp = bp.at[:, :NUM_BACKBONE_FEATURES].set(
        scale * jax.random.normal(k[1], (1, NUM_BACKBONE_FEATURES), jnp.float32))

    w1 = jnp.zeros((NUM_BACKBONE_FEATURES_PAD, HIDDEN), jnp.float32)
    w1 = w1.at[:NUM_BACKBONE_FEATURES, :].set(
        scale * jax.random.normal(k[2], (NUM_BACKBONE_FEATURES, HIDDEN), jnp.float32))
    b1 = scale * jax.random.normal(k[3], (1, HIDDEN), jnp.float32)

    w2 = jnp.zeros((HIDDEN, NUM_CLASSES_PAD), jnp.float32)
    w2 = w2.at[:, :NUM_CLASSES].set(
        scale * jax.random.normal(k[4], (HIDDEN, NUM_CLASSES), jnp.float32))
    b2 = jnp.zeros((1, NUM_CLASSES_PAD), jnp.float32)
    b2 = b2.at[:, :NUM_CLASSES].set(
        scale * jax.random.normal(k[5], (1, NUM_CLASSES), jnp.float32))

    return (wp.astype(jnp.bfloat16), bp,
            w1.astype(jnp.bfloat16), b1,
            w2.astype(jnp.bfloat16), b2)


def reference_forward(x_nchw, params):
    """Pure-JAX reference mirroring the kernel's bf16-weight / f32-accumulate math."""
    wp, bp, w1, b1, w2, b2 = params
    B, C, H, W = x_nchw.shape
    feat = jnp.mean(x_nchw.astype(jnp.float32).reshape(B, C, H * W), axis=-1)
    z = jnp.dot(feat.astype(jnp.bfloat16), wp[:C], preferred_element_type=jnp.float32) + bp
    h = jnp.maximum(z, 0.0).astype(jnp.bfloat16)
    h = jnp.dot(h, w1, preferred_element_type=jnp.float32) + b1
    h = jnp.maximum(h, 0.0).astype(jnp.bfloat16)
    out = jnp.dot(h, w2, preferred_element_type=jnp.float32) + b2
    return out[:, :NUM_CLASSES]


if __name__ == "__main__":
    key = jax.random.PRNGKey(0)
    kx, kp = jax.random.split(key)

    # Demo shapes from the spec (tiny C -> head-only kernel path).
    B, C, H, W = 2, 4, 16, 16
    x = jax.random.normal(kx, (B, C, H, W), jnp.float32)
    params = init_params(kp, C)

    out = jax.block_until_ready(classifier_forward(x, params))
    ref = reference_forward(x, params)
    assert out.shape == (B, NUM_CLASSES)
    assert jnp.allclose(out, ref, atol=1e-3, rtol=1e-3), "mismatch vs JAX reference"

    # Also exercise the fused-projection kernel path (realistic backbone width).
    B2, C2, H2, W2 = 4, 256, 4, 4
    x2 = jax.random.normal(jax.random.PRNGKey(1), (B2, C2, H2, W2), jnp.float32)
    params2 = init_params(jax.random.PRNGKey(2), C2)
    out2 = jax.block_until_ready(classifier_forward(x2, params2))
    ref2 = reference_forward(x2, params2)
    assert out2.shape == (B2, NUM_CLASSES)
    assert jnp.allclose(out2, ref2, atol=1e-3, rtol=1e-3), "mismatch vs JAX reference (fused)"

    print("KERNEL_OK")
</pallas_src>

<mosaic_0001>
module attributes {stable_mosaic.version = 11 : i64} {
  func.func @_head_kernel(%arg0: i32, %arg1: memref<16x1024xbf16, #tpu.memory_space<vmem>>, %arg2: memref<1024x512xbf16, #tpu.memory_space<vmem>>, %arg3: memref<1x512xf32, #tpu.memory_space<vmem>>, %arg4: memref<512x128xbf16, #tpu.memory_space<vmem>>, %arg5: memref<1x128xf32, #tpu.memory_space<vmem>>, %arg6: memref<16x128xf32, #tpu.memory_space<vmem>>) attributes {dimension_semantics = [#tpu.dimension_semantics<parallel>], iteration_bounds = array<i64: 1>, scalar_prefetch = 0 : i64, scratch_operands = 0 : i64, tpu.core_type = #tpu.core_type<tc>, window_params = [{transform_indices = @transform_0, window_bounds = array<i64: 16, 1024>}, {pipeline_mode = #tpu.pipeline_mode<synchronous>, transform_indices = @transform_1, window_bounds = array<i64: 1024, 512>}, {pipeline_mode = #tpu.pipeline_mode<synchronous>, transform_indices = @transform_2, window_bounds = array<i64: 1, 512>}, {pipeline_mode = #tpu.pipeline_mode<synchronous>, transform_indices = @transform_3, window_bounds = array<i64: 512, 128>}, {pipeline_mode = #tpu.pipeline_mode<synchronous>, transform_indices = @transform_4, window_bounds = array<i64: 1, 128>}, {transform_indices = @transform_5, window_bounds = array<i64: 16, 128>}]} {
    %c0 = arith.constant 0 : index
    %c0_0 = arith.constant 0 : index
    %0 = vector.load %arg1[%c0, %c0_0] : memref<16x1024xbf16, #tpu.memory_space<vmem>>, vector<16x1024xbf16>
    %cst = arith.constant 0.000000e+00 : bf16
    %1 = vector.broadcast %cst : bf16 to vector<16x1024xbf16>
    %2 = arith.maximumf %0, %1 : vector<16x1024xbf16>
    %c0_1 = arith.constant 0 : index
    %c0_2 = arith.constant 0 : index
    %3 = vector.load %arg2[%c0_1, %c0_2] : memref<1024x512xbf16, #tpu.memory_space<vmem>>, vector<1024x512xbf16>
    %cst_3 = arith.constant dense<0.000000e+00> : vector<16x512xf32>
    %4 = tpu.matmul %2, %3, %cst_3 {dimension_numbers = #tpu.dot_dimension_numbers<[1], [0], [0], [1], [0, 0, 1, 1], [], []>} : vector<16x1024xbf16>, vector<1024x512xbf16>, vector<16x512xf32> -> vector<16x512xf32>
    %c0_4 = arith.constant 0 : index
    %c0_5 = arith.constant 0 : index
    %5 = vector.load %arg3[%c0_4, %c0_5] : memref<1x512xf32, #tpu.memory_space<vmem>>, vector<1x512xf32>
    %6 = vector.broadcast %5 : vector<1x512xf32> to vector<16x512xf32>
    %7 = arith.addf %4, %6 : vector<16x512xf32>
    %cst_6 = arith.constant 0.000000e+00 : f32
    %8 = vector.broadcast %cst_6 : f32 to vector<16x512xf32>
    %9 = arith.maximumf %7, %8 : vector<16x512xf32>
    %10 = arith.truncf %9 : vector<16x512xf32> to vector<16x512xbf16>
    %c0_7 = arith.constant 0 : index
    %c0_8 = arith.constant 0 : index
    %11 = vector.load %arg4[%c0_7, %c0_8] : memref<512x128xbf16, #tpu.memory_space<vmem>>, vector<512x128xbf16>
    %cst_9 = arith.constant dense<0.000000e+00> : vector<16x128xf32>
    %12 = tpu.matmul %10, %11, %cst_9 {dimension_numbers = #tpu.dot_dimension_numbers<[1], [0], [0], [1], [0, 0, 1, 1], [], []>} : vector<16x512xbf16>, vector<512x128xbf16>, vector<16x128xf32> -> vector<16x128xf32>
    %c0_10 = arith.constant 0 : index
    %c0_11 = arith.constant 0 : index
    %13 = vector.load %arg5[%c0_10, %c0_11] : memref<1x128xf32, #tpu.memory_space<vmem>>, vector<1x128xf32>
    %14 = vector.broadcast %13 : vector<1x128xf32> to vector<16x128xf32>
    %15 = arith.addf %12, %14 : vector<16x128xf32>
    %c0_12 = arith.constant 0 : index
    %c0_13 = arith.constant 0 : index
    %16 = vector.load %arg6[%c0_12, %c0_13] : memref<16x128xf32, #tpu.memory_space<vmem>>, vector<16x128xf32>
    tpu.vector_store %arg6[%c0_12, %c0_13], %15 {strides = array<i32>} : memref<16x128xf32, #tpu.memory_space<vmem>>, vector<16x128xf32>,
    return
  }
  func.func @transform_0(%arg0: i32) -> (i32, i32) {
    %c0_i32 = arith.constant 0 : i32
    %c0_i32_0 = arith.constant 0 : i32
    return %arg0, %c0_i32 : i32, i32
  }
  func.func @transform_1(%arg0: i32) -> (i32, i32) {
    %c0_i32 = arith.constant 0 : i32
    %c0_i32_0 = arith.constant 0 : i32
    %c0_i32_1 = arith.constant 0 : i32
    return %c0_i32, %c0_i32_0 : i32, i32
  }
  func.func @transform_2(%arg0: i32) -> (i32, i32) {
    %c0_i32 = arith.constant 0 : i32
    %c0_i32_0 = arith.constant 0 : i32
    %c0_i32_1 = arith.constant 0 : i32
    return %c0_i32, %c0_i32_0 : i32, i32
  }
  func.func @transform_3(%arg0: i32) -> (i32, i32) {
    %c0_i32 = arith.constant 0 : i32
    %c0_i32_0 = arith.constant 0 : i32
    %c0_i32_1 = arith.constant 0 : i32
    return %c0_i32, %c0_i32_0 : i32, i32
  }
  func.func @transform_4(%arg0: i32) -> (i32, i32) {
    %c0_i32 = arith.constant 0 : i32
    %c0_i32_0 = arith.constant 0 : i32
    %c0_i32_1 = arith.constant 0 : i32
    return %c0_i32, %c0_i32_0 : i32, i32
  }
  func.func @transform_5(%arg0: i32) -> (i32, i32) {
    %c0_i32 = arith.constant 0 : i32
    %c0_i32_0 = arith.constant 0 : i32
    return %arg0, %c0_i32 : i32, i32
  }
}

module attributes {stable_mosaic.version = 11 : i64} {
  func.func @_head_kernel(%arg0: i32, %arg1: memref<16x1024xbf16, #tpu.memory_space<vmem>>, %arg2: memref<1024x512xbf16, #tpu.memory_space<vmem>>, %arg3: memref<1x512xf32, #tpu.memory_space<vmem>>, %arg4: memref<512x128xbf16, #tpu.memory_space<vmem>>, %arg5: memref<1x128xf32, #tpu.memory_space<vmem>>, %arg6: memref<16x128xf32, #tpu.memory_space<vmem>>) attributes {dimension_semantics = [#tpu.dimension_semantics<parallel>], iteration_bounds = array<i64: 1>, scalar_prefetch = 0 : i64, scratch_operands = 0 : i64, tpu.core_type = #tpu.core_type<tc>, window_params = [{transform_indices = @transform_0, window_bounds = array<i64: 16, 1024>}, {pipeline_mode = #tpu.pipeline_mode<synchronous>, transform_indices = @transform_1, window_bounds = array<i64: 1024, 512>}, {pipeline_mode = #tpu.pipeline_mode<synchronous>, transform_indices = @transform_2, window_bounds = array<i64: 1, 512>}, {pipeline_mode = #tpu.pipeline_mode<synchronous>, transform_indices = @transform_3, window_bounds = array<i64: 512, 128>}, {pipeline_mode = #tpu.pipeline_mode<synchronous>, transform_indices = @transform_4, window_bounds = array<i64: 1, 128>}, {transform_indices = @transform_5, window_bounds = array<i64: 16, 128>}]} {
    %c0 = arith.constant 0 : index
    %c0_0 = arith.constant 0 : index
    %0 = vector.load %arg1[%c0, %c0_0] : memref<16x1024xbf16, #tpu.memory_space<vmem>>, vector<16x1024xbf16>
    %cst = arith.constant 0.000000e+00 : bf16
    %1 = vector.broadcast %cst : bf16 to vector<16x1024xbf16>
    %2 = arith.maximumf %0, %1 : vector<16x1024xbf16>
    %c0_1 = arith.constant 0 : index
    %c0_2 = arith.constant 0 : index
    %3 = vector.load %arg2[%c0_1, %c0_2] : memref<1024x512xbf16, #tpu.memory_space<vmem>>, vector<1024x512xbf16>
    %cst_3 = arith.constant dense<0.000000e+00> : vector<16x512xf32>
    %4 = tpu.matmul %2, %3, %cst_3 {dimension_numbers = #tpu.dot_dimension_numbers<[1], [0], [0], [1], [0, 0, 1, 1], [], []>} : vector<16x1024xbf16>, vector<1024x512xbf16>, vector<16x512xf32> -> vector<16x512xf32>
    %c0_4 = arith.constant 0 : index
    %c0_5 = arith.constant 0 : index
    %5 = vector.load %arg3[%c0_4, %c0_5] : memref<1x512xf32, #tpu.memory_space<vmem>>, vector<1x512xf32>
    %6 = vector.broadcast %5 : vector<1x512xf32> to vector<16x512xf32>
    %7 = arith.addf %4, %6 : vector<16x512xf32>
    %cst_6 = arith.constant 0.000000e+00 : f32
    %8 = vector.broadcast %cst_6 : f32 to vector<16x512xf32>
    %9 = arith.maximumf %7, %8 : vector<16x512xf32>
    %10 = arith.truncf %9 : vector<16x512xf32> to vector<16x512xbf16>
    %c0_7 = arith.constant 0 : index
    %c0_8 = arith.constant 0 : index
    %11 = vector.load %arg4[%c0_7, %c0_8] : memref<512x128xbf16, #tpu.memory_space<vmem>>, vector<512x128xbf16>
    %cst_9 = arith.constant dense<0.000000e+00> : vector<16x128xf32>
    %12 = tpu.matmul %10, %11, %cst_9 {dimension_numbers = #tpu.dot_dimension_numbers<[1], [0], [0], [1], [0, 0, 1, 1], [], []>} : vector<16x512xbf16>, vector<512x128xbf16>, vector<16x128xf32> -> vector<16x128xf32>
    %c0_10 = arith.constant 0 : index
    %c0_11 = arith.constant 0 : index
    %13 = vector.load %arg5[%c0_10, %c0_11] : memref<1x128xf32, #tpu.memory_space<vmem>>, vector<1x128xf32>
    %14 = vector.broadcast %13 : vector<1x128xf32> to vector<16x128xf32>
    %15 = arith.addf %12, %14 : vector<16x128xf32>
    %c0_12 = arith.constant 0 : index
    %c0_13 = arith.constant 0 : index
    %16 = vector.load %arg6[%c0_12, %c0_13] : memref<16x128xf32, #tpu.memory_space<vmem>>, vector<16x128xf32>
    tpu.vector_store %arg6[%c0_12, %c0_13], %15 {strides = array<i32>} : memref<16x128xf32, #tpu.memory_space<vmem>>, vector<16x128xf32>,
    return
  }
  func.func @transform_0(%arg0: i32) -> (i32, i32) {
    %c0_i32 = arith.constant 0 : i32
    %c0_i32_0 = arith.constant 0 : i32
    return %arg0, %c0_i32 : i32, i32
  }
  func.func @transform_1(%arg0: i32) -> (i32, i32) {
    %c0_i32 = arith.constant 0 : i32
    %c0_i32_0 = arith.constant 0 : i32
    %c0_i32_1 = arith.constant 0 : i32
    return %c0_i32, %c0_i32_0 : i32, i32
  }
  func.func @transform_2(%arg0: i32) -> (i32, i32) {
    %c0_i32 = arith.constant 0 : i32
    %c0_i32_0 = arith.constant 0 : i32
    %c0_i32_1 = arith.constant 0 : i32
    return %c0_i32, %c0_i32_0 : i32, i32
  }
  func.func @transform_3(%arg0: i32) -> (i32, i32) {
    %c0_i32 = arith.constant 0 : i32
    %c0_i32_0 = arith.constant 0 : i32
    %c0_i32_1 = arith.constant 0 : i32
    return %c0_i32, %c0_i32_0 : i32, i32
  }
  func.func @transform_4(%arg0: i32) -> (i32, i32) {
    %c0_i32 = arith.constant 0 : i32
    %c0_i32_0 = arith.constant 0 : i32
    %c0_i32_1 = arith.constant 0 : i32
    return %c0_i32, %c0_i32_0 : i32, i32
  }
  func.func @transform_5(%arg0: i32) -> (i32, i32) {
    %c0_i32 = arith.constant 0 : i32
    %c0_i32_0 = arith.constant 0 : i32
    return %arg0, %c0_i32 : i32, i32
  }
}

</mosaic_0001>

<llo_original>
// kernel: tpu_custom_call.1
$region0: #{tpu_custom_call.1}
  #allocation0 [shape = 'u32[]', space=smem, size = 0x4, offset = 0x4, fixed_abs, tag = 'smem constant byte address 0x4 - core index']
  #allocation1 [shape = 'u32[72,128]{1,0:T(1,128)}', space=vmem, size = 0x9000, scoped, tag = 'internal scratch']
  %s0 = inlined_call_operand.hbm [shape: bf16[16,1024], index: 0, kind: input, shape index: {}]
  %s1 = inlined_call_operand.hbm [shape: bf16[1024,512], index: 1, kind: input, shape index: {}]
  %s2 = inlined_call_operand.hbm [shape: f32[1,512], index: 2, kind: input, shape index: {}]
  %s3 = inlined_call_operand.hbm [shape: bf16[512,128], index: 3, kind: input, shape index: {}]
  %s4 = inlined_call_operand.vmem [shape: f32[1,128], index: 4, kind: input, shape index: {}]
  %s5 = inlined_call_operand.hbm [shape: f32[16,128], index: 5, kind: output, shape index: {}]
  %s6 = sld [smem:[#allocation0]]
  $region46: #{tpu_custom_call.1} parent=0
    _
  %s8 = ssub.s32 1, %s6
  %s9 = scalar_select 0, %s8, %s6
  $region1: #{tpu_custom_call.1} parent=0
    #allocation2 [shape = 'u8[32768]{0}', space=vmem, size = 0x8000, scoped, tag = 'input window, operand 0, single buffered']
    #allocation3 [shape = 's32[1]{0}', space=sflag, size = 0x4, scoped, tag = 'scoped memory for tpu_custom_call.1']
    #allocation4 [shape = 's32[1]{0}', space=sflag, size = 0x4, scoped, tag = 'scoped memory for tpu_custom_call.1']
    #allocation5 [shape = 'u8[1048576]{0}', space=vmem, size = 0x100000, scoped, tag = 'input window, operand 1, single buffered']
    #allocation6 [shape = 's32[1]{0}', space=sflag, size = 0x4, scoped, tag = 'scoped memory for tpu_custom_call.1']
    #allocation7 [shape = 'u8[2048]{0}', space=vmem, size = 0x800, scoped, tag = 'input window, operand 2, single buffered']
    #allocation8 [shape = 'u8[131072]{0}', space=vmem, size = 0x20000, scoped, tag = 'input window, operand 3, single buffered']
    #allocation9 [shape = 's32[1]{0}', space=sflag, size = 0x4, scoped, tag = 'scoped memory for tpu_custom_call.1']
    #allocation10 [shape = 'u8[8192]{0}', space=vmem, size = 0x2000, scoped, tag = 'output window, operand 0, single buffered']
    %10 = vsyncpa [#allocation3], 0
    %11 = vsyncpa [#allocation6], 0
    %12 = vsyncpa [#allocation9], 0
    %13 = vsyncpa [#allocation4], 0
    // Predicated region
    $region2: #{tpu_custom_call.1} parent=1 // pred_check
      _
    $region3: #{tpu_custom_call.1} parent=1 // pred_check_branch
      %15 = sbr.rel (0) target = $region5
    $region4: #{tpu_custom_call.1} parent=1 // pred_region
      %17 = vsyncadd [#allocation3], 0
      %s18 = sshll.u32 %s0, 4
      %s19 = int_to_ptr.hbm [resolvable:$true] %s18
      %s20 = sshll.u32 [#allocation2], 4
      %s21 = int_to_ptr.vmem [resolvable:$true] %s20
      %26 = dma.hbm_to_vmem [thread:$0]  %s19, 1024, %s21, [#allocation3], 512, 512, 32
    $region5: #{tpu_custom_call.1} parent=1 // pred_fallthru
      _
    // Predicated region
    $region6: #{tpu_custom_call.1} parent=1 // pred_check
      _
    $region7: #{tpu_custom_call.1} parent=1 // pred_check_branch
      %28 = sbr.rel (0) target = $region9
    $region8: #{tpu_custom_call.1} parent=1 // pred_region
      %30 = vsyncadd [#allocation6], 0
      %s31 = sshll.u32 %s1, 4
      %s32 = int_to_ptr.hbm [resolvable:$true] %s31
      %s33 = sshll.u32 [#allocation5], 4
      %s34 = int_to_ptr.vmem [resolvable:$true] %s33
      %39 = dma.hbm_to_vmem [thread:$0]  %s32, 32768, %s34, [#allocation6], 256, 256, 16
    $region9: #{tpu_custom_call.1} parent=1 // pred_fallthru
      _
    // Predicated region
    $region10: #{tpu_custom_call.1} parent=1 // pred_check
      _
    $region11: #{tpu_custom_call.1} parent=1 // pred_check_branch
      %41 = sbr.rel (0) target = $region13
    $region12: #{tpu_custom_call.1} parent=1 // pred_region
      %43 = vsyncadd [#allocation6], 0
      %s45 = sshll.u32 %s2, 4
      %s46 = int_to_ptr.hbm [resolvable:$true] %s45
      %s47 = sshll.u32 [#allocation7], 4
      %s48 = int_to_ptr.vmem [resolvable:$true] %s47
      %50 = dma.hbm_to_vmem [thread:$0]  %s46, 64, %s48, [#allocation6]
    $region13: #{tpu_custom_call.1} parent=1 // pred_fallthru
      _
    // Predicated region
    $region14: #{tpu_custom_call.1} parent=1 // pred_check
      _
    $region15: #{tpu_custom_call.1} parent=1 // pred_check_branch
      %52 = sbr.rel (0) target = $region17
    $region16: #{tpu_custom_call.1} parent=1 // pred_region
      %54 = vsyncadd [#allocation9], 0
      %s55 = sshll.u32 %s3, 4
      %s56 = int_to_ptr.hbm [resolvable:$true] %s55
      %s57 = sshll.u32 [#allocation8], 4
      %s58 = int_to_ptr.vmem [resolvable:$true] %s57
      %63 = dma.hbm_to_vmem [thread:$0]  %s56, 4096, %s58, [#allocation9], 64, 64, 4
    $region17: #{tpu_custom_call.1} parent=1 // pred_fallthru
      _
    // Predicated region
    $region18: #{tpu_custom_call.1} parent=1 // pred_check
      _
    $region19: #{tpu_custom_call.1} parent=1 // pred_check_branch
      %65 = sbr.rel (0) target = $region21
    $region20: #{tpu_custom_call.1} parent=1 // pred_region
      _
    $region21: #{tpu_custom_call.1} parent=1 // pred_fallthru
      _
    // Predicated region
    $region22: #{tpu_custom_call.1} parent=1 // pred_check
      _
    $region23: #{tpu_custom_call.1} parent=1 // pred_check_branch
      %67 = sbr.rel (0) target = $region25
    $region24: #{tpu_custom_call.1} parent=1 // pred_region
      %69 = dma.done [#allocation3], 1024
    $region25: #{tpu_custom_call.1} parent=1 // pred_fallthru
      _
    // Predicated region
    $region26: #{tpu_custom_call.1} parent=1 // pred_check
      _
    $region27: #{tpu_custom_call.1} parent=1 // pred_check_branch
      %71 = sbr.rel (0) target = $region29
    $region28: #{tpu_custom_call.1} parent=1 // pred_region
      %73 = dma.done [#allocation6], 32768
    $region29: #{tpu_custom_call.1} parent=1 // pred_fallthru
      _
    // Predicated region
    $region30: #{tpu_custom_call.1} parent=1 // pred_check
      _
    $region31: #{tpu_custom_call.1} parent=1 // pred_check_branch
      %75 = sbr.rel (0) target = $region33
    $region32: #{tpu_custom_call.1} parent=1 // pred_region
      %77 = dma.done [#allocation6], 64
    $region33: #{tpu_custom_call.1} parent=1 // pred_fallthru
      _
    // Predicated region
    $region34: #{tpu_custom_call.1} parent=1 // pred_check
      _
    $region35: #{tpu_custom_call.1} parent=1 // pred_check_branch
      %79 = sbr.rel (0) target = $region37
    $region36: #{tpu_custom_call.1} parent=1 // pred_region
      %81 = dma.done [#allocation9], 4096
    $region37: #{tpu_custom_call.1} parent=1 // pred_fallthru
      _
    %v82 = vld [vmem:[#allocation2] sm:$0xff]
    %v83 = vld [vmem:[#allocation2 + $0x8] sm:$0xff]
    %v84 = vld [vmem:[#allocation2 + $0x10] sm:$0xff]
    %v85 = vld [vmem:[#allocation2 + $0x18] sm:$0xff]
    %v86 = vld [vmem:[#allocation2 + $0x20] sm:$0xff]
    %v87 = vld [vmem:[#allocation2 + $0x28] sm:$0xff]
    %v88 = vld [vmem:[#allocation2 + $0x30] sm:$0xff]
    %v89 = vld [vmem:[#allocation2 + $0x38] sm:$0xff]
    %v90 = vunpack.c.l.bf16 %v82
    %v91 = vunpack.c.h.bf16 %v82
    %v92 = vunpack.c.l.bf16 %v83
    %v93 = vunpack.c.h.bf16 %v83
    %v94 = vunpack.c.l.bf16 %v84
    %v95 = vunpack.c.h.bf16 %v84
    %v96 = vunpack.c.l.bf16 %v85
    %v97 = vunpack.c.h.bf16 %v85
    %v98 = vunpack.c.l.bf16 %v86
    %v99 = vunpack.c.h.bf16 %v86
    %v100 = vunpack.c.l.bf16 %v87
    %v101 = vunpack.c.h.bf16 %v87
    %v102 = vunpack.c.l.bf16 %v88
    %v103 = vunpack.c.h.bf16 %v88
    %v104 = vunpack.c.l.bf16 %v89
    %v105 = vunpack.c.h.bf16 %v89
    %v106 = vmax.f32 %v90, 0.0
    %v107 = vmax.f32 %v91, 0.0
    %v108 = vmax.f32 %v92, 0.0
    %v109 = vmax.f32 %v93, 0.0
    %v110 = vmax.f32 %v94, 0.0
    %v111 = vmax.f32 %v95, 0.0
    %v112 = vmax.f32 %v96, 0.0
    %v113 = vmax.f32 %v97, 0.0
    %v114 = vmax.f32 %v98, 0.0
    %v115 = vmax.f32 %v99, 0.0
    %v116 = vmax.f32 %v100, 0.0
    %v117 = vmax.f32 %v101, 0.0
    %v118 = vmax.f32 %v102, 0.0
    %v119 = vmax.f32 %v103, 0.0
    %v120 = vmax.f32 %v104, 0.0
    %v121 = vmax.f32 %v105, 0.0
    %v122 = vpack.c.bf16 %v114, %v106
    %v123 = vpack.c.bf16 %v115, %v107
    %v124 = vpack.c.bf16 %v116, %v108
    %v125 = vpack.c.bf16 %v117, %v109
    %v126 = vpack.c.bf16 %v118, %v110
    %v127 = vpack.c.bf16 %v119, %v111
    %v128 = vpack.c.bf16 %v120, %v112
    %v129 = vpack.c.bf16 %v121, %v113
    %v130 = vld [vmem:[#allocation5] sm:$0xff]
    %v131 = vld [vmem:[#allocation5 + $0x8] sm:$0xff]
    %v132 = vld [vmem:[#allocation5 + $0x10] sm:$0xff]
    %v133 = vld [vmem:[#allocation5 + $0x18] sm:$0xff]
    %v134 = vld [vmem:[#allocation5 + $0x20] sm:$0xff]
    %v135 = vld [vmem:[#allocation5 + $0x28] sm:$0xff]
    %v136 = vld [vmem:[#allocation5 + $0x30] sm:$0xff]
    %v137 = vld [vmem:[#allocation5 + $0x38] sm:$0xff]
    %v138 = vld [vmem:[#allocation5 + $0x40] sm:$0xff]
    %v139 = vld [vmem:[#allocation5 + $0x48] sm:$0xff]
    %v140 = vld [vmem:[#allocation5 + $0x50] sm:$0xff]
    %v141 = vld [vmem:[#allocation5 + $0x58] sm:$0xff]
    %v142 = vld [vmem:[#allocation5 + $0x60] sm:$0xff]
    %v143 = vld [vmem:[#allocation5 + $0x68] sm:$0xff]
    %v144 = vld [vmem:[#allocation5 + $0x70] sm:$0xff]
    %v145 = vld [vmem:[#allocation5 + $0x78] sm:$0xff]
    %v146 = vld [vmem:[#allocation5 + $0x80] sm:$0xff]
    %v147 = vld [vmem:[#allocation5 + $0x88] sm:$0xff]
    %v148 = vld [vmem:[#allocation5 + $0x90] sm:$0xff]
    %v149 = vld [vmem:[#allocation5 + $0x98] sm:$0xff]
    %v150 = vld [vmem:[#allocation5 + $0xa0] sm:$0xff]
    %v151 = vld [vmem:[#allocation5 + $0xa8] sm:$0xff]
    %v152 = vld [vmem:[#allocation5 + $0xb0] sm:$0xff]
    %v153 = vld [vmem:[#allocation5 + $0xb8] sm:$0xff]
    %v154 = vld [vmem:[#allocation5 + $0xc0] sm:$0xff]
    %v155 = vld [vmem:[#allocation5 + $0xc8] sm:$0xff]
    %v156 = vld [vmem:[#allocation5 + $0xd0] sm:$0xff]
    %v157 = vld [vmem:[#allocation5 + $0xd8] sm:$0xff]
    %v158 = vld [vmem:[#allocation5 + $0xe0] sm:$0xff]
    %v159 = vld [vmem:[#allocation5 + $0xe8] sm:$0xff]
    %v160 = vld [vmem:[#allocation5 + $0xf0] sm:$0xff]
    %v161 = vld [vmem:[#allocation5 + $0xf8] sm:$0xff]
    %v162 = vld [vmem:[#allocation5 + $0x100] sm:$0xff]
    %v163 = vld [vmem:[#allocation5 + $0x108] sm:$0xff]
    %v164 = vld [vmem:[#allocation5 + $0x110] sm:$0xff]
    %v165 = vld [vmem:[#allocation5 + $0x118] sm:$0xff]
    %v166 = vld [vmem:[#allocation5 + $0x120] sm:$0xff]
    %v167 = vld [vmem:[#allocation5 + $0x128] sm:$0xff]
    %v168 = vld [vmem:[#allocation5 + $0x130] sm:$0xff]
    %v169 = vld [vmem:[#allocation5 + $0x138] sm:$0xff]
    %v170 = vld [vmem:[#allocation5 + $0x140] sm:$0xff]
    %v171 = vld [vmem:[#allocation5 + $0x148] sm:$0xff]
    %v172 = vld [vmem:[#allocation5 + $0x150] sm:$0xff]
    %v173 = vld [vmem:[#allocation5 + $0x158] sm:$0xff]
    %v174 = vld [vmem:[#allocation5 + $0x160] sm:$0xff]
    %v175 = vld [vmem:[#allocation5 + $0x168] sm:$0xff]
    %v176 = vld [vmem:[#allocation5 + $0x170] sm:$0xff]
    %v177 = vld [vmem:[#allocation5 + $0x178] sm:$0xff]
    %v178 = vld [vmem:[#allocation5 + $0x180] sm:$0xff]
    %v179 = vld [vmem:[#allocation5 + $0x188] sm:$0xff]
    %v180 = vld [vmem:[#allocation5 + $0x190] sm:$0xff]
    %v181 = vld [vmem:[#allocation5 + $0x198] sm:$0xff]
    %v182 = vld [vmem:[#allocation5 + $0x1a0] sm:$0xff]
    %v183 = vld [vmem:[#allocation5 + $0x1a8] sm:$0xff]
    %v184 = vld [vmem:[#allocation5 + $0x1b0] sm:$0xff]
    %v185 = vld [vmem:[#allocation5 + $0x1b8] sm:$0xff]
    %v186 = vld [vmem:[#allocation5 + $0x1c0] sm:$0xff]
    %v187 = vld [vmem:[#allocation5 + $0x1c8] sm:$0xff]
    %v188 = vld [vmem:[#allocation5 + $0x1d0] sm:$0xff]
    %v189 = vld [vmem:[#allocation5 + $0x1d8] sm:$0xff]
    %v190 = vld [vmem:[#allocation5 + $0x1e0] sm:$0xff]
    %v191 = vld [vmem:[#allocation5 + $0x1e8] sm:$0xff]
    %v192 = vld [vmem:[#allocation5 + $0x1f0] sm:$0xff]
    %v193 = vld [vmem:[#allocation5 + $0x1f8] sm:$0xff]
    %v194 = vld [vmem:[#allocation5 + $0x200] sm:$0xff]
    %v195 = vld [vmem:[#allocation5 + $0x208] sm:$0xff]
    %v196 = vld [vmem:[#allocation5 + $0x210] sm:$0xff]
    %v197 = vld [vmem:[#allocation5 + $0x218] sm:$0xff]
    %v198 = vld [vmem:[#allocation5 + $0x220] sm:$0xff]
    %v199 = vld [vmem:[#allocation5 + $0x228] sm:$0xff]
    %v200 = vld [vmem:[#allocation5 + $0x230] sm:$0xff]
    %v201 = vld [vmem:[#allocation5 + $0x238] sm:$0xff]
    %v202 = vld [vmem:[#allocation5 + $0x240] sm:$0xff]
    %v203 = vld [vmem:[#allocation5 + $0x248] sm:$0xff]
    %v204 = vld [vmem:[#allocation5 + $0x250] sm:$0xff]
    %v205 = vld [vmem:[#allocation5 + $0x258] sm:$0xff]
    %v206 = vld [vmem:[#allocation5 + $0x260] sm:$0xff]
    %v207 = vld [vmem:[#allocation5 + $0x268] sm:$0xff]
    %v208 = vld [vmem:[#allocation5 + $0x270] sm:$0xff]
    %v209 = vld [vmem:[#allocation5 + $0x278] sm:$0xff]
    %v210 = vld [vmem:[#allocation5 + $0x280] sm:$0xff]
    %v211 = vld [vmem:[#allocation5 + $0x288] sm:$0xff]
    %v212 = vld [vmem:[#allocation5 + $0x290] sm:$0xff]
    %v213 = vld [vmem:[#allocation5 + $0x298] sm:$0xff]
    %v214 = vld [vmem:[#allocation5 + $0x2a0] sm:$0xff]
    %v215 = vld [vmem:[#allocation5 + $0x2a8] sm:$0xff]
    %v216 = vld [vmem:[#allocation5 + $0x2b0] sm:$0xff]
    %v217 = vld [vmem:[#allocation5 + $0x2b8] sm:$0xff]
    %v218 = vld [vmem:[#allocation5 + $0x2c0] sm:$0xff]
    %v219 = vld [vmem:[#allocation5 + $0x2c8] sm:$0xff]
    %v220 = vld [vmem:[#allocation5 + $0x2d0] sm:$0xff]
    %v221 = vld [vmem:[#allocation5 + $0x2d8] sm:$0xff]
    %v222 = vld [vmem:[#allocation5 + $0x2e0] sm:$0xff]
    %v223 = vld [vmem:[#allocation5 + $0x2e8] sm:$0xff]
    %v224 = vld [vmem:[#allocation5 + $0x2f0] sm:$0xff]
    %v225 = vld [vmem:[#allocation5 + $0x2f8] sm:$0xff]
    %v226 = vld [vmem:[#allocation5 + $0x300] sm:$0xff]
    %v227 = vld [vmem:[#allocation5 + $0x308] sm:$0xff]
    %v228 = vld [vmem:[#allocation5 + $0x310] sm:$0xff]
    %v229 = vld [vmem:[#allocation5 + $0x318] sm:$0xff]
    %v230 = vld [vmem:[#allocation5 + $0x320] sm:$0xff]
    %v231 = vld [vmem:[#allocation5 + $0x328] sm:$0xff]
    %v232 = vld [vmem:[#allocation5 + $0x330] sm:$0xff]
    %v233 = vld [vmem:[#allocation5 + $0x338] sm:$0xff]
    %v234 = vld [vmem:[#allocation5 + $0x340] sm:$0xff]
    %v235 = vld [vmem:[#allocation5 + $0x348] sm:$0xff]
    %v236 = vld [vmem:[#allocation5 + $0x350] sm:$0xff]
    %v237 = vld [vmem:[#allocation5 + $0x358] sm:$0xff]
    %v238 = vld [vmem:[#allocation5 + $0x360] sm:$0xff]
    %v239 = vld [vmem:[#allocation5 + $0x368] sm:$0xff]
    %v240 = vld [vmem:[#allocation5 + $0x370] sm:$0xff]
    %v241 = vld [vmem:[#allocation5 + $0x378] sm:$0xff]
    %v242 = vld [vmem:[#allocation5 + $0x380] sm:$0xff]
    %v243 = vld [vmem:[#allocation5 + $0x388] sm:$0xff]
    %v244 = vld [vmem:[#allocation5 + $0x390] sm:$0xff]
    %v245 = vld [vmem:[#allocation5 + $0x398] sm:$0xff]
    %v246 = vld [vmem:[#allocation5 + $0x3a0] sm:$0xff]
    %v247 = vld [vmem:[#allocation5 + $0x3a8] sm:$0xff]
    %v248 = vld [vmem:[#allocation5 + $0x3b0] sm:$0xff]
    %v249 = vld [vmem:[#allocation5 + $0x3b8] sm:$0xff]
    %v250 = vld [vmem:[#allocation5 + $0x3c0] sm:$0xff]
    %v251 = vld [vmem:[#allocation5 + $0x3c8] sm:$0xff]
    %v252 = vld [vmem:[#allocation5 + $0x3d0] sm:$0xff]
    %v253 = vld [vmem:[#allocation5 + $0x3d8] sm:$0xff]
    %v254 = vld [vmem:[#allocation5 + $0x3e0] sm:$0xff]
    %v255 = vld [vmem:[#allocation5 + $0x3e8] sm:$0xff]
    %v256 = vld [vmem:[#allocation5 + $0x3f0] sm:$0xff]
    %v257 = vld [vmem:[#allocation5 + $0x3f8] sm:$0xff]
    %v258 = vld [vmem:[#allocation5 + $0x400] sm:$0xff]
    %v259 = vld [vmem:[#allocation5 + $0x408] sm:$0xff]
    %v260 = vld [vmem:[#allocation5 + $0x410] sm:$0xff]
    %v261 = vld [vmem:[#allocation5 + $0x418] sm:$0xff]
    %v262 = vld [vmem:[#allocation5 + $0x420] sm:$0xff]
    %v263 = vld [vmem:[#allocation5 + $0x428] sm:$0xff]
    %v264 = vld [vmem:[#allocation5 + $0x430] sm:$0xff]
    %v265 = vld [vmem:[#allocation5 + $0x438] sm:$0xff]
    %v266 = vld [vmem:[#allocation5 + $0x440] sm:$0xff]
    %v267 = vld [vmem:[#allocation5 + $0x448] sm:$0xff]
    %v268 = vld [vmem:[#allocation5 + $0x450] sm:$0xff]
    %v269 = vld [vmem:[#allocation5 + $0x458] sm:$0xff]
    %v270 = vld [vmem:[#allocation5 + $0x460] sm:$0xff]
    %v271 = vld [vmem:[#allocation5 + $0x468] sm:$0xff]
    %v272 = vld [vmem:[#allocation5 + $0x470] sm:$0xff]
    %v273 = vld [vmem:[#allocation5 + $0x478] sm:$0xff]
    %v274 = vld [vmem:[#allocation5 + $0x480] sm:$0xff]
    %v275 = vld [vmem:[#allocation5 + $0x488] sm:$0xff]
    %v276 = vld [vmem:[#allocation5 + $0x490] sm:$0xff]
    %v277 = vld [vmem:[#allocation5 + $0x498] sm:$0xff]
    %v278 = vld [vmem:[#allocation5 + $0x4a0] sm:$0xff]
    %v279 = vld [vmem:[#allocation5 + $0x4a8] sm:$0xff]
    %v280 = vld [vmem:[#allocation5 + $0x4b0] sm:$0xff]
    %v281 = vld [vmem:[#allocation5 + $0x4b8] sm:$0xff]
    %v282 = vld [vmem:[#allocation5 + $0x4c0] sm:$0xff]
    %v283 = vld [vmem:[#allocation5 + $0x4c8] sm:$0xff]
    %v284 = vld [vmem:[#allocation5 + $0x4d0] sm:$0xff]
    %v285 = vld [vmem:[#allocation5 + $0x4d8] sm:$0xff]
    %v286 = vld [vmem:[#allocation5 + $0x4e0] sm:$0xff]
    %v287 = vld [vmem:[#allocation5 + $0x4e8] sm:$0xff]
    %v288 = vld [vmem:[#allocation5 + $0x4f0] sm:$0xff]
    %v289 = vld [vmem:[#allocation5 + $0x4f8] sm:$0xff]
    %v290 = vld [vmem:[#allocation5 + $0x500] sm:$0xff]
    %v291 = vld [vmem:[#allocation5 + $0x508] sm:$0xff]
    %v292 = vld [vmem:[#allocation5 + $0x510] sm:$0xff]
    %v293 = vld [vmem:[#allocation5 + $0x518] sm:$0xff]
    %v294 = vld [vmem:[#allocation5 + $0x520] sm:$0xff]
    %v295 = vld [vmem:[#allocation5 + $0x528] sm:$0xff]
    %v296 = vld [vmem:[#allocation5 + $0x530] sm:$0xff]
    %v297 = vld [vmem:[#allocation5 + $0x538] sm:$0xff]
    %v298 = vld [vmem:[#allocation5 + $0x540] sm:$0xff]
    %v299 = vld [vmem:[#allocation5 + $0x548] sm:$0xff]
    %v300 = vld [vmem:[#allocation5 + $0x550] sm:$0xff]
    %v301 = vld [vmem:[#allocation5 + $0x558] sm:$0xff]
    %v302 = vld [vmem:[#allocation5 + $0x560] sm:$0xff]
    %v303 = vld [vmem:[#allocation5 + $0x568] sm:$0xff]
    %v304 = vld [vmem:[#allocation5 + $0x570] sm:$0xff]
    %v305 = vld [vmem:[#allocation5 + $0x578] sm:$0xff]
    %v306 = vld [vmem:[#allocation5 + $0x580] sm:$0xff]
    %v307 = vld [vmem:[#allocation5 + $0x588] sm:$0xff]
    %v308 = vld [vmem:[#allocation5 + $0x590] sm:$0xff]
    %v309 = vld [vmem:[#allocation5 + $0x598] sm:$0xff]
    %v310 = vld [vmem:[#allocation5 + $0x5a0] sm:$0xff]
    %v311 = vld [vmem:[#allocation5 + $0x5a8] sm:$0xff]
    %v312 = vld [vmem:[#allocation5 + $0x5b0] sm:$0xff]
    %v313 = vld [vmem:[#allocation5 + $0x5b8] sm:$0xff]
    %v314 = vld [vmem:[#allocation5 + $0x5c0] sm:$0xff]
    %v315 = vld [vmem:[#allocation5 + $0x5c8] sm:$0xff]
    %v316 = vld [vmem:[#allocation5 + $0x5d0] sm:$0xff]
    %v317 = vld [vmem:[#allocation5 + $0x5d8] sm:$0xff]
    %v318 = vld [vmem:[#allocation5 + $0x5e0] sm:$0xff]
    %v319 = vld [vmem:[#allocation5 + $0x5e8] sm:$0xff]
    %v320 = vld [vmem:[#allocation5 + $0x5f0] sm:$0xff]
    %v321 = vld [vmem:[#allocation5 + $0x5f8] sm:$0xff]
    %v322 = vld [vmem:[#allocation5 + $0x600] sm:$0xff]
    %v323 = vld [vmem:[#allocation5 + $0x608] sm:$0xff]
    %v324 = vld [vmem:[#allocation5 + $0x610] sm:$0xff]
    %v325 = vld [vmem:[#allocation5 + $0x618] sm:$0xff]
    %v326 = vld [vmem:[#allocation5 + $0x620] sm:$0xff]
    %v327 = vld [vmem:[#allocation5 + $0x628] sm:$0xff]
    %v328 = vld [vmem:[#allocation5 + $0x630] sm:$0xff]
    %v329 = vld [vmem:[#allocation5 + $0x638] sm:$0xff]
    %v330 = vld [vmem:[#allocation5 + $0x640] sm:$0xff]
    %v331 = vld [vmem:[#allocation5 + $0x648] sm:$0xff]
    %v332 = vld [vmem:[#allocation5 + $0x650] sm:$0xff]
    %v333 = vld [vmem:[#allocation5 + $0x658] sm:$0xff]
    %v334 = vld [vmem:[#allocation5 + $0x660] sm:$0xff]
    %v335 = vld [vmem:[#allocation5 + $0x668] sm:$0xff]
    %v336 = vld [vmem:[#allocation5 + $0x670] sm:$0xff]
    %v337 = vld [vmem:[#allocation5 + $0x678] sm:$0xff]
    %v338 = vld [vmem:[#allocation5 + $0x680] sm:$0xff]
    %v339 = vld [vmem:[#allocation5 + $0x688] sm:$0xff]
    %v340 = vld [vmem:[#allocation5 + $0x690] sm:$0xff]
    %v341 = vld [vmem:[#allocation5 + $0x698] sm:$0xff]
    %v342 = vld [vmem:[#allocation5 + $0x6a0] sm:$0xff]
    %v343 = vld [vmem:[#allocation5 + $0x6a8] sm:$0xff]
    %v344 = vld [vmem:[#allocation5 + $0x6b0] sm:$0xff]
    %v345 = vld [vmem:[#allocation5 + $0x6b8] sm:$0xff]
    %v346 = vld [vmem:[#allocation5 + $0x6c0] sm:$0xff]
    %v347 = vld [vmem:[#allocation5 + $0x6c8] sm:$0xff]
    %v348 = vld [vmem:[#allocation5 + $0x6d0] sm:$0xff]
    %v349 = vld [vmem:[#allocation5 + $0x6d8] sm:$0xff]
    %v350 = vld [vmem:[#allocation5 + $0x6e0] sm:$0xff]
    %v351 = vld [vmem:[#allocation5 + $0x6e8] sm:$0xff]
    %v352 = vld [vmem:[#allocation5 + $0x6f0] sm:$0xff]
    %v353 = vld [vmem:[#allocation5 + $0x6f8] sm:$0xff]
    %v354 = vld [vmem:[#allocation5 + $0x700] sm:$0xff]
    %v355 = vld [vmem:[#allocation5 + $0x708] sm:$0xff]
    %v356 = vld [vmem:[#allocation5 + $0x710] sm:$0xff]
    %v357 = vld [vmem:[#allocation5 + $0x718] sm:$0xff]
    %v358 = vld [vmem:[#allocation5 + $0x720] sm:$0xff]
    %v359 = vld [vmem:[#allocation5 + $0x728] sm:$0xff]
    %v360 = vld [vmem:[#allocation5 + $0x730] sm:$0xff]
    %v361 = vld [vmem:[#allocation5 + $0x738] sm:$0xff]
    %v362 = vld [vmem:[#allocation5 + $0x740] sm:$0xff]
    %v363 = vld [vmem:[#allocation5 + $0x748] sm:$0xff]
    %v364 = vld [vmem:[#allocation5 + $0x750] sm:$0xff]
    %v365 = vld [vmem:[#allocation5 + $0x758] sm:$0xff]
    %v366 = vld [vmem:[#allocation5 + $0x760] sm:$0xff]
    %v367 = vld [vmem:[#allocation5 + $0x768] sm:$0xff]
    %v368 = vld [vmem:[#allocation5 + $0x770] sm:$0xff]
    %v369 = vld [vmem:[#allocation5 + $0x778] sm:$0xff]
    %v370 = vld [vmem:[#allocation5 + $0x780] sm:$0xff]
    %v371 = vld [vmem:[#allocation5 + $0x788] sm:$0xff]
    %v372 = vld [vmem:[#allocation5 + $0x790] sm:$0xff]
    %v373 = vld [vmem:[#allocation5 + $0x798] sm:$0xff]
    %v374 = vld [vmem:[#allocation5 + $0x7a0] sm:$0xff]
    %v375 = vld [vmem:[#allocation5 + $0x7a8] sm:$0xff]
    %v376 = vld [vmem:[#allocation5 + $0x7b0] sm:$0xff]
    %v377 = vld [vmem:[#allocation5 + $0x7b8] sm:$0xff]
    %v378 = vld [vmem:[#allocation5 + $0x7c0] sm:$0xff]
    %v379 = vld [vmem:[#allocation5 + $0x7c8] sm:$0xff]
    %v380 = vld [vmem:[#allocation5 + $0x7d0] sm:$0xff]
    %v381 = vld [vmem:[#allocation5 + $0x7d8] sm:$0xff]
    %v382 = vld [vmem:[#allocation5 + $0x7e0] sm:$0xff]
    %v383 = vld [vmem:[#allocation5 + $0x7e8] sm:$0xff]
    %v384 = vld [vmem:[#allocation5 + $0x7f0] sm:$0xff]
    %v385 = vld [vmem:[#allocation5 + $0x7f8] sm:$0xff]
    %v386 = vld [vmem:[#allocation7] sm:$0xf]
    %v388 = vperm.slane %v386, 0
    %v389 = vperm.slane %v386, 1
    %v390 = vperm.slane %v386, 2
    %v391 = vperm.slane %v386, 3
    %v652 = vunpack.c.l.b16 %v130
    %v653 = vunpack.c.h.b16 %v130
    %v654 = vunpack.c.l.b16 %v131
    %v655 = vunpack.c.h.b16 %v131
    %v656 = vunpack.c.l.b16 %v132
    %v657 = vunpack.c.h.b16 %v132
    %v658 = vunpack.c.l.b16 %v133
    %v659 = vunpack.c.h.b16 %v133
    %v660 = vunpack.c.l.b16 %v134
    %v661 = vunpack.c.h.b16 %v134
    %v662 = vunpack.c.l.b16 %v135
    %v663 = vunpack.c.h.b16 %v135
    %v664 = vunpack.c.l.b16 %v136
    %v665 = vunpack.c.h.b16 %v136
    %v666 = vunpack.c.l.b16 %v137
    %v667 = vunpack.c.h.b16 %v137
    %v668 = vunpack.c.l.b16 %v138
    %v669 = vunpack.c.h.b16 %v138
    %v670 = vunpack.c.l.b16 %v139
    %v671 = vunpack.c.h.b16 %v139
    %v672 = vunpack.c.l.b16 %v140
    %v673 = vunpack.c.h.b16 %v140
    %v674 = vunpack.c.l.b16 %v141
    %v675 = vunpack.c.h.b16 %v141
    %v676 = vunpack.c.l.b16 %v142
    %v677 = vunpack.c.h.b16 %v142
    %v678 = vunpack.c.l.b16 %v143
    %v679 = vunpack.c.h.b16 %v143
    %v680 = vunpack.c.l.b16 %v144
    %v681 = vunpack.c.h.b16 %v144
    %v682 = vunpack.c.l.b16 %v145
    %v683 = vunpack.c.h.b16 %v145
    %v684 = vunpack.c.l.b16 %v146
    %v685 = vunpack.c.h.b16 %v146
    %v686 = vunpack.c.l.b16 %v147
    %v687 = vunpack.c.h.b16 %v147
    %v688 = vunpack.c.l.b16 %v148
    %v689 = vunpack.c.h.b16 %v148
    %v690 = vunpack.c.l.b16 %v149
    %v691 = vunpack.c.h.b16 %v149
    %v692 = vunpack.c.l.b16 %v150
    %v693 = vunpack.c.h.b16 %v150
    %v694 = vunpack.c.l.b16 %v151
    %v695 = vunpack.c.h.b16 %v151
    %v696 = vunpack.c.l.b16 %v152
    %v697 = vunpack.c.h.b16 %v152
    %v698 = vunpack.c.l.b16 %v153
    %v699 = vunpack.c.h.b16 %v153
    %v700 = vunpack.c.l.b16 %v154
    %v701 = vunpack.c.h.b16 %v154
    %v702 = vunpack.c.l.b16 %v155
    %v703 = vunpack.c.h.b16 %v155
    %v704 = vunpack.c.l.b16 %v156
    %v705 = vunpack.c.h.b16 %v156
    %v706 = vunpack.c.l.b16 %v157
    %v707 = vunpack.c.h.b16 %v157
    %v708 = vunpack.c.l.b16 %v158
    %v709 = vunpack.c.h.b16 %v158
    %v710 = vunpack.c.l.b16 %v159
    %v711 = vunpack.c.h.b16 %v159
    %v712 = vunpack.c.l.b16 %v160
    %v713 = vunpack.c.h.b16 %v160
    %v714 = vunpack.c.l.b16 %v161
    %v715 = vunpack.c.h.b16 %v161
    %v716 = vunpack.c.l.b16 %v162
    %v717 = vunpack.c.h.b16 %v162
    %v718 = vunpack.c.l.b16 %v163
    %v719 = vunpack.c.h.b16 %v163
    %v720 = vunpack.c.l.b16 %v164
    %v721 = vunpack.c.h.b16 %v164
    %v722 = vunpack.c.l.b16 %v165
    %v723 = vunpack.c.h.b16 %v165
    %v724 = vunpack.c.l.b16 %v166
    %v725 = vunpack.c.h.b16 %v166
    %v726 = vunpack.c.l.b16 %v167
    %v727 = vunpack.c.h.b16 %v167
    %v728 = vunpack.c.l.b16 %v168
    %v729 = vunpack.c.h.b16 %v168
    %v730 = vunpack.c.l.b16 %v169
    %v731 = vunpack.c.h.b16 %v169
    %v732 = vunpack.c.l.b16 %v170
    %v733 = vunpack.c.h.b16 %v170
    %v734 = vunpack.c.l.b16 %v171
    %v735 = vunpack.c.h.b16 %v171
    %v736 = vunpack.c.l.b16 %v172
    %v737 = vunpack.c.h.b16 %v172
    %v738 = vunpack.c.l.b16 %v173
    %v739 = vunpack.c.h.b16 %v173
    %v740 = vunpack.c.l.b16 %v174
    %v741 = vunpack.c.h.b16 %v174
    %v742 = vunpack.c.l.b16 %v175
    %v743 = vunpack.c.h.b16 %v175
    %v744 = vunpack.c.l.b16 %v176
    %v745 = vunpack.c.h.b16 %v176
    %v746 = vunpack.c.l.b16 %v177
    %v747 = vunpack.c.h.b16 %v177
    %v748 = vunpack.c.l.b16 %v178
    %v749 = vunpack.c.h.b16 %v178
    %v750 = vunpack.c.l.b16 %v179
    %v751 = vunpack.c.h.b16 %v179
    %v752 = vunpack.c.l.b16 %v180
    %v753 = vunpack.c.h.b16 %v180
    %v754 = vunpack.c.l.b16 %v181
    %v755 = vunpack.c.h.b16 %v181
    %v756 = vunpack.c.l.b16 %v182
    %v757 = vunpack.c.h.b16 %v182
    %v758 = vunpack.c.l.b16 %v183
    %v759 = vunpack.c.h.b16 %v183
    %v760 = vunpack.c.l.b16 %v184
    %v761 = vunpack.c.h.b16 %v184
    %v762 = vunpack.c.l.b16 %v185
    %v763 = vunpack.c.h.b16 %v185
    %v764 = vunpack.c.l.b16 %v186
    %v765 = vunpack.c.h.b16 %v186
    %v766 = vunpack.c.l.b16 %v187
    %v767 = vunpack.c.h.b16 %v187
    %v768 = vunpack.c.l.b16 %v188
    %v769 = vunpack.c.h.b16 %v188
    %v770 = vunpack.c.l.b16 %v189
    %v771 = vunpack.c.h.b16 %v189
    %v772 = vunpack.c.l.b16 %v190
    %v773 = vunpack.c.h.b16 %v190
    %v774 = vunpack.c.l.b16 %v191
    %v775 = vunpack.c.h.b16 %v191
    %v776 = vunpack.c.l.b16 %v192
    %v777 = vunpack.c.h.b16 %v192
    %v778 = vunpack.c.l.b16 %v193
    %v779 = vunpack.c.h.b16 %v193
    %v780 = vunpack.c.l.b16 %v194
    %v781 = vunpack.c.h.b16 %v194
    %v782 = vunpack.c.l.b16 %v195
    %v783 = vunpack.c.h.b16 %v195
    %v784 = vunpack.c.l.b16 %v196
    %v785 = vunpack.c.h.b16 %v196
    %v786 = vunpack.c.l.b16 %v197
    %v787 = vunpack.c.h.b16 %v197
    %v788 = vunpack.c.l.b16 %v198
    %v789 = vunpack.c.h.b16 %v198
    %v790 = vunpack.c.l.b16 %v199
    %v791 = vunpack.c.h.b16 %v199
    %v792 = vunpack.c.l.b16 %v200
    %v793 = vunpack.c.h.b16 %v200
    %v794 = vunpack.c.l.b16 %v201
    %v795 = vunpack.c.h.b16 %v201
    %v796 = vunpack.c.l.b16 %v202
    %v797 = vunpack.c.h.b16 %v202
    %v798 = vunpack.c.l.b16 %v203
    %v799 = vunpack.c.h.b16 %v203
    %v800 = vunpack.c.l.b16 %v204
    %v801 = vunpack.c.h.b16 %v204
    %v802 = vunpack.c.l.b16 %v205
    %v803 = vunpack.c.h.b16 %v205
    %v804 = vunpack.c.l.b16 %v206
    %v805 = vunpack.c.h.b16 %v206
    %v806 = vunpack.c.l.b16 %v207
    %v807 = vunpack.c.h.b16 %v207
    %v808 = vunpack.c.l.b16 %v208
    %v809 = vunpack.c.h.b16 %v208
    %v810 = vunpack.c.l.b16 %v209
    %v811 = vunpack.c.h.b16 %v209
    %v812 = vunpack.c.l.b16 %v210
    %v813 = vunpack.c.h.b16 %v210
    %v814 = vunpack.c.l.b16 %v211
    %v815 = vunpack.c.h.b16 %v211
    %v816 = vunpack.c.l.b16 %v212
    %v817 = vunpack.c.h.b16 %v212
    %v818 = vunpack.c.l.b16 %v213
    %v819 = vunpack.c.h.b16 %v213
    %v820 = vunpack.c.l.b16 %v214
    %v821 = vunpack.c.h.b16 %v214
    %v822 = vunpack.c.l.b16 %v215
    %v823 = vunpack.c.h.b16 %v215
    %v824 = vunpack.c.l.b16 %v216
    %v825 = vunpack.c.h.b16 %v216
    %v826 = vunpack.c.l.b16 %v217
    %v827 = vunpack.c.h.b16 %v217
    %v828 = vunpack.c.l.b16 %v218
    %v829 = vunpack.c.h.b16 %v218
    %v830 = vunpack.c.l.b16 %v219
    %v831 = vunpack.c.h.b16 %v219
    %v832 = vunpack.c.l.b16 %v220
    %v833 = vunpack.c.h.b16 %v220
    %v834 = vunpack.c.l.b16 %v221
    %v835 = vunpack.c.h.b16 %v221
    %v836 = vunpack.c.l.b16 %v222
    %v837 = vunpack.c.h.b16 %v222
    %v838 = vunpack.c.l.b16 %v223
    %v839 = vunpack.c.h.b16 %v223
    %v840 = vunpack.c.l.b16 %v224
    %v841 = vunpack.c.h.b16 %v224
    %v842 = vunpack.c.l.b16 %v225
    %v843 = vunpack.c.h.b16 %v225
    %v844 = vunpack.c.l.b16 %v226
    %v845 = vunpack.c.h.b16 %v226
    %v846 = vunpack.c.l.b16 %v227
    %v847 = vunpack.c.h.b16 %v227
    %v848 = vunpack.c.l.b16 %v228
    %v849 = vunpack.c.h.b16 %v228
    %v850 = vunpack.c.l.b16 %v229
    %v851 = vunpack.c.h.b16 %v229
    %v852 = vunpack.c.l.b16 %v230
    %v853 = vunpack.c.h.b16 %v230
    %v854 = vunpack.c.l.b16 %v231
    %v855 = vunpack.c.h.b16 %v231
    %v856 = vunpack.c.l.b16 %v232
    %v857 = vunpack.c.h.b16 %v232
    %v858 = vunpack.c.l.b16 %v233
    %v859 = vunpack.c.h.b16 %v233
    %v860 = vunpack.c.l.b16 %v234
    %v861 = vunpack.c.h.b16 %v234
    %v862 = vunpack.c.l.b16 %v235
    %v863 = vunpack.c.h.b16 %v235
    %v864 = vunpack.c.l.b16 %v236
    %v865 = vunpack.c.h.b16 %v236
    %v866 = vunpack.c.l.b16 %v237
    %v867 = vunpack.c.h.b16 %v237
    %v868 = vunpack.c.l.b16 %v238
    %v869 = vunpack.c.h.b16 %v238
    %v870 = vunpack.c.l.b16 %v239
    %v871 = vunpack.c.h.b16 %v239
    %v872 = vunpack.c.l.b16 %v240
    %v873 = vunpack.c.h.b16 %v240
    %v874 = vunpack.c.l.b16 %v241
    %v875 = vunpack.c.h.b16 %v241
    %v876 = vunpack.c.l.b16 %v242
    %v877 = vunpack.c.h.b16 %v242
    %v878 = vunpack.c.l.b16 %v243
    %v879 = vunpack.c.h.b16 %v243
    %v880 = vunpack.c.l.b16 %v244
    %v881 = vunpack.c.h.b16 %v244
    %v882 = vunpack.c.l.b16 %v245
    %v883 = vunpack.c.h.b16 %v245
    %v884 = vunpack.c.l.b16 %v246
    %v885 = vunpack.c.h.b16 %v246
    %v886 = vunpack.c.l.b16 %v247
    %v887 = vunpack.c.h.b16 %v247
    %v888 = vunpack.c.l.b16 %v248
    %v889 = vunpack.c.h.b16 %v248
    %v890 = vunpack.c.l.b16 %v249
    %v891 = vunpack.c.h.b16 %v249
    %v892 = vunpack.c.l.b16 %v250
    %v893 = vunpack.c.h.b16 %v250
    %v894 = vunpack.c.l.b16 %v251
    %v895 = vunpack.c.h.b16 %v251
    %v896 = vunpack.c.l.b16 %v252
    %v897 = vunpack.c.h.b16 %v252
    %v898 = vunpack.c.l.b16 %v253
    %v899 = vunpack.c.h.b16 %v253
    %v900 = vunpack.c.l.b16 %v254
    %v901 = vunpack.c.h.b16 %v254
    %v902 = vunpack.c.l.b16 %v255
    %v903 = vunpack.c.h.b16 %v255
    %v904 = vunpack.c.l.b16 %v256
    %v905 = vunpack.c.h.b16 %v256
    %v906 = vunpack.c.l.b16 %v257
    %v907 = vunpack.c.h.b16 %v257
    %v908 = vunpack.c.l.b16 %v258
    %v909 = vunpack.c.h.b16 %v258
    %v910 = vunpack.c.l.b16 %v259
    %v911 = vunpack.c.h.b16 %v259
    %v912 = vunpack.c.l.b16 %v260
    %v913 = vunpack.c.h.b16 %v260
    %v914 = vunpack.c.l.b16 %v261
    %v915 = vunpack.c.h.b16 %v261
    %v916 = vunpack.c.l.b16 %v262
    %v917 = vunpack.c.h.b16 %v262
    %v918 = vunpack.c.l.b16 %v263
    %v919 = vunpack.c.h.b16 %v263
    %v920 = vunpack.c.l.b16 %v264
    %v921 = vunpack.c.h.b16 %v264
    %v922 = vunpack.c.l.b16 %v265
    %v923 = vunpack.c.h.b16 %v265
    %v924 = vunpack.c.l.b16 %v266
    %v925 = vunpack.c.h.b16 %v266
    %v926 = vunpack.c.l.b16 %v267
    %v927 = vunpack.c.h.b16 %v267
    %v928 = vunpack.c.l.b16 %v268
    %v929 = vunpack.c.h.b16 %v268
    %v930 = vunpack.c.l.b16 %v269
    %v931 = vunpack.c.h.b16 %v269
    %v932 = vunpack.c.l.b16 %v270
    %v933 = vunpack.c.h.b16 %v270
    %v934 = vunpack.c.l.b16 %v271
    %v935 = vunpack.c.h.b16 %v271
    %v936 = vunpack.c.l.b16 %v272
    %v937 = vunpack.c.h.b16 %v272
    %v938 = vunpack.c.l.b16 %v273
    %v939 = vunpack.c.h.b16 %v273
    %v940 = vunpack.c.l.b16 %v274
    %v941 = vunpack.c.h.b16 %v274
    %v942 = vunpack.c.l.b16 %v275
    %v943 = vunpack.c.h.b16 %v275
    %v944 = vunpack.c.l.b16 %v276
    %v945 = vunpack.c.h.b16 %v276
    %v946 = vunpack.c.l.b16 %v277
    %v947 = vunpack.c.h.b16 %v277
    %v948 = vunpack.c.l.b16 %v278
    %v949 = vunpack.c.h.b16 %v278
    %v950 = vunpack.c.l.b16 %v279
    %v951 = vunpack.c.h.b16 %v279
    %v952 = vunpack.c.l.b16 %v280
    %v953 = vunpack.c.h.b16 %v280
    %v954 = vunpack.c.l.b16 %v281
    %v955 = vunpack.c.h.b16 %v281
    %v956 = vunpack.c.l.b16 %v282
    %v957 = vunpack.c.h.b16 %v282
    %v958 = vunpack.c.l.b16 %v283
    %v959 = vunpack.c.h.b16 %v283
    %v960 = vunpack.c.l.b16 %v284
    %v961 = vunpack.c.h.b16 %v284
    %v962 = vunpack.c.l.b16 %v285
    %v963 = vunpack.c.h.b16 %v285
    %v964 = vunpack.c.l.b16 %v286
    %v965 = vunpack.c.h.b16 %v286
    %v966 = vunpack.c.l.b16 %v287
    %v967 = vunpack.c.h.b16 %v287
    %v968 = vunpack.c.l.b16 %v288
    %v969 = vunpack.c.h.b16 %v288
    %v970 = vunpack.c.l.b16 %v289
    %v971 = vunpack.c.h.b16 %v289
    %v972 = vunpack.c.l.b16 %v290
    %v973 = vunpack.c.h.b16 %v290
    %v974 = vunpack.c.l.b16 %v291
    %v975 = vunpack.c.h.b16 %v291
    %v976 = vunpack.c.l.b16 %v292
    %v977 = vunpack.c.h.b16 %v292
    %v978 = vunpack.c.l.b16 %v293
    %v979 = vunpack.c.h.b16 %v293
    %v980 = vunpack.c.l.b16 %v294
    %v981 = vunpack.c.h.b16 %v294
    %v982 = vunpack.c.l.b16 %v295
    %v983 = vunpack.c.h.b16 %v295
    %v984 = vunpack.c.l.b16 %v296
    %v985 = vunpack.c.h.b16 %v296
    %v986 = vunpack.c.l.b16 %v297
    %v987 = vunpack.c.h.b16 %v297
    %v988 = vunpack.c.l.b16 %v298
    %v989 = vunpack.c.h.b16 %v298
    %v990 = vunpack.c.l.b16 %v299
    %v991 = vunpack.c.h.b16 %v299
    %v992 = vunpack.c.l.b16 %v300
    %v993 = vunpack.c.h.b16 %v300
    %v994 = vunpack.c.l.b16 %v301
    %v995 = vunpack.c.h.b16 %v301
    %v996 = vunpack.c.l.b16 %v302
    %v997 = vunpack.c.h.b16 %v302
    %v998 = vunpack.c.l.b16 %v303
    %v999 = vunpack.c.h.b16 %v303
    %v1000 = vunpack.c.l.b16 %v304
    %v1001 = vunpack.c.h.b16 %v304
    %v1002 = vunpack.c.l.b16 %v305
    %v1003 = vunpack.c.h.b16 %v305
    %v1004 = vunpack.c.l.b16 %v306
    %v1005 = vunpack.c.h.b16 %v306
    %v1006 = vunpack.c.l.b16 %v307
    %v1007 = vunpack.c.h.b16 %v307
    %v1008 = vunpack.c.l.b16 %v308
    %v1009 = vunpack.c.h.b16 %v308
    %v1010 = vunpack.c.l.b16 %v309
    %v1011 = vunpack.c.h.b16 %v309
    %v1012 = vunpack.c.l.b16 %v310
    %v1013 = vunpack.c.h.b16 %v310
    %v1014 = vunpack.c.l.b16 %v311
    %v1015 = vunpack.c.h.b16 %v311
    %v1016 = vunpack.c.l.b16 %v312
    %v1017 = vunpack.c.h.b16 %v312
    %v1018 = vunpack.c.l.b16 %v313
    %v1019 = vunpack.c.h.b16 %v313
    %v1020 = vunpack.c.l.b16 %v314
    %v1021 = vunpack.c.h.b16 %v314
    %v1022 = vunpack.c.l.b16 %v315
    %v1023 = vunpack.c.h.b16 %v315
    %v1024 = vunpack.c.l.b16 %v316
    %v1025 = vunpack.c.h.b16 %v316
    %v1026 = vunpack.c.l.b16 %v317
    %v1027 = vunpack.c.h.b16 %v317
    %v1028 = vunpack.c.l.b16 %v318
    %v1029 = vunpack.c.h.b16 %v318
    %v1030 = vunpack.c.l.b16 %v319
    %v1031 = vunpack.c.h.b16 %v319
    %v1032 = vunpack.c.l.b16 %v320
    %v1033 = vunpack.c.h.b16 %v320
    %v1034 = vunpack.c.l.b16 %v321
    %v1035 = vunpack.c.h.b16 %v321
    %v1036 = vunpack.c.l.b16 %v322
    %v1037 = vunpack.c.h.b16 %v322
    %v1038 = vunpack.c.l.b16 %v323
    %v1039 = vunpack.c.h.b16 %v323
    %v1040 = vunpack.c.l.b16 %v324
    %v1041 = vunpack.c.h.b16 %v324
    %v1042 = vunpack.c.l.b16 %v325
    %v1043 = vunpack.c.h.b16 %v325
    %v1044 = vunpack.c.l.b16 %v326
    %v1045 = vunpack.c.h.b16 %v326
    %v1046 = vunpack.c.l.b16 %v327
    %v1047 = vunpack.c.h.b16 %v327
    %v1048 = vunpack.c.l.b16 %v328
    %v1049 = vunpack.c.h.b16 %v328
    %v1050 = vunpack.c.l.b16 %v329
    %v1051 = vunpack.c.h.b16 %v329
    %v1052 = vunpack.c.l.b16 %v330
    %v1053 = vunpack.c.h.b16 %v330
    %v1054 = vunpack.c.l.b16 %v331
    %v1055 = vunpack.c.h.b16 %v331
    %v1056 = vunpack.c.l.b16 %v332
    %v1057 = vunpack.c.h.b16 %v332
    %v1058 = vunpack.c.l.b16 %v333
    %v1059 = vunpack.c.h.b16 %v333
    %v1060 = vunpack.c.l.b16 %v334
    %v1061 = vunpack.c.h.b16 %v334
    %v1062 = vunpack.c.l.b16 %v335
    %v1063 = vunpack.c.h.b16 %v335
    %v1064 = vunpack.c.l.b16 %v336
    %v1065 = vunpack.c.h.b16 %v336
    %v1066 = vunpack.c.l.b16 %v337
    %v1067 = vunpack.c.h.b16 %v337
    %v1068 = vunpack.c.l.b16 %v338
    %v1069 = vunpack.c.h.b16 %v338
    %v1070 = vunpack.c.l.b16 %v339
    %v1071 = vunpack.c.h.b16 %v339
    %v1072 = vunpack.c.l.b16 %v340
    %v1073 = vunpack.c.h.b16 %v340
    %v1074 = vunpack.c.l.b16 %v341
    %v1075 = vunpack.c.h.b16 %v341
    %v1076 = vunpack.c.l.b16 %v342
    %v1077 = vunpack.c.h.b16 %v342
    %v1078 = vunpack.c.l.b16 %v343
    %v1079 = vunpack.c.h.b16 %v343
    %v1080 = vunpack.c.l.b16 %v344
    %v1081 = vunpack.c.h.b16 %v344
    %v1082 = vunpack.c.l.b16 %v345
    %v1083 = vunpack.c.h.b16 %v345
    %v1084 = vunpack.c.l.b16 %v346
    %v1085 = vunpack.c.h.b16 %v346
    %v1086 = vunpack.c.l.b16 %v347
    %v1087 = vunpack.c.h.b16 %v347
    %v1088 = vunpack.c.l.b16 %v348
    %v1089 = vunpack.c.h.b16 %v348
    %v1090 = vunpack.c.l.b16 %v349
    %v1091 = vunpack.c.h.b16 %v349
    %v1092 = vunpack.c.l.b16 %v350
    %v1093 = vunpack.c.h.b16 %v350
    %v1094 = vunpack.c.l.b16 %v351
    %v1095 = vunpack.c.h.b16 %v351
    %v1096 = vunpack.c.l.b16 %v352
    %v1097 = vunpack.c.h.b16 %v352
    %v1098 = vunpack.c.l.b16 %v353
    %v1099 = vunpack.c.h.b16 %v353
    %v1100 = vunpack.c.l.b16 %v354
    %v1101 = vunpack.c.h.b16 %v354
    %v1102 = vunpack.c.l.b16 %v355
    %v1103 = vunpack.c.h.b16 %v355
    %v1104 = vunpack.c.l.b16 %v356
    %v1105 = vunpack.c.h.b16 %v356
    %v1106 = vunpack.c.l.b16 %v357
    %v1107 = vunpack.c.h.b16 %v357
    %v1108 = vunpack.c.l.b16 %v358
    %v1109 = vunpack.c.h.b16 %v358
    %v1110 = vunpack.c.l.b16 %v359
    %v1111 = vunpack.c.h.b16 %v359
    %v1112 = vunpack.c.l.b16 %v360
    %v1113 = vunpack.c.h.b16 %v360
    %v1114 = vunpack.c.l.b16 %v361
    %v1115 = vunpack.c.h.b16 %v361
    %v1116 = vunpack.c.l.b16 %v362
    %v1117 = vunpack.c.h.b16 %v362
    %v1118 = vunpack.c.l.b16 %v363
    %v1119 = vunpack.c.h.b16 %v363
    %v1120 = vunpack.c.l.b16 %v364
    %v1121 = vunpack.c.h.b16 %v364
    %v1122 = vunpack.c.l.b16 %v365
    %v1123 = vunpack.c.h.b16 %v365
    %v1124 = vunpack.c.l.b16 %v366
    %v1125 = vunpack.c.h.b16 %v366
    %v1126 = vunpack.c.l.b16 %v367
    %v1127 = vunpack.c.h.b16 %v367
    %v1128 = vunpack.c.l.b16 %v368
    %v1129 = vunpack.c.h.b16 %v368
    %v1130 = vunpack.c.l.b16 %v369
    %v1131 = vunpack.c.h.b16 %v369
    %v1132 = vunpack.c.l.b16 %v370
    %v1133 = vunpack.c.h.b16 %v370
    %v1134 = vunpack.c.l.b16 %v371
    %v1135 = vunpack.c.h.b16 %v371
    %v1136 = vunpack.c.l.b16 %v372
    %v1137 = vunpack.c.h.b16 %v372
    %v1138 = vunpack.c.l.b16 %v373
    %v1139 = vunpack.c.h.b16 %v373
    %v1140 = vunpack.c.l.b16 %v374
    %v1141 = vunpack.c.h.b16 %v374
    %v1142 = vunpack.c.l.b16 %v375
    %v1143 = vunpack.c.h.b16 %v375
    %v1144 = vunpack.c.l.b16 %v376
    %v1145 = vunpack.c.h.b16 %v376
    %v1146 = vunpack.c.l.b16 %v377
    %v1147 = vunpack.c.h.b16 %v377
    %v1148 = vunpack.c.l.b16 %v378
    %v1149 = vunpack.c.h.b16 %v378
    %v1150 = vunpack.c.l.b16 %v379
    %v1151 = vunpack.c.h.b16 %v379
    %v1152 = vunpack.c.l.b16 %v380
    %v1153 = vunpack.c.h.b16 %v380
    %v1154 = vunpack.c.l.b16 %v381
    %v1155 = vunpack.c.h.b16 %v381
    %v1156 = vunpack.c.l.b16 %v382
    %v1157 = vunpack.c.h.b16 %v382
    %v1158 = vunpack.c.l.b16 %v383
    %v1159 = vunpack.c.h.b16 %v383
    %v1160 = vunpack.c.l.b16 %v384
    %v1161 = vunpack.c.h.b16 %v384
    %v1162 = vunpack.c.l.b16 %v385
    %v1163 = vunpack.c.h.b16 %v385
    %v1164 = vpack.c.b16 %v656, %v652
    %v1165 = vpack.c.b16 %v657, %v653
    %v1166 = vpack.c.b16 %v658, %v654
    %v1167 = vpack.c.b16 %v659, %v655
    %v1168 = vpack.c.b16 %v664, %v660
    %v1169 = vpack.c.b16 %v665, %v661
    %v1170 = vpack.c.b16 %v666, %v662
    %v1171 = vpack.c.b16 %v667, %v663
    %v1172 = vpack.c.b16 %v672, %v668
    %v1173 = vpack.c.b16 %v673, %v669
    %v1174 = vpack.c.b16 %v674, %v670
    %v1175 = vpack.c.b16 %v675, %v671
    %v1176 = vpack.c.b16 %v680, %v676
    %v1177 = vpack.c.b16 %v681, %v677
    %v1178 = vpack.c.b16 %v682, %v678
    %v1179 = vpack.c.b16 %v683, %v679
    %v1180 = vpack.c.b16 %v688, %v684
    %v1181 = vpack.c.b16 %v689, %v685
    %v1182 = vpack.c.b16 %v690, %v686
    %v1183 = vpack.c.b16 %v691, %v687
    %v1184 = vpack.c.b16 %v696, %v692
    %v1185 = vpack.c.b16 %v697, %v693
    %v1186 = vpack.c.b16 %v698, %v694
    %v1187 = vpack.c.b16 %v699, %v695
    %v1188 = vpack.c.b16 %v704, %v700
    %v1189 = vpack.c.b16 %v705, %v701
    %v1190 = vpack.c.b16 %v706, %v702
    %v1191 = vpack.c.b16 %v707, %v703
    %v1192 = vpack.c.b16 %v712, %v708
    %v1193 = vpack.c.b16 %v713, %v709
    %v1194 = vpack.c.b16 %v714, %v710
    %v1195 = vpack.c.b16 %v715, %v711
    %v1196 = vpack.c.b16 %v720, %v716
    %v1197 = vpack.c.b16 %v721, %v717
    %v1198 = vpack.c.b16 %v722, %v718
    %v1199 = vpack.c.b16 %v723, %v719
    %v1200 = vpack.c.b16 %v728, %v724
    %v1201 = vpack.c.b16 %v729, %v725
    %v1202 = vpack.c.b16 %v730, %v726
    %v1203 = vpack.c.b16 %v731, %v727
    %v1204 = vpack.c.b16 %v736, %v732
    %v1205 = vpack.c.b16 %v737, %v733
    %v1206 = vpack.c.b16 %v738, %v734
    %v1207 = vpack.c.b16 %v739, %v735
    %v1208 = vpack.c.b16 %v744, %v740
    %v1209 = vpack.c.b16 %v745, %v741
    %v1210 = vpack.c.b16 %v746, %v742
    %v1211 = vpack.c.b16 %v747, %v743
    %v1212 = vpack.c.b16 %v752, %v748
    %v1213 = vpack.c.b16 %v753, %v749
    %v1214 = vpack.c.b16 %v754, %v750
    %v1215 = vpack.c.b16 %v755, %v751
    %v1216 = vpack.c.b16 %v760, %v756
    %v1217 = vpack.c.b16 %v761, %v757
    %v1218 = vpack.c.b16 %v762, %v758
    %v1219 = vpack.c.b16 %v763, %v759
    %v1220 = vpack.c.b16 %v768, %v764
    %v1221 = vpack.c.b16 %v769, %v765
    %v1222 = vpack.c.b16 %v770, %v766
    %v1223 = vpack.c.b16 %v771, %v767
    %v1224 = vpack.c.b16 %v776, %v772
    %v1225 = vpack.c.b16 %v777, %v773
    %v1226 = vpack.c.b16 %v778, %v774
    %v1227 = vpack.c.b16 %v779, %v775
    %v1228 = vpack.c.b16 %v784, %v780
    %v1229 = vpack.c.b16 %v785, %v781
    %v1230 = vpack.c.b16 %v786, %v782
    %v1231 = vpack.c.b16 %v787, %v783
    %v1232 = vpack.c.b16 %v792, %v788
    %v1233 = vpack.c.b16 %v793, %v789
    %v1234 = vpack.c.b16 %v794, %v790
    %v1235 = vpack.c.b16 %v795, %v791
    %v1236 = vpack.c.b16 %v800, %v796
    %v1237 = vpack.c.b16 %v801, %v797
    %v1238 = vpack.c.b16 %v802, %v798
    %v1239 = vpack.c.b16 %v803, %v799
    %v1240 = vpack.c.b16 %v808, %v804
    %v1241 = vpack.c.b16 %v809, %v805
    %v1242 = vpack.c.b16 %v810, %v806
    %v1243 = vpack.c.b16 %v811, %v807
    %v1244 = vpack.c.b16 %v816, %v812
    %v1245 = vpack.c.b16 %v817, %v813
    %v1246 = vpack.c.b16 %v818, %v814
    %v1247 = vpack.c.b16 %v819, %v815
    %v1248 = vpack.c.b16 %v824, %v820
    %v1249 = vpack.c.b16 %v825, %v821
    %v1250 = vpack.c.b16 %v826, %v822
    %v1251 = vpack.c.b16 %v827, %v823
    %v1252 = vpack.c.b16 %v832, %v828
    %v1253 = vpack.c.b16 %v833, %v829
    %v1254 = vpack.c.b16 %v834, %v830
    %v1255 = vpack.c.b16 %v835, %v831
    %v1256 = vpack.c.b16 %v840, %v836
    %v1257 = vpack.c.b16 %v841, %v837
    %v1258 = vpack.c.b16 %v842, %v838
    %v1259 = vpack.c.b16 %v843, %v839
    %v1260 = vpack.c.b16 %v848, %v844
    %v1261 = vpack.c.b16 %v849, %v845
    %v1262 = vpack.c.b16 %v850, %v846
    %v1263 = vpack.c.b16 %v851, %v847
    %v1264 = vpack.c.b16 %v856, %v852
    %v1265 = vpack.c.b16 %v857, %v853
    %v1266 = vpack.c.b16 %v858, %v854
    %v1267 = vpack.c.b16 %v859, %v855
    %v1268 = vpack.c.b16 %v864, %v860
    %v1269 = vpack.c.b16 %v865, %v861
    %v1270 = vpack.c.b16 %v866, %v862
    %v1271 = vpack.c.b16 %v867, %v863
    %v1272 = vpack.c.b16 %v872, %v868
    %v1273 = vpack.c.b16 %v873, %v869
    %v1274 = vpack.c.b16 %v874, %v870
    %v1275 = vpack.c.b16 %v875, %v871
    %v1276 = vpack.c.b16 %v880, %v876
    %v1277 = vpack.c.b16 %v881, %v877
    %v1278 = vpack.c.b16 %v882, %v878
    %v1279 = vpack.c.b16 %v883, %v879
    %v1280 = vpack.c.b16 %v888, %v884
    %v1281 = vpack.c.b16 %v889, %v885
    %v1282 = vpack.c.b16 %v890, %v886
    %v1283 = vpack.c.b16 %v891, %v887
    %v1284 = vpack.c.b16 %v896, %v892
    %v1285 = vpack.c.b16 %v897, %v893
    %v1286 = vpack.c.b16 %v898, %v894
    %v1287 = vpack.c.b16 %v899, %v895
    %v1288 = vpack.c.b16 %v904, %v900
    %v1289 = vpack.c.b16 %v905, %v901
    %v1290 = vpack.c.b16 %v906, %v902
    %v1291 = vpack.c.b16 %v907, %v903
    %v1292 = vpack.c.b16 %v912, %v908
    %v1293 = vpack.c.b16 %v913, %v909
    %v1294 = vpack.c.b16 %v914, %v910
    %v1295 = vpack.c.b16 %v915, %v911
    %v1296 = vpack.c.b16 %v920, %v916
    %v1297 = vpack.c.b16 %v921, %v917
    %v1298 = vpack.c.b16 %v922, %v918
    %v1299 = vpack.c.b16 %v923, %v919
    %v1300 = vpack.c.b16 %v928, %v924
    %v1301 = vpack.c.b16 %v929, %v925
    %v1302 = vpack.c.b16 %v930, %v926
    %v1303 = vpack.c.b16 %v931, %v927
    %v1304 = vpack.c.b16 %v936, %v932
    %v1305 = vpack.c.b16 %v937, %v933
    %v1306 = vpack.c.b16 %v938, %v934
    %v1307 = vpack.c.b16 %v939, %v935
    %v1308 = vpack.c.b16 %v944, %v940
    %v1309 = vpack.c.b16 %v945, %v941
    %v1310 = vpack.c.b16 %v946, %v942
    %v1311 = vpack.c.b16 %v947, %v943
    %v1312 = vpack.c.b16 %v952, %v948
    %v1313 = vpack.c.b16 %v953, %v949
    %v1314 = vpack.c.b16 %v954, %v950
    %v1315 = vpack.c.b16 %v955, %v951
    %v1316 = vpack.c.b16 %v960, %v956
    %v1317 = vpack.c.b16 %v961, %v957
    %v1318 = vpack.c.b16 %v962, %v958
    %v1319 = vpack.c.b16 %v963, %v959
    %v1320 = vpack.c.b16 %v968, %v964
    %v1321 = vpack.c.b16 %v969, %v965
    %v1322 = vpack.c.b16 %v970, %v966
    %v1323 = vpack.c.b16 %v971, %v967
    %v1324 = vpack.c.b16 %v976, %v972
    %v1325 = vpack.c.b16 %v977, %v973
    %v1326 = vpack.c.b16 %v978, %v974
    %v1327 = vpack.c.b16 %v979, %v975
    %v1328 = vpack.c.b16 %v984, %v980
    %v1329 = vpack.c.b16 %v985, %v981
    %v1330 = vpack.c.b16 %v986, %v982
    %v1331 = vpack.c.b16 %v987, %v983
    %v1332 = vpack.c.b16 %v992, %v988
    %v1333 = vpack.c.b16 %v993, %v989
    %v1334 = vpack.c.b16 %v994, %v990
    %v1335 = vpack.c.b16 %v995, %v991
    %v1336 = vpack.c.b16 %v1000, %v996
    %v1337 = vpack.c.b16 %v1001, %v997
    %v1338 = vpack.c.b16 %v1002, %v998
    %v1339 = vpack.c.b16 %v1003, %v999
    %v1340 = vpack.c.b16 %v1008, %v1004
    %v1341 = vpack.c.b16 %v1009, %v1005
    %v1342 = vpack.c.b16 %v1010, %v1006
    %v1343 = vpack.c.b16 %v1011, %v1007
    %v1344 = vpack.c.b16 %v1016, %v1012
    %v1345 = vpack.c.b16 %v1017, %v1013
    %v1346 = vpack.c.b16 %v1018, %v1014
    %v1347 = vpack.c.b16 %v1019, %v1015
    %v1348 = vpack.c.b16 %v1024, %v1020
    %v1349 = vpack.c.b16 %v1025, %v1021
    %v1350 = vpack.c.b16 %v1026, %v1022
    %v1351 = vpack.c.b16 %v1027, %v1023
    %v1352 = vpack.c.b16 %v1032, %v1028
    %v1353 = vpack.c.b16 %v1033, %v1029
    %v1354 = vpack.c.b16 %v1034, %v1030
    %v1355 = vpack.c.b16 %v1035, %v1031
    %v1356 = vpack.c.b16 %v1040, %v1036
    %v1357 = vpack.c.b16 %v1041, %v1037
    %v1358 = vpack.c.b16 %v1042, %v1038
    %v1359 = vpack.c.b16 %v1043, %v1039
    %v1360 = vpack.c.b16 %v1048, %v1044
    %v1361 = vpack.c.b16 %v1049, %v1045
    %v1362 = vpack.c.b16 %v1050, %v1046
    %v1363 = vpack.c.b16 %v1051, %v1047
    %v1364 = vpack.c.b16 %v1056, %v1052
    %v1365 = vpack.c.b16 %v1057, %v1053
    %v1366 = vpack.c.b16 %v1058, %v1054
    %v1367 = vpack.c.b16 %v1059, %v1055
    %v1368 = vpack.c.b16 %v1064, %v1060
    %v1369 = vpack.c.b16 %v1065, %v1061
    %v1370 = vpack.c.b16 %v1066, %v1062
    %v1371 = vpack.c.b16 %v1067, %v1063
    %v1372 = vpack.c.b16 %v1072, %v1068
    %v1373 = vpack.c.b16 %v1073, %v1069
    %v1374 = vpack.c.b16 %v1074, %v1070
    %v1375 = vpack.c.b16 %v1075, %v1071
    %v1376 = vpack.c.b16 %v1080, %v1076
    %v1377 = vpack.c.b16 %v1081, %v1077
    %v1378 = vpack.c.b16 %v1082, %v1078
    %v1379 = vpack.c.b16 %v1083, %v1079
    %v1380 = vpack.c.b16 %v1088, %v1084
    %v1381 = vpack.c.b16 %v1089, %v1085
    %v1382 = vpack.c.b16 %v1090, %v1086
    %v1383 = vpack.c.b16 %v1091, %v1087
    %v1384 = vpack.c.b16 %v1096, %v1092
    %v1385 = vpack.c.b16 %v1097, %v1093
    %v1386 = vpack.c.b16 %v1098, %v1094
    %v1387 = vpack.c.b16 %v1099, %v1095
    %v1388 = vpack.c.b16 %v1104, %v1100
    %v1389 = vpack.c.b16 %v1105, %v1101
    %v1390 = vpack.c.b16 %v1106, %v1102
    %v1391 = vpack.c.b16 %v1107, %v1103
    %v1392 = vpack.c.b16 %v1112, %v1108
    %v1393 = vpack.c.b16 %v1113, %v1109
    %v1394 = vpack.c.b16 %v1114, %v1110
    %v1395 = vpack.c.b16 %v1115, %v1111
    %v1396 = vpack.c.b16 %v1120, %v1116
    %v1397 = vpack.c.b16 %v1121, %v1117
    %v1398 = vpack.c.b16 %v1122, %v1118
    %v1399 = vpack.c.b16 %v1123, %v1119
    %v1400 = vpack.c.b16 %v1128, %v1124
    %v1401 = vpack.c.b16 %v1129, %v1125
    %v1402 = vpack.c.b16 %v1130, %v1126
    %v1403 = vpack.c.b16 %v1131, %v1127
    %v1404 = vpack.c.b16 %v1136, %v1132
    %v1405 = vpack.c.b16 %v1137, %v1133
    %v1406 = vpack.c.b16 %v1138, %v1134
    %v1407 = vpack.c.b16 %v1139, %v1135
    %v1408 = vpack.c.b16 %v1144, %v1140
    %v1409 = vpack.c.b16 %v1145, %v1141
    %v1410 = vpack.c.b16 %v1146, %v1142
    %v1411 = vpack.c.b16 %v1147, %v1143
    %v1412 = vpack.c.b16 %v1152, %v1148
    %v1413 = vpack.c.b16 %v1153, %v1149
    %v1414 = vpack.c.b16 %v1154, %v1150
    %v1415 = vpack.c.b16 %v1155, %v1151
    %v1416 = vpack.c.b16 %v1160, %v1156
    %v1417 = vpack.c.b16 %v1161, %v1157
    %v1418 = vpack.c.b16 %v1162, %v1158
    %v1419 = vpack.c.b16 %v1163, %v1159
    %1676 = vmatpush.bf16.msra.mxu0 %v1192
    %1677 = vmatpush.bf16.msra.mxu0 %v1188
    %1678 = vmatpush.bf16.msra.mxu0 %v1184
    %1679 = vmatpush.bf16.msra.mxu0 %v1180
    %1680 = vmatpush.bf16.msra.mxu0 %v1176
    %1681 = vmatpush.bf16.msra.mxu0 %v1172
    %1682 = vmatpush.bf16.msra.mxu0 %v1168
    %1683 = vmatpush.bf16.msra.mxu0 %v1164
    %1684 = vmatmul.bf16.gmra.mxu0 %v122
    %v1685 = vpop.f32.mrf.mxu0
    %v1686 = vadd.f32 %v388, %v1685
    %v1687 = vpop.f32.mrf.mxu0
    %v1688 = vadd.f32 %v388, %v1687
    %1689 = vdwg.mxu0
    %1690 = vmatpush.bf16.msra.mxu0 %v1224
    %1691 = vmatpush.bf16.msra.mxu0 %v1220
    %1692 = vmatpush.bf16.msra.mxu0 %v1216
    %1693 = vmatpush.bf16.msra.mxu0 %v1212
    %1694 = vmatpush.bf16.msra.mxu0 %v1208
    %1695 = vmatpush.bf16.msra.mxu0 %v1204
    %1696 = vmatpush.bf16.msra.mxu0 %v1200
    %1697 = vmatpush.bf16.msra.mxu0 %v1196
    %1698 = vmatmul.bf16.gmra.mxu0 %v123
    %v1699 = vpop.f32.mrf.mxu0
    %v1700 = vadd.f32 %v1686, %v1699
    %v1701 = vpop.f32.mrf.mxu0
    %v1702 = vadd.f32 %v1688, %v1701
    %1703 = vdwg.mxu0
    %1704 = vmatpush.bf16.msra.mxu0 %v1256
    %1705 = vmatpush.bf16.msra.mxu0 %v1252
    %1706 = vmatpush.bf16.msra.mxu0 %v1248
    %1707 = vmatpush.bf16.msra.mxu0 %v1244
    %1708 = vmatpush.bf16.msra.mxu0 %v1240
    %1709 = vmatpush.bf16.msra.mxu0 %v1236
    %1710 = vmatpush.bf16.msra.mxu0 %v1232
    %1711 = vmatpush.bf16.msra.mxu0 %v1228
    %1712 = vmatmul.bf16.gmra.mxu0 %v124
    %v1713 = vpop.f32.mrf.mxu0
    %v1714 = vadd.f32 %v1700, %v1713
    %v1715 = vpop.f32.mrf.mxu0
    %v1716 = vadd.f32 %v1702, %v1715
    %1717 = vdwg.mxu0
    %1718 = vmatpush.bf16.msra.mxu0 %v1288
    %1719 = vmatpush.bf16.msra.mxu0 %v1284
    %1720 = vmatpush.bf16.msra.mxu0 %v1280
    %1721 = vmatpush.bf16.msra.mxu0 %v1276
    %1722 = vmatpush.bf16.msra.mxu0 %v1272
    %1723 = vmatpush.bf16.msra.mxu0 %v1268
    %1724 = vmatpush.bf16.msra.mxu0 %v1264
    %1725 = vmatpush.bf16.msra.mxu0 %v1260
    %1726 = vmatmul.bf16.gmra.mxu0 %v125
    %v1727 = vpop.f32.mrf.mxu0
    %v1728 = vadd.f32 %v1714, %v1727
    %v1729 = vpop.f32.mrf.mxu0
    %v1730 = vadd.f32 %v1716, %v1729
    %1731 = vdwg.mxu0
    %1732 = vmatpush.bf16.msra.mxu0 %v1320
    %1733 = vmatpush.bf16.msra.mxu0 %v1316
    %1734 = vmatpush.bf16.msra.mxu0 %v1312
    %1735 = vmatpush.bf16.msra.mxu0 %v1308
    %1736 = vmatpush.bf16.msra.mxu0 %v1304
    %1737 = vmatpush.bf16.msra.mxu0 %v1300
    %1738 = vmatpush.bf16.msra.mxu0 %v1296
    %1739 = vmatpush.bf16.msra.mxu0 %v1292
    %1740 = vmatmul.bf16.gmra.mxu0 %v126
    %v1741 = vpop.f32.mrf.mxu0
    %v1742 = vadd.f32 %v1728, %v1741
    %v1743 = vpop.f32.mrf.mxu0
    %v1744 = vadd.f32 %v1730, %v1743
    %1745 = vdwg.mxu0
    %1746 = vmatpush.bf16.msra.mxu0 %v1352
    %1747 = vmatpush.bf16.msra.mxu0 %v1348
    %1748 = vmatpush.bf16.msra.mxu0 %v1344
    %1749 = vmatpush.bf16.msra.mxu0 %v1340
    %1750 = vmatpush.bf16.msra.mxu0 %v1336
    %1751 = vmatpush.bf16.msra.mxu0 %v1332
    %1752 = vmatpush.bf16.msra.mxu0 %v1328
    %1753 = vmatpush.bf16.msra.mxu0 %v1324
    %1754 = vmatmul.bf16.gmra.mxu0 %v127
    %v1755 = vpop.f32.mrf.mxu0
    %v1756 = vadd.f32 %v1742, %v1755
    %v1757 = vpop.f32.mrf.mxu0
    %v1758 = vadd.f32 %v1744, %v1757
    %1759 = vdwg.mxu0
    %1760 = vmatpush.bf16.msra.mxu0 %v1384
    %1761 = vmatpush.bf16.msra.mxu0 %v1380
    %1762 = vmatpush.bf16.msra.mxu0 %v1376
    %1763 = vmatpush.bf16.msra.mxu0 %v1372
    %1764 = vmatpush.bf16.msra.mxu0 %v1368
    %1765 = vmatpush.bf16.msra.mxu0 %v1364
    %1766 = vmatpush.bf16.msra.mxu0 %v1360
    %1767 = vmatpush.bf16.msra.mxu0 %v1356
    %1768 = vmatmul.bf16.gmra.mxu0 %v128
    %v1769 = vpop.f32.mrf.mxu0
    %v1770 = vadd.f32 %v1756, %v1769
    %v1771 = vpop.f32.mrf.mxu0
    %v1772 = vadd.f32 %v1758, %v1771
    %1773 = vdwg.mxu0
    %1774 = vmatpush.bf16.msra.mxu0 %v1416
    %1775 = vmatpush.bf16.msra.mxu0 %v1412
    %1776 = vmatpush.bf16.msra.mxu0 %v1408
    %1777 = vmatpush.bf16.msra.mxu0 %v1404
    %1778 = vmatpush.bf16.msra.mxu0 %v1400
    %1779 = vmatpush.bf16.msra.mxu0 %v1396
    %1780 = vmatpush.bf16.msra.mxu0 %v1392
    %1781 = vmatpush.bf16.msra.mxu0 %v1388
    %1782 = vmatmul.bf16.gmra.mxu0 %v129
    %v1783 = vpop.f32.mrf.mxu0
    %v1784 = vadd.f32 %v1770, %v1783
    %v1785 = vpop.f32.mrf.mxu0
    %v1786 = vadd.f32 %v1772, %v1785
    %1787 = vdwg.mxu0
    %1788 = vmatpush.bf16.msra.mxu0 %v1193
    %1789 = vmatpush.bf16.msra.mxu0 %v1189
    %1790 = vmatpush.bf16.msra.mxu0 %v1185
    %1791 = vmatpush.bf16.msra.mxu0 %v1181
    %1792 = vmatpush.bf16.msra.mxu0 %v1177
    %1793 = vmatpush.bf16.msra.mxu0 %v1173
    %1794 = vmatpush.bf16.msra.mxu0 %v1169
    %1795 = vmatpush.bf16.msra.mxu0 %v1165
    %1796 = vmatmul.bf16.gmra.mxu0 %v122
    %v1797 = vpop.f32.mrf.mxu0
    %v1798 = vadd.f32 %v389, %v1797
    %v1799 = vpop.f32.mrf.mxu0
    %v1800 = vadd.f32 %v389, %v1799
    %1801 = vdwg.mxu0
    %1802 = vmatpush.bf16.msra.mxu0 %v1225
    %1803 = vmatpush.bf16.msra.mxu0 %v1221
    %1804 = vmatpush.bf16.msra.mxu0 %v1217
    %1805 = vmatpush.bf16.msra.mxu0 %v1213
    %1806 = vmatpush.bf16.msra.mxu0 %v1209
    %1807 = vmatpush.bf16.msra.mxu0 %v1205
    %1808 = vmatpush.bf16.msra.mxu0 %v1201
    %1809 = vmatpush.bf16.msra.mxu0 %v1197
    %1810 = vmatmul.bf16.gmra.mxu0 %v123
    %v1811 = vpop.f32.mrf.mxu0
    %v1812 = vadd.f32 %v1798, %v1811
    %v1813 = vpop.f32.mrf.mxu0
    %v1814 = vadd.f32 %v1800, %v1813
    %1815 = vdwg.mxu0
    %1816 = vmatpush.bf16.msra.mxu0 %v1257
    %1817 = vmatpush.bf16.msra.mxu0 %v1253
    %1818 = vmatpush.bf16.msra.mxu0 %v1249
    %1819 = vmatpush.bf16.msra.mxu0 %v1245
    %1820 = vmatpush.bf16.msra.mxu0 %v1241
    %1821 = vmatpush.bf16.msra.mxu0 %v1237
    %1822 = vmatpush.bf16.msra.mxu0 %v1233
    %1823 = vmatpush.bf16.msra.mxu0 %v1229
    %1824 = vmatmul.bf16.gmra.mxu0 %v124
    %v1825 = vpop.f32.mrf.mxu0
    %v1826 = vadd.f32 %v1812, %v1825
    %v1827 = vpop.f32.mrf.mxu0
    %v1828 = vadd.f32 %v1814, %v1827
    %1829 = vdwg.mxu0
    %1830 = vmatpush.bf16.msra.mxu0 %v1289
    %1831 = vmatpush.bf16.msra.mxu0 %v1285
    %1832 = vmatpush.bf16.msra.mxu0 %v1281
    %1833 = vmatpush.bf16.msra.mxu0 %v1277
    %1834 = vmatpush.bf16.msra.mxu0 %v1273
    %1835 = vmatpush.bf16.msra.mxu0 %v1269
    %1836 = vmatpush.bf16.msra.mxu0 %v1265
    %1837 = vmatpush.bf16.msra.mxu0 %v1261
    %1838 = vmatmul.bf16.gmra.mxu0 %v125
    %v1839 = vpop.f32.mrf.mxu0
    %v1840 = vadd.f32 %v1826, %v1839
    %v1841 = vpop.f32.mrf.mxu0
    %v1842 = vadd.f32 %v1828, %v1841
    %1843 = vdwg.mxu0
    %1844 = vmatpush.bf16.msra.mxu0 %v1321
    %1845 = vmatpush.bf16.msra.mxu0 %v1317
    %1846 = vmatpush.bf16.msra.mxu0 %v1313
    %1847 = vmatpush.bf16.msra.mxu0 %v1309
    %1848 = vmatpush.bf16.msra.mxu0 %v1305
    %1849 = vmatpush.bf16.msra.mxu0 %v1301
    %1850 = vmatpush.bf16.msra.mxu0 %v1297
    %1851 = vmatpush.bf16.msra.mxu0 %v1293
    %1852 = vmatmul.bf16.gmra.mxu0 %v126
    %v1853 = vpop.f32.mrf.mxu0
    %v1854 = vadd.f32 %v1840, %v1853
    %v1855 = vpop.f32.mrf.mxu0
    %v1856 = vadd.f32 %v1842, %v1855
    %1857 = vdwg.mxu0
    %1858 = vmatpush.bf16.msra.mxu0 %v1353
    %1859 = vmatpush.bf16.msra.mxu0 %v1349
    %1860 = vmatpush.bf16.msra.mxu0 %v1345
    %1861 = vmatpush.bf16.msra.mxu0 %v1341
    %1862 = vmatpush.bf16.msra.mxu0 %v1337
    %1863 = vmatpush.bf16.msra.mxu0 %v1333
    %1864 = vmatpush.bf16.msra.mxu0 %v1329
    %1865 = vmatpush.bf16.msra.mxu0 %v1325
    %1866 = vmatmul.bf16.gmra.mxu0 %v127
    %v1867 = vpop.f32.mrf.mxu0
    %v1868 = vadd.f32 %v1854, %v1867
    %v1869 = vpop.f32.mrf.mxu0
    %v1870 = vadd.f32 %v1856, %v1869
    %1871 = vdwg.mxu0
    %1872 = vmatpush.bf16.msra.mxu0 %v1385
    %1873 = vmatpush.bf16.msra.mxu0 %v1381
    %1874 = vmatpush.bf16.msra.mxu0 %v1377
    %1875 = vmatpush.bf16.msra.mxu0 %v1373
    %1876 = vmatpush.bf16.msra.mxu0 %v1369
    %1877 = vmatpush.bf16.msra.mxu0 %v1365
    %1878 = vmatpush.bf16.msra.mxu0 %v1361
    %1879 = vmatpush.bf16.msra.mxu0 %v1357
    %1880 = vmatmul.bf16.gmra.mxu0 %v128
    %v1881 = vpop.f32.mrf.mxu0
    %v1882 = vadd.f32 %v1868, %v1881
    %v1883 = vpop.f32.mrf.mxu0
    %v1884 = vadd.f32 %v1870, %v1883
    %1885 = vdwg.mxu0
    %1886 = vmatpush.bf16.msra.mxu0 %v1417
    %1887 = vmatpush.bf16.msra.mxu0 %v1413
    %1888 = vmatpush.bf16.msra.mxu0 %v1409
    %1889 = vmatpush.bf16.msra.mxu0 %v1405
    %1890 = vmatpush.bf16.msra.mxu0 %v1401
    %1891 = vmatpush.bf16.msra.mxu0 %v1397
    %1892 = vmatpush.bf16.msra.mxu0 %v1393
    %1893 = vmatpush.bf16.msra.mxu0 %v1389
    %1894 = vmatmul.bf16.gmra.mxu0 %v129
    %v1895 = vpop.f32.mrf.mxu0
    %v1896 = vadd.f32 %v1882, %v1895
    %v1897 = vpop.f32.mrf.mxu0
    %v1898 = vadd.f32 %v1884, %v1897
    %1899 = vdwg.mxu0
    %1900 = vmatpush.bf16.msra.mxu0 %v1194
    %1901 = vmatpush.bf16.msra.mxu0 %v1190
    %1902 = vmatpush.bf16.msra.mxu0 %v1186
    %1903 = vmatpush.bf16.msra.mxu0 %v1182
    %1904 = vmatpush.bf16.msra.mxu0 %v1178
    %1905 = vmatpush.bf16.msra.mxu0 %v1174
    %1906 = vmatpush.bf16.msra.mxu0 %v1170
    %1907 = vmatpush.bf16.msra.mxu0 %v1166
    %1908 = vmatmul.bf16.gmra.mxu0 %v122
    %v1909 = vpop.f32.mrf.mxu0
    %v1910 = vadd.f32 %v390, %v1909
    %v1911 = vpop.f32.mrf.mxu0
    %v1912 = vadd.f32 %v390, %v1911
    %1913 = vdwg.mxu0
    %1914 = vmatpush.bf16.msra.mxu0 %v1226
    %1915 = vmatpush.bf16.msra.mxu0 %v1222
    %1916 = vmatpush.bf16.msra.mxu0 %v1218
    %1917 = vmatpush.bf16.msra.mxu0 %v1214
    %1918 = vmatpush.bf16.msra.mxu0 %v1210
    %1919 = vmatpush.bf16.msra.mxu0 %v1206
    %1920 = vmatpush.bf16.msra.mxu0 %v1202
    %1921 = vmatpush.bf16.msra.mxu0 %v1198
    %1922 = vmatmul.bf16.gmra.mxu0 %v123
    %v1923 = vpop.f32.mrf.mxu0
    %v1924 = vadd.f32 %v1910, %v1923
    %v1925 = vpop.f32.mrf.mxu0
    %v1926 = vadd.f32 %v1912, %v1925
    %1927 = vdwg.mxu0
    %1928 = vmatpush.bf16.msra.mxu0 %v1258
    %1929 = vmatpush.bf16.msra.mxu0 %v1254
    %1930 = vmatpush.bf16.msra.mxu0 %v1250
    %1931 = vmatpush.bf16.msra.mxu0 %v1246
    %1932 = vmatpush.bf16.msra.mxu0 %v1242
    %1933 = vmatpush.bf16.msra.mxu0 %v1238
    %1934 = vmatpush.bf16.msra.mxu0 %v1234
    %1935 = vmatpush.bf16.msra.mxu0 %v1230
    %1936 = vmatmul.bf16.gmra.mxu0 %v124
    %v1937 = vpop.f32.mrf.mxu0
    %v1938 = vadd.f32 %v1924, %v1937
    %v1939 = vpop.f32.mrf.mxu0
    %v1940 = vadd.f32 %v1926, %v1939
    %1941 = vdwg.mxu0
    %1942 = vmatpush.bf16.msra.mxu0 %v1290
    %1943 = vmatpush.bf16.msra.mxu0 %v1286
    %1944 = vmatpush.bf16.msra.mxu0 %v1282
    %1945 = vmatpush.bf16.msra.mxu0 %v1278
    %1946 = vmatpush.bf16.msra.mxu0 %v1274
    %1947 = vmatpush.bf16.msra.mxu0 %v1270
    %1948 = vmatpush.bf16.msra.mxu0 %v1266
    %1949 = vmatpush.bf16.msra.mxu0 %v1262
    %1950 = vmatmul.bf16.gmra.mxu0 %v125
    %v1951 = vpop.f32.mrf.mxu0
    %v1952 = vadd.f32 %v1938, %v1951
    %v1953 = vpop.f32.mrf.mxu0
    %v1954 = vadd.f32 %v1940, %v1953
    %1955 = vdwg.mxu0
    %1956 = vmatpush.bf16.msra.mxu0 %v1322
    %1957 = vmatpush.bf16.msra.mxu0 %v1318
    %1958 = vmatpush.bf16.msra.mxu0 %v1314
    %1959 = vmatpush.bf16.msra.mxu0 %v1310
    %1960 = vmatpush.bf16.msra.mxu0 %v1306
    %1961 = vmatpush.bf16.msra.mxu0 %v1302
    %1962 = vmatpush.bf16.msra.mxu0 %v1298
    %1963 = vmatpush.bf16.msra.mxu0 %v1294
    %1964 = vmatmul.bf16.gmra.mxu0 %v126
    %v1965 = vpop.f32.mrf.mxu0
    %v1966 = vadd.f32 %v1952, %v1965
    %v1967 = vpop.f32.mrf.mxu0
    %v1968 = vadd.f32 %v1954, %v1967
    %1969 = vdwg.mxu0
    %1970 = vmatpush.bf16.msra.mxu0 %v1354
    %1971 = vmatpush.bf16.msra.mxu0 %v1350
    %1972 = vmatpush.bf16.msra.mxu0 %v1346
    %1973 = vmatpush.bf16.msra.mxu0 %v1342
    %1974 = vmatpush.bf16.msra.mxu0 %v1338
    %1975 = vmatpush.bf16.msra.mxu0 %v1334
    %1976 = vmatpush.bf16.msra.mxu0 %v1330
    %1977 = vmatpush.bf16.msra.mxu0 %v1326
    %1978 = vmatmul.bf16.gmra.mxu0 %v127
    %v1979 = vpop.f32.mrf.mxu0
    %v1980 = vadd.f32 %v1966, %v1979
    %v1981 = vpop.f32.mrf.mxu0
    %v1982 = vadd.f32 %v1968, %v1981
    %1983 = vdwg.mxu0
    %1984 = vmatpush.bf16.msra.mxu0 %v1386
    %1985 = vmatpush.bf16.msra.mxu0 %v1382
    %1986 = vmatpush.bf16.msra.mxu0 %v1378
    %1987 = vmatpush.bf16.msra.mxu0 %v1374
    %1988 = vmatpush.bf16.msra.mxu0 %v1370
    %1989 = vmatpush.bf16.msra.mxu0 %v1366
    %1990 = vmatpush.bf16.msra.mxu0 %v1362
    %1991 = vmatpush.bf16.msra.mxu0 %v1358
    %1992 = vmatmul.bf16.gmra.mxu0 %v128
    %v1993 = vpop.f32.mrf.mxu0
    %v1994 = vadd.f32 %v1980, %v1993
    %v1995 = vpop.f32.mrf.mxu0
    %v1996 = vadd.f32 %v1982, %v1995
    %1997 = vdwg.mxu0
    %1998 = vmatpush.bf16.msra.mxu0 %v1418
    %1999 = vmatpush.bf16.msra.mxu0 %v1414
    %2000 = vmatpush.bf16.msra.mxu0 %v1410
    %2001 = vmatpush.bf16.msra.mxu0 %v1406
    %2002 = vmatpush.bf16.msra.mxu0 %v1402
    %2003 = vmatpush.bf16.msra.mxu0 %v1398
    %2004 = vmatpush.bf16.msra.mxu0 %v1394
    %2005 = vmatpush.bf16.msra.mxu0 %v1390
    %2006 = vmatmul.bf16.gmra.mxu0 %v129
    %v2007 = vpop.f32.mrf.mxu0
    %v2008 = vadd.f32 %v1994, %v2007
    %v2009 = vpop.f32.mrf.mxu0
    %v2010 = vadd.f32 %v1996, %v2009
    %2011 = vdwg.mxu0
    %2012 = vmatpush.bf16.msra.mxu0 %v1195
    %2013 = vmatpush.bf16.msra.mxu0 %v1191
    %2014 = vmatpush.bf16.msra.mxu0 %v1187
    %2015 = vmatpush.bf16.msra.mxu0 %v1183
    %2016 = vmatpush.bf16.msra.mxu0 %v1179
    %2017 = vmatpush.bf16.msra.mxu0 %v1175
    %2018 = vmatpush.bf16.msra.mxu0 %v1171
    %2019 = vmatpush.bf16.msra.mxu0 %v1167
    %2020 = vmatmul.bf16.gmra.mxu0 %v122
    %v2021 = vpop.f32.mrf.mxu0
    %v2022 = vadd.f32 %v391, %v2021
    %v2023 = vpop.f32.mrf.mxu0
    %v2024 = vadd.f32 %v391, %v2023
    %2025 = vdwg.mxu0
    %2026 = vmatpush.bf16.msra.mxu0 %v1227
    %2027 = vmatpush.bf16.msra.mxu0 %v1223
    %2028 = vmatpush.bf16.msra.mxu0 %v1219
    %2029 = vmatpush.bf16.msra.mxu0 %v1215
    %2030 = vmatpush.bf16.msra.mxu0 %v1211
    %2031 = vmatpush.bf16.msra.mxu0 %v1207
    %2032 = vmatpush.bf16.msra.mxu0 %v1203
    %2033 = vmatpush.bf16.msra.mxu0 %v1199
    %2034 = vmatmul.bf16.gmra.mxu0 %v123
    %v2035 = vpop.f32.mrf.mxu0
    %v2036 = vadd.f32 %v2022, %v2035
    %v2037 = vpop.f32.mrf.mxu0
    %v2038 = vadd.f32 %v2024, %v2037
    %2039 = vdwg.mxu0
    %2040 = vmatpush.bf16.msra.mxu0 %v1259
    %2041 = vmatpush.bf16.msra.mxu0 %v1255
    %2042 = vmatpush.bf16.msra.mxu0 %v1251
    %2043 = vmatpush.bf16.msra.mxu0 %v1247
    %2044 = vmatpush.bf16.msra.mxu0 %v1243
    %2045 = vmatpush.bf16.msra.mxu0 %v1239
    %2046 = vmatpush.bf16.msra.mxu0 %v1235
    %2047 = vmatpush.bf16.msra.mxu0 %v1231
    %2048 = vmatmul.bf16.gmra.mxu0 %v124
    %v2049 = vpop.f32.mrf.mxu0
    %v2050 = vadd.f32 %v2036, %v2049
    %v2051 = vpop.f32.mrf.mxu0
    %v2052 = vadd.f32 %v2038, %v2051
    %2053 = vdwg.mxu0
    %2054 = vmatpush.bf16.msra.mxu0 %v1291
    %2055 = vmatpush.bf16.msra.mxu0 %v1287
    %2056 = vmatpush.bf16.msra.mxu0 %v1283
    %2057 = vmatpush.bf16.msra.mxu0 %v1279
    %2058 = vmatpush.bf16.msra.mxu0 %v1275
    %2059 = vmatpush.bf16.msra.mxu0 %v1271
    %2060 = vmatpush.bf16.msra.mxu0 %v1267
    %2061 = vmatpush.bf16.msra.mxu0 %v1263
    %2062 = vmatmul.bf16.gmra.mxu0 %v125
    %v2063 = vpop.f32.mrf.mxu0
    %v2064 = vadd.f32 %v2050, %v2063
    %v2065 = vpop.f32.mrf.mxu0
    %v2066 = vadd.f32 %v2052, %v2065
    %2067 = vdwg.mxu0
    %2068 = vmatpush.bf16.msra.mxu0 %v1323
    %2069 = vmatpush.bf16.msra.mxu0 %v1319
    %2070 = vmatpush.bf16.msra.mxu0 %v1315
    %2071 = vmatpush.bf16.msra.mxu0 %v1311
    %2072 = vmatpush.bf16.msra.mxu0 %v1307
    %2073 = vmatpush.bf16.msra.mxu0 %v1303
    %2074 = vmatpush.bf16.msra.mxu0 %v1299
    %2075 = vmatpush.bf16.msra.mxu0 %v1295
    %2076 = vmatmul.bf16.gmra.mxu0 %v126
    %v2077 = vpop.f32.mrf.mxu0
    %v2078 = vadd.f32 %v2064, %v2077
    %v2079 = vpop.f32.mrf.mxu0
    %v2080 = vadd.f32 %v2066, %v2079
    %2081 = vdwg.mxu0
    %2082 = vmatpush.bf16.msra.mxu0 %v1355
    %2083 = vmatpush.bf16.msra.mxu0 %v1351
    %2084 = vmatpush.bf16.msra.mxu0 %v1347
    %2085 = vmatpush.bf16.msra.mxu0 %v1343
    %2086 = vmatpush.bf16.msra.mxu0 %v1339
    %2087 = vmatpush.bf16.msra.mxu0 %v1335
    %2088 = vmatpush.bf16.msra.mxu0 %v1331
    %2089 = vmatpush.bf16.msra.mxu0 %v1327
    %2090 = vmatmul.bf16.gmra.mxu0 %v127
    %v2091 = vpop.f32.mrf.mxu0
    %v2092 = vadd.f32 %v2078, %v2091
    %v2093 = vpop.f32.mrf.mxu0
    %v2094 = vadd.f32 %v2080, %v2093
    %2095 = vdwg.mxu0
    %2096 = vmatpush.bf16.msra.mxu0 %v1387
    %2097 = vmatpush.bf16.msra.mxu0 %v1383
    %2098 = vmatpush.bf16.msra.mxu0 %v1379
    %2099 = vmatpush.bf16.msra.mxu0 %v1375
    %2100 = vmatpush.bf16.msra.mxu0 %v1371
    %2101 = vmatpush.bf16.msra.mxu0 %v1367
    %2102 = vmatpush.bf16.msra.mxu0 %v1363
    %2103 = vmatpush.bf16.msra.mxu0 %v1359
    %2104 = vmatmul.bf16.gmra.mxu0 %v128
    %v2105 = vpop.f32.mrf.mxu0
    %v2106 = vadd.f32 %v2092, %v2105
    %v2107 = vpop.f32.mrf.mxu0
    %v2108 = vadd.f32 %v2094, %v2107
    %2109 = vdwg.mxu0
    %2110 = vmatpush.bf16.msra.mxu0 %v1419
    %2111 = vmatpush.bf16.msra.mxu0 %v1415
    %2112 = vmatpush.bf16.msra.mxu0 %v1411
    %2113 = vmatpush.bf16.msra.mxu0 %v1407
    %2114 = vmatpush.bf16.msra.mxu0 %v1403
    %2115 = vmatpush.bf16.msra.mxu0 %v1399
    %2116 = vmatpush.bf16.msra.mxu0 %v1395
    %2117 = vmatpush.bf16.msra.mxu0 %v1391
    %2118 = vmatmul.bf16.gmra.mxu0 %v129
    %v2119 = vpop.f32.mrf.mxu0
    %v2120 = vadd.f32 %v2106, %v2119
    %v2121 = vpop.f32.mrf.mxu0
    %v2122 = vadd.f32 %v2108, %v2121
    %2123 = vdwg.mxu0
    %v2124 = vmax.f32 %v1784, 0.0
    %v2125 = vmax.f32 %v1896, 0.0
    %v2126 = vmax.f32 %v2008, 0.0
    %v2127 = vmax.f32 %v2120, 0.0
    %v2128 = vmax.f32 %v1786, 0.0
    %v2129 = vmax.f32 %v1898, 0.0
    %v2130 = vmax.f32 %v2010, 0.0
    %v2131 = vmax.f32 %v2122, 0.0
    %v2132 = vpack.c.bf16 %v2128, %v2124
    %v2133 = vpack.c.bf16 %v2129, %v2125
    %v2134 = vpack.c.bf16 %v2130, %v2126
    %v2135 = vpack.c.bf16 %v2131, %v2127
    %v2136 = vld [vmem:[#allocation8] sm:$0xf]
    %v2137 = vld [vmem:[#allocation8 + $0x4] sm:$0xf]
    %v2138 = vld [vmem:[#allocation8 + $0x8] sm:$0xf]
    %v2139 = vld [vmem:[#allocation8 + $0xc] sm:$0xf]
    %v2140 = vld [vmem:[#allocation8 + $0x10] sm:$0xf]
    %v2141 = vld [vmem:[#allocation8 + $0x14] sm:$0xf]
    %v2142 = vld [vmem:[#allocation8 + $0x18] sm:$0xf]
    %v2143 = vld [vmem:[#allocation8 + $0x1c] sm:$0xf]
    %v2144 = vld [vmem:[#allocation8 + $0x20] sm:$0xf]
    %v2145 = vld [vmem:[#allocation8 + $0x24] sm:$0xf]
    %v2146 = vld [vmem:[#allocation8 + $0x28] sm:$0xf]
    %v2147 = vld [vmem:[#allocation8 + $0x2c] sm:$0xf]
    %v2148 = vld [vmem:[#allocation8 + $0x30] sm:$0xf]
    %v2149 = vld [vmem:[#allocation8 + $0x34] sm:$0xf]
    %v2150 = vld [vmem:[#allocation8 + $0x38] sm:$0xf]
    %v2151 = vld [vmem:[#allocation8 + $0x3c] sm:$0xf]
    %v2152 = vld [vmem:[#allocation8 + $0x40] sm:$0xf]
    %v2153 = vld [vmem:[#allocation8 + $0x44] sm:$0xf]
    %v2154 = vld [vmem:[#allocation8 + $0x48] sm:$0xf]
    %v2155 = vld [vmem:[#allocation8 + $0x4c] sm:$0xf]
    %v2156 = vld [vmem:[#allocation8 + $0x50] sm:$0xf]
    %v2157 = vld [vmem:[#allocation8 + $0x54] sm:$0xf]
    %v2158 = vld [vmem:[#allocation8 + $0x58] sm:$0xf]
    %v2159 = vld [vmem:[#allocation8 + $0x5c] sm:$0xf]
    %v2160 = vld [vmem:[#allocation8 + $0x60] sm:$0xf]
    %v2161 = vld [vmem:[#allocation8 + $0x64] sm:$0xf]
    %v2162 = vld [vmem:[#allocation8 + $0x68] sm:$0xf]
    %v2163 = vld [vmem:[#allocation8 + $0x6c] sm:$0xf]
    %v2164 = vld [vmem:[#allocation8 + $0x70] sm:$0xf]
    %v2165 = vld [vmem:[#allocation8 + $0x74] sm:$0xf]
    %v2166 = vld [vmem:[#allocation8 + $0x78] sm:$0xf]
    %v2167 = vld [vmem:[#allocation8 + $0x7c] sm:$0xf]
    %v2168 = vld [vmem:[#allocation8 + $0x80] sm:$0xf]
    %v2169 = vld [vmem:[#allocation8 + $0x84] sm:$0xf]
    %v2170 = vld [vmem:[#allocation8 + $0x88] sm:$0xf]
    %v2171 = vld [vmem:[#allocation8 + $0x8c] sm:$0xf]
    %v2172 = vld [vmem:[#allocation8 + $0x90] sm:$0xf]
    %v2173 = vld [vmem:[#allocation8 + $0x94] sm:$0xf]
    %v2174 = vld [vmem:[#allocation8 + $0x98] sm:$0xf]
    %v2175 = vld [vmem:[#allocation8 + $0x9c] sm:$0xf]
    %v2176 = vld [vmem:[#allocation8 + $0xa0] sm:$0xf]
    %v2177 = vld [vmem:[#allocation8 + $0xa4] sm:$0xf]
    %v2178 = vld [vmem:[#allocation8 + $0xa8] sm:$0xf]
    %v2179 = vld [vmem:[#allocation8 + $0xac] sm:$0xf]
    %v2180 = vld [vmem:[#allocation8 + $0xb0] sm:$0xf]
    %v2181 = vld [vmem:[#allocation8 + $0xb4] sm:$0xf]
    %v2182 = vld [vmem:[#allocation8 + $0xb8] sm:$0xf]
    %v2183 = vld [vmem:[#allocation8 + $0xbc] sm:$0xf]
    %v2184 = vld [vmem:[#allocation8 + $0xc0] sm:$0xf]
    %v2185 = vld [vmem:[#allocation8 + $0xc4] sm:$0xf]
    %v2186 = vld [vmem:[#allocation8 + $0xc8] sm:$0xf]
    %v2187 = vld [vmem:[#allocation8 + $0xcc] sm:$0xf]
    %v2188 = vld [vmem:[#allocation8 + $0xd0] sm:$0xf]
    %v2189 = vld [vmem:[#allocation8 + $0xd4] sm:$0xf]
    %v2190 = vld [vmem:[#allocation8 + $0xd8] sm:$0xf]
    %v2191 = vld [vmem:[#allocation8 + $0xdc] sm:$0xf]
    %v2192 = vld [vmem:[#allocation8 + $0xe0] sm:$0xf]
    %v2193 = vld [vmem:[#allocation8 + $0xe4] sm:$0xf]
    %v2194 = vld [vmem:[#allocation8 + $0xe8] sm:$0xf]
    %v2195 = vld [vmem:[#allocation8 + $0xec] sm:$0xf]
    %v2196 = vld [vmem:[#allocation8 + $0xf0] sm:$0xf]
    %v2197 = vld [vmem:[#allocation8 + $0xf4] sm:$0xf]
    %v2198 = vld [vmem:[#allocation8 + $0xf8] sm:$0xf]
    %v2199 = vld [vmem:[#allocation8 + $0xfc] sm:$0xf]
    %v2200 = vld [vmem:[%s4] sm:$0x1]
    %v2202 = vperm.slane %v2200, 0
    %v2268 = vunpack.c.l.b16 %v2136
    %v2269 = vunpack.c.l.b16 %v2137
    %v2270 = vunpack.c.l.b16 %v2138
    %v2271 = vunpack.c.l.b16 %v2139
    %v2272 = vunpack.c.l.b16 %v2140
    %v2273 = vunpack.c.l.b16 %v2141
    %v2274 = vunpack.c.l.b16 %v2142
    %v2275 = vunpack.c.l.b16 %v2143
    %v2276 = vunpack.c.l.b16 %v2144
    %v2277 = vunpack.c.l.b16 %v2145
    %v2278 = vunpack.c.l.b16 %v2146
    %v2279 = vunpack.c.l.b16 %v2147
    %v2280 = vunpack.c.l.b16 %v2148
    %v2281 = vunpack.c.l.b16 %v2149
    %v2282 = vunpack.c.l.b16 %v2150
    %v2283 = vunpack.c.l.b16 %v2151
    %v2284 = vunpack.c.l.b16 %v2152
    %v2285 = vunpack.c.l.b16 %v2153
    %v2286 = vunpack.c.l.b16 %v2154
    %v2287 = vunpack.c.l.b16 %v2155
    %v2288 = vunpack.c.l.b16 %v2156
    %v2289 = vunpack.c.l.b16 %v2157
    %v2290 = vunpack.c.l.b16 %v2158
    %v2291 = vunpack.c.l.b16 %v2159
    %v2292 = vunpack.c.l.b16 %v2160
    %v2293 = vunpack.c.l.b16 %v2161
    %v2294 = vunpack.c.l.b16 %v2162
    %v2295 = vunpack.c.l.b16 %v2163
    %v2296 = vunpack.c.l.b16 %v2164
    %v2297 = vunpack.c.l.b16 %v2165
    %v2298 = vunpack.c.l.b16 %v2166
    %v2299 = vunpack.c.l.b16 %v2167
    %v2300 = vunpack.c.l.b16 %v2168
    %v2301 = vunpack.c.l.b16 %v2169
    %v2302 = vunpack.c.l.b16 %v2170
    %v2303 = vunpack.c.l.b16 %v2171
    %v2304 = vunpack.c.l.b16 %v2172
    %v2305 = vunpack.c.l.b16 %v2173
    %v2306 = vunpack.c.l.b16 %v2174
    %v2307 = vunpack.c.l.b16 %v2175
    %v2308 = vunpack.c.l.b16 %v2176
    %v2309 = vunpack.c.l.b16 %v2177
    %v2310 = vunpack.c.l.b16 %v2178
    %v2311 = vunpack.c.l.b16 %v2179
    %v2312 = vunpack.c.l.b16 %v2180
    %v2313 = vunpack.c.l.b16 %v2181
    %v2314 = vunpack.c.l.b16 %v2182
    %v2315 = vunpack.c.l.b16 %v2183
    %v2316 = vunpack.c.l.b16 %v2184
    %v2317 = vunpack.c.l.b16 %v2185
    %v2318 = vunpack.c.l.b16 %v2186
    %v2319 = vunpack.c.l.b16 %v2187
    %v2320 = vunpack.c.l.b16 %v2188
    %v2321 = vunpack.c.l.b16 %v2189
    %v2322 = vunpack.c.l.b16 %v2190
    %v2323 = vunpack.c.l.b16 %v2191
    %v2324 = vunpack.c.l.b16 %v2192
    %v2325 = vunpack.c.l.b16 %v2193
    %v2326 = vunpack.c.l.b16 %v2194
    %v2327 = vunpack.c.l.b16 %v2195
    %v2328 = vunpack.c.l.b16 %v2196
    %v2329 = vunpack.c.l.b16 %v2197
    %v2330 = vunpack.c.l.b16 %v2198
    %v2331 = vunpack.c.l.b16 %v2199
    %v2332 = vpack.c.b16 %v2269, %v2268
    %v2333 = vpack.c.b16 %v2271, %v2270
    %v2334 = vpack.c.b16 %v2273, %v2272
    %v2335 = vpack.c.b16 %v2275, %v2274
    %v2336 = vpack.c.b16 %v2277, %v2276
    %v2337 = vpack.c.b16 %v2279, %v2278
    %v2338 = vpack.c.b16 %v2281, %v2280
    %v2339 = vpack.c.b16 %v2283, %v2282
    %v2340 = vpack.c.b16 %v2285, %v2284
    %v2341 = vpack.c.b16 %v2287, %v2286
    %v2342 = vpack.c.b16 %v2289, %v2288
    %v2343 = vpack.c.b16 %v2291, %v2290
    %v2344 = vpack.c.b16 %v2293, %v2292
    %v2345 = vpack.c.b16 %v2295, %v2294
    %v2346 = vpack.c.b16 %v2297, %v2296
    %v2347 = vpack.c.b16 %v2299, %v2298
    %v2348 = vpack.c.b16 %v2301, %v2300
    %v2349 = vpack.c.b16 %v2303, %v2302
    %v2350 = vpack.c.b16 %v2305, %v2304
    %v2351 = vpack.c.b16 %v2307, %v2306
    %v2352 = vpack.c.b16 %v2309, %v2308
    %v2353 = vpack.c.b16 %v2311, %v2310
    %v2354 = vpack.c.b16 %v2313, %v2312
    %v2355 = vpack.c.b16 %v2315, %v2314
    %v2356 = vpack.c.b16 %v2317, %v2316
    %v2357 = vpack.c.b16 %v2319, %v2318
    %v2358 = vpack.c.b16 %v2321, %v2320
    %v2359 = vpack.c.b16 %v2323, %v2322
    %v2360 = vpack.c.b16 %v2325, %v2324
    %v2361 = vpack.c.b16 %v2327, %v2326
    %v2362 = vpack.c.b16 %v2329, %v2328
    %v2363 = vpack.c.b16 %v2331, %v2330
    %2396 = vmatpush.bf16.msra.mxu0 %v2339
    %2397 = vmatpush.bf16.msra.mxu0 %v2338
    %2398 = vmatpush.bf16.msra.mxu0 %v2337
    %2399 = vmatpush.bf16.msra.mxu0 %v2336
    %2400 = vmatpush.bf16.msra.mxu0 %v2335
    %2401 = vmatpush.bf16.msra.mxu0 %v2334
    %2402 = vmatpush.bf16.msra.mxu0 %v2333
    %2403 = vmatpush.bf16.msra.mxu0 %v2332
    %2404 = vmatmul.bf16.gmra.mxu0 %v2132
    %v2405 = vpop.f32.mrf.mxu0
    %v2406 = vadd.f32 %v2202, %v2405
    %v2407 = vpop.f32.mrf.mxu0
    %v2408 = vadd.f32 %v2202, %v2407
    %2409 = vdwg.mxu0
    %2410 = vmatpush.bf16.msra.mxu0 %v2347
    %2411 = vmatpush.bf16.msra.mxu0 %v2346
    %2412 = vmatpush.bf16.msra.mxu0 %v2345
    %2413 = vmatpush.bf16.msra.mxu0 %v2344
    %2414 = vmatpush.bf16.msra.mxu0 %v2343
    %2415 = vmatpush.bf16.msra.mxu0 %v2342
    %2416 = vmatpush.bf16.msra.mxu0 %v2341
    %2417 = vmatpush.bf16.msra.mxu0 %v2340
    %2418 = vmatmul.bf16.gmra.mxu0 %v2133
    %v2419 = vpop.f32.mrf.mxu0
    %v2420 = vadd.f32 %v2406, %v2419
    %v2421 = vpop.f32.mrf.mxu0
    %v2422 = vadd.f32 %v2408, %v2421
    %2423 = vdwg.mxu0
    %2424 = vmatpush.bf16.msra.mxu0 %v2355
    %2425 = vmatpush.bf16.msra.mxu0 %v2354
    %2426 = vmatpush.bf16.msra.mxu0 %v2353
    %2427 = vmatpush.bf16.msra.mxu0 %v2352
    %2428 = vmatpush.bf16.msra.mxu0 %v2351
    %2429 = vmatpush.bf16.msra.mxu0 %v2350
    %2430 = vmatpush.bf16.msra.mxu0 %v2349
    %2431 = vmatpush.bf16.msra.mxu0 %v2348
    %2432 = vmatmul.bf16.gmra.mxu0 %v2134
    %v2433 = vpop.f32.mrf.mxu0
    %v2434 = vadd.f32 %v2420, %v2433
    %v2435 = vpop.f32.mrf.mxu0
    %v2436 = vadd.f32 %v2422, %v2435
    %2437 = vdwg.mxu0
    %2438 = vmatpush.bf16.msra.mxu0 %v2363
    %2439 = vmatpush.bf16.msra.mxu0 %v2362
    %2440 = vmatpush.bf16.msra.mxu0 %v2361
    %2441 = vmatpush.bf16.msra.mxu0 %v2360
    %2442 = vmatpush.bf16.msra.mxu0 %v2359
    %2443 = vmatpush.bf16.msra.mxu0 %v2358
    %2444 = vmatpush.bf16.msra.mxu0 %v2357
    %2445 = vmatpush.bf16.msra.mxu0 %v2356
    %2446 = vmatmul.bf16.gmra.mxu0 %v2135
    %v2447 = vpop.f32.mrf.mxu0
    %v2448 = vadd.f32 %v2434, %v2447
    %v2449 = vpop.f32.mrf.mxu0
    %v2450 = vadd.f32 %v2436, %v2449
    %2451 = vdwg.mxu0
    %2452 = vst [vmem:[#allocation10] sm:$0xff] %v2448
    %2453 = vst [vmem:[#allocation10 + $0x8] sm:$0xff] %v2450
    // Predicated region
    $region38: #{tpu_custom_call.1} parent=1 // pred_check
      _
    $region39: #{tpu_custom_call.1} parent=1 // pred_check_branch
      %2455 = sbr.rel (0) target = $region41
    $region40: #{tpu_custom_call.1} parent=1 // pred_region
      %2457 = vsyncadd [#allocation4], 0
      %s2458 = sshll.u32 [#allocation10], 4
      %s2459 = int_to_ptr.vmem [resolvable:$true] %s2458
      %s2460 = sshll.u32 %s5, 4
      %s2461 = int_to_ptr.hbm [resolvable:$true] %s2460
      %2466 = dma.vmem_to_hbm [thread:$0]  %s2459, 256, %s2461, [#allocation4], 128, 128, 8
    $region41: #{tpu_custom_call.1} parent=1 // pred_fallthru
      _
    // Predicated region
    $region42: #{tpu_custom_call.1} parent=1 // pred_check
      _
    $region43: #{tpu_custom_call.1} parent=1 // pred_check_branch
      %2468 = sbr.rel (0) target = $region45
    $region44: #{tpu_custom_call.1} parent=1 // pred_region
      %2470 = dma.done [#allocation4], 256
    $region45: #{tpu_custom_call.1} parent=1 // pred_fallthru
      _
    %2471 = vsyncpa [#allocation3], 1
    %2472 = vsyncpa [#allocation6], 1
    %2473 = vsyncpa [#allocation9], 1
    %2474 = vsyncpa [#allocation4], 1

// kernel: tpu_custom_call.1
$region0: #{tpu_custom_call.1}
  #allocation0 [shape = 'u32[]', space=smem, size = 0x4, offset = 0x4, fixed_abs, tag = 'smem constant byte address 0x4 - core index']
  #allocation1 [shape = 'u32[72,128]{1,0:T(1,128)}', space=vmem, size = 0x9000, scoped, tag = 'internal scratch']
  %s0 = inlined_call_operand.hbm [shape: bf16[16,1024], index: 0, kind: input, shape index: {}]
  %s1 = inlined_call_operand.hbm [shape: bf16[1024,512], index: 1, kind: input, shape index: {}]
  %s2 = inlined_call_operand.hbm [shape: f32[1,512], index: 2, kind: input, shape index: {}]
  %s3 = inlined_call_operand.hbm [shape: bf16[512,128], index: 3, kind: input, shape index: {}]
  %s4 = inlined_call_operand.vmem [shape: f32[1,128], index: 4, kind: input, shape index: {}]
  %s5 = inlined_call_operand.hbm [shape: f32[16,128], index: 5, kind: output, shape index: {}]
  %s6 = sld [smem:[#allocation0]]
  $region46: #{tpu_custom_call.1} parent=0
    _
  %s8 = ssub.s32 1, %s6
  %s9 = scalar_select 0, %s8, %s6
  $region1: #{tpu_custom_call.1} parent=0
    #allocation2 [shape = 'u8[32768]{0}', space=vmem, size = 0x8000, scoped, tag = 'input window, operand 0, single buffered']
    #allocation3 [shape = 's32[1]{0}', space=sflag, size = 0x4, scoped, tag = 'scoped memory for tpu_custom_call.1']
    #allocation4 [shape = 's32[1]{0}', space=sflag, size = 0x4, scoped, tag = 'scoped memory for tpu_custom_call.1']
    #allocation5 [shape = 'u8[1048576]{0}', space=vmem, size = 0x100000, scoped, tag = 'input window, operand 1, single buffered']
    #allocation6 [shape = 's32[1]{0}', space=sflag, size = 0x4, scoped, tag = 'scoped memory for tpu_custom_call.1']
    #allocation7 [shape = 'u8[2048]{0}', space=vmem, size = 0x800, scoped, tag = 'input window, operand 2, single buffered']
    #allocation8 [shape = 'u8[131072]{0}', space=vmem, size = 0x20000, scoped, tag = 'input window, operand 3, single buffered']
    #allocation9 [shape = 's32[1]{0}', space=sflag, size = 0x4, scoped, tag = 'scoped memory for tpu_custom_call.1']
    #allocation10 [shape = 'u8[8192]{0}', space=vmem, size = 0x2000, scoped, tag = 'output window, operand 0, single buffered']
    %10 = vsyncpa [#allocation3], 0
    %11 = vsyncpa [#allocation6], 0
    %12 = vsyncpa [#allocation9], 0
    %13 = vsyncpa [#allocation4], 0
    // Predicated region
    $region2: #{tpu_custom_call.1} parent=1 // pred_check
      _
    $region3: #{tpu_custom_call.1} parent=1 // pred_check_branch
      %15 = sbr.rel (0) target = $region5
    $region4: #{tpu_custom_call.1} parent=1 // pred_region
      %17 = vsyncadd [#allocation3], 0
      %s18 = sshll.u32 %s0, 4
      %s19 = int_to_ptr.hbm [resolvable:$true] %s18
      %s20 = sshll.u32 [#allocation2], 4
      %s21 = int_to_ptr.vmem [resolvable:$true] %s20
      %26 = dma.hbm_to_vmem [thread:$0]  %s19, 1024, %s21, [#allocation3], 512, 512, 32
    $region5: #{tpu_custom_call.1} parent=1 // pred_fallthru
      _
    // Predicated region
    $region6: #{tpu_custom_call.1} parent=1 // pred_check
      _
    $region7: #{tpu_custom_call.1} parent=1 // pred_check_branch
      %28 = sbr.rel (0) target = $region9
    $region8: #{tpu_custom_call.1} parent=1 // pred_region
      %30 = vsyncadd [#allocation6], 0
      %s31 = sshll.u32 %s1, 4
      %s32 = int_to_ptr.hbm [resolvable:$true] %s31
      %s33 = sshll.u32 [#allocation5], 4
      %s34 = int_to_ptr.vmem [resolvable:$true] %s33
      %39 = dma.hbm_to_vmem [thread:$0]  %s32, 32768, %s34, [#allocation6], 256, 256, 16
    $region9: #{tpu_custom_call.1} parent=1 // pred_fallthru
      _
    // Predicated region
    $region10: #{tpu_custom_call.1} parent=1 // pred_check
      _
    $region11: #{tpu_custom_call.1} parent=1 // pred_check_branch
      %41 = sbr.rel (0) target = $region13
    $region12: #{tpu_custom_call.1} parent=1 // pred_region
      %43 = vsyncadd [#allocation6], 0
      %s45 = sshll.u32 %s2, 4
      %s46 = int_to_ptr.hbm [resolvable:$true] %s45
      %s47 = sshll.u32 [#allocation7], 4
      %s48 = int_to_ptr.vmem [resolvable:$true] %s47
      %50 = dma.hbm_to_vmem [thread:$0]  %s46, 64, %s48, [#allocation6]
    $region13: #{tpu_custom_call.1} parent=1 // pred_fallthru
      _
    // Predicated region
    $region14: #{tpu_custom_call.1} parent=1 // pred_check
      _
    $region15: #{tpu_custom_call.1} parent=1 // pred_check_branch
      %52 = sbr.rel (0) target = $region17
    $region16: #{tpu_custom_call.1} parent=1 // pred_region
      %54 = vsyncadd [#allocation9], 0
      %s55 = sshll.u32 %s3, 4
      %s56 = int_to_ptr.hbm [resolvable:$true] %s55
      %s57 = sshll.u32 [#allocation8], 4
      %s58 = int_to_ptr.vmem [resolvable:$true] %s57
      %63 = dma.hbm_to_vmem [thread:$0]  %s56, 4096, %s58, [#allocation9], 64, 64, 4
    $region17: #{tpu_custom_call.1} parent=1 // pred_fallthru
      _
    // Predicated region
    $region18: #{tpu_custom_call.1} parent=1 // pred_check
      _
    $region19: #{tpu_custom_call.1} parent=1 // pred_check_branch
      %65 = sbr.rel (0) target = $region21
    $region20: #{tpu_custom_call.1} parent=1 // pred_region
      _
    $region21: #{tpu_custom_call.1} parent=1 // pred_fallthru
      _
    // Predicated region
    $region22: #{tpu_custom_call.1} parent=1 // pred_check
      _
    $region23: #{tpu_custom_call.1} parent=1 // pred_check_branch
      %67 = sbr.rel (0) target = $region25
    $region24: #{tpu_custom_call.1} parent=1 // pred_region
      %69 = dma.done [#allocation3], 1024
    $region25: #{tpu_custom_call.1} parent=1 // pred_fallthru
      _
    // Predicated region
    $region26: #{tpu_custom_call.1} parent=1 // pred_check
      _
    $region27: #{tpu_custom_call.1} parent=1 // pred_check_branch
      %71 = sbr.rel (0) target = $region29
    $region28: #{tpu_custom_call.1} parent=1 // pred_region
      %73 = dma.done [#allocation6], 32768
    $region29: #{tpu_custom_call.1} parent=1 // pred_fallthru
      _
    // Predicated region
    $region30: #{tpu_custom_call.1} parent=1 // pred_check
      _
    $region31: #{tpu_custom_call.1} parent=1 // pred_check_branch
      %75 = sbr.rel (0) target = $region33
    $region32: #{tpu_custom_call.1} parent=1 // pred_region
      %77 = dma.done [#allocation6], 64
    $region33: #{tpu_custom_call.1} parent=1 // pred_fallthru
      _
    // Predicated region
    $region34: #{tpu_custom_call.1} parent=1 // pred_check
      _
    $region35: #{tpu_custom_call.1} parent=1 // pred_check_branch
      %79 = sbr.rel (0) target = $region37
    $region36: #{tpu_custom_call.1} parent=1 // pred_region
      %81 = dma.done [#allocation9], 4096
    $region37: #{tpu_custom_call.1} parent=1 // pred_fallthru
      _
    %v82 = vld [vmem:[#allocation2] sm:$0xff]
    %v83 = vld [vmem:[#allocation2 + $0x8] sm:$0xff]
    %v84 = vld [vmem:[#allocation2 + $0x10] sm:$0xff]
    %v85 = vld [vmem:[#allocation2 + $0x18] sm:$0xff]
    %v86 = vld [vmem:[#allocation2 + $0x20] sm:$0xff]
    %v87 = vld [vmem:[#allocation2 + $0x28] sm:$0xff]
    %v88 = vld [vmem:[#allocation2 + $0x30] sm:$0xff]
    %v89 = vld [vmem:[#allocation2 + $0x38] sm:$0xff]
    %v90 = vunpack.c.l.bf16 %v82
    %v91 = vunpack.c.h.bf16 %v82
    %v92 = vunpack.c.l.bf16 %v83
    %v93 = vunpack.c.h.bf16 %v83
    %v94 = vunpack.c.l.bf16 %v84
    %v95 = vunpack.c.h.bf16 %v84
    %v96 = vunpack.c.l.bf16 %v85
    %v97 = vunpack.c.h.bf16 %v85
    %v98 = vunpack.c.l.bf16 %v86
    %v99 = vunpack.c.h.bf16 %v86
    %v100 = vunpack.c.l.bf16 %v87
    %v101 = vunpack.c.h.bf16 %v87
    %v102 = vunpack.c.l.bf16 %v88
    %v103 = vunpack.c.h.bf16 %v88
    %v104 = vunpack.c.l.bf16 %v89
    %v105 = vunpack.c.h.bf16 %v89
    %v106 = vmax.f32 %v90, 0.0
    %v107 = vmax.f32 %v91, 0.0
    %v108 = vmax.f32 %v92, 0.0
    %v109 = vmax.f32 %v93, 0.0
    %v110 = vmax.f32 %v94, 0.0
    %v111 = vmax.f32 %v95, 0.0
    %v112 = vmax.f32 %v96, 0.0
    %v113 = vmax.f32 %v97, 0.0
    %v114 = vmax.f32 %v98, 0.0
    %v115 = vmax.f32 %v99, 0.0
    %v116 = vmax.f32 %v100, 0.0
    %v117 = vmax.f32 %v101, 0.0
    %v118 = vmax.f32 %v102, 0.0
    %v119 = vmax.f32 %v103, 0.0
    %v120 = vmax.f32 %v104, 0.0
    %v121 = vmax.f32 %v105, 0.0
    %v122 = vpack.c.bf16 %v114, %v106
    %v123 = vpack.c.bf16 %v115, %v107
    %v124 = vpack.c.bf16 %v116, %v108
    %v125 = vpack.c.bf16 %v117, %v109
    %v126 = vpack.c.bf16 %v118, %v110
    %v127 = vpack.c.bf16 %v119, %v111
    %v128 = vpack.c.bf16 %v120, %v112
    %v129 = vpack.c.bf16 %v121, %v113
    %v130 = vld [vmem:[#allocation5] sm:$0xff]
    %v131 = vld [vmem:[#allocation5 + $0x8] sm:$0xff]
    %v132 = vld [vmem:[#allocation5 + $0x10] sm:$0xff]
    %v133 = vld [vmem:[#allocation5 + $0x18] sm:$0xff]
    %v134 = vld [vmem:[#allocation5 + $0x20] sm:$0xff]
    %v135 = vld [vmem:[#allocation5 + $0x28] sm:$0xff]
    %v136 = vld [vmem:[#allocation5 + $0x30] sm:$0xff]
    %v137 = vld [vmem:[#allocation5 + $0x38] sm:$0xff]
    %v138 = vld [vmem:[#allocation5 + $0x40] sm:$0xff]
    %v139 = vld [vmem:[#allocation5 + $0x48] sm:$0xff]
    %v140 = vld [vmem:[#allocation5 + $0x50] sm:$0xff]
    %v141 = vld [vmem:[#allocation5 + $0x58] sm:$0xff]
    %v142 = vld [vmem:[#allocation5 + $0x60] sm:$0xff]
    %v143 = vld [vmem:[#allocation5 + $0x68] sm:$0xff]
    %v144 = vld [vmem:[#allocation5 + $0x70] sm:$0xff]
    %v145 = vld [vmem:[#allocation5 + $0x78] sm:$0xff]
    %v146 = vld [vmem:[#allocation5 + $0x80] sm:$0xff]
    %v147 = vld [vmem:[#allocation5 + $0x88] sm:$0xff]
    %v148 = vld [vmem:[#allocation5 + $0x90] sm:$0xff]
    %v149 = vld [vmem:[#allocation5 + $0x98] sm:$0xff]
    %v150 = vld [vmem:[#allocation5 + $0xa0] sm:$0xff]
    %v151 = vld [vmem:[#allocation5 + $0xa8] sm:$0xff]
    %v152 = vld [vmem:[#allocation5 + $0xb0] sm:$0xff]
    %v153 = vld [vmem:[#allocation5 + $0xb8] sm:$0xff]
    %v154 = vld [vmem:[#allocation5 + $0xc0] sm:$0xff]
    %v155 = vld [vmem:[#allocation5 + $0xc8] sm:$0xff]
    %v156 = vld [vmem:[#allocation5 + $0xd0] sm:$0xff]
    %v157 = vld [vmem:[#allocation5 + $0xd8] sm:$0xff]
    %v158 = vld [vmem:[#allocation5 + $0xe0] sm:$0xff]
    %v159 = vld [vmem:[#allocation5 + $0xe8] sm:$0xff]
    %v160 = vld [vmem:[#allocation5 + $0xf0] sm:$0xff]
    %v161 = vld [vmem:[#allocation5 + $0xf8] sm:$0xff]
    %v162 = vld [vmem:[#allocation5 + $0x100] sm:$0xff]
    %v163 = vld [vmem:[#allocation5 + $0x108] sm:$0xff]
    %v164 = vld [vmem:[#allocation5 + $0x110] sm:$0xff]
    %v165 = vld [vmem:[#allocation5 + $0x118] sm:$0xff]
    %v166 = vld [vmem:[#allocation5 + $0x120] sm:$0xff]
    %v167 = vld [vmem:[#allocation5 + $0x128] sm:$0xff]
    %v168 = vld [vmem:[#allocation5 + $0x130] sm:$0xff]
    %v169 = vld [vmem:[#allocation5 + $0x138] sm:$0xff]
    %v170 = vld [vmem:[#allocation5 + $0x140] sm:$0xff]
    %v171 = vld [vmem:[#allocation5 + $0x148] sm:$0xff]
    %v172 = vld [vmem:[#allocation5 + $0x150] sm:$0xff]
    %v173 = vld [vmem:[#allocation5 + $0x158] sm:$0xff]
    %v174 = vld [vmem:[#allocation5 + $0x160] sm:$0xff]
    %v175 = vld [vmem:[#allocation5 + $0x168] sm:$0xff]
    %v176 = vld [vmem:[#allocation5 + $0x170] sm:$0xff]
    %v177 = vld [vmem:[#allocation5 + $0x178] sm:$0xff]
    %v178 = vld [vmem:[#allocation5 + $0x180] sm:$0xff]
    %v179 = vld [vmem:[#allocation5 + $0x188] sm:$0xff]
    %v180 = vld [vmem:[#allocation5 + $0x190] sm:$0xff]
    %v181 = vld [vmem:[#allocation5 + $0x198] sm:$0xff]
    %v182 = vld [vmem:[#allocation5 + $0x1a0] sm:$0xff]
    %v183 = vld [vmem:[#allocation5 + $0x1a8] sm:$0xff]
    %v184 = vld [vmem:[#allocation5 + $0x1b0] sm:$0xff]
    %v185 = vld [vmem:[#allocation5 + $0x1b8] sm:$0xff]
    %v186 = vld [vmem:[#allocation5 + $0x1c0] sm:$0xff]
    %v187 = vld [vmem:[#allocation5 + $0x1c8] sm:$0xff]
    %v188 = vld [vmem:[#allocation5 + $0x1d0] sm:$0xff]
    %v189 = vld [vmem:[#allocation5 + $0x1d8] sm:$0xff]
    %v190 = vld [vmem:[#allocation5 + $0x1e0] sm:$0xff]
    %v191 = vld [vmem:[#allocation5 + $0x1e8] sm:$0xff]
    %v192 = vld [vmem:[#allocation5 + $0x1f0] sm:$0xff]
    %v193 = vld [vmem:[#allocation5 + $0x1f8] sm:$0xff]
    %v194 = vld [vmem:[#allocation5 + $0x200] sm:$0xff]
    %v195 = vld [vmem:[#allocation5 + $0x208] sm:$0xff]
    %v196 = vld [vmem:[#allocation5 + $0x210] sm:$0xff]
    %v197 = vld [vmem:[#allocation5 + $0x218] sm:$0xff]
    %v198 = vld [vmem:[#allocation5 + $0x220] sm:$0xff]
    %v199 = vld [vmem:[#allocation5 + $0x228] sm:$0xff]
    %v200 = vld [vmem:[#allocation5 + $0x230] sm:$0xff]
    %v201 = vld [vmem:[#allocation5 + $0x238] sm:$0xff]
    %v202 = vld [vmem:[#allocation5 + $0x240] sm:$0xff]
    %v203 = vld [vmem:[#allocation5 + $0x248] sm:$0xff]
    %v204 = vld [vmem:[#allocation5 + $0x250] sm:$0xff]
    %v205 = vld [vmem:[#allocation5 + $0x258] sm:$0xff]
    %v206 = vld [vmem:[#allocation5 + $0x260] sm:$0xff]
    %v207 = vld [vmem:[#allocation5 + $0x268] sm:$0xff]
    %v208 = vld [vmem:[#allocation5 + $0x270] sm:$0xff]
    %v209 = vld [vmem:[#allocation5 + $0x278] sm:$0xff]
    %v210 = vld [vmem:[#allocation5 + $0x280] sm:$0xff]
    %v211 = vld [vmem:[#allocation5 + $0x288] sm:$0xff]
    %v212 = vld [vmem:[#allocation5 + $0x290] sm:$0xff]
    %v213 = vld [vmem:[#allocation5 + $0x298] sm:$0xff]
    %v214 = vld [vmem:[#allocation5 + $0x2a0] sm:$0xff]
    %v215 = vld [vmem:[#allocation5 + $0x2a8] sm:$0xff]
    %v216 = vld [vmem:[#allocation5 + $0x2b0] sm:$0xff]
    %v217 = vld [vmem:[#allocation5 + $0x2b8] sm:$0xff]
    %v218 = vld [vmem:[#allocation5 + $0x2c0] sm:$0xff]
    %v219 = vld [vmem:[#allocation5 + $0x2c8] sm:$0xff]
    %v220 = vld [vmem:[#allocation5 + $0x2d0] sm:$0xff]
    %v221 = vld [vmem:[#allocation5 + $0x2d8] sm:$0xff]
    %v222 = vld [vmem:[#allocation5 + $0x2e0] sm:$0xff]
    %v223 = vld [vmem:[#allocation5 + $0x2e8] sm:$0xff]
    %v224 = vld [vmem:[#allocation5 + $0x2f0] sm:$0xff]
    %v225 = vld [vmem:[#allocation5 + $0x2f8] sm:$0xff]
    %v226 = vld [vmem:[#allocation5 + $0x300] sm:$0xff]
    %v227 = vld [vmem:[#allocation5 + $0x308] sm:$0xff]
    %v228 = vld [vmem:[#allocation5 + $0x310] sm:$0xff]
    %v229 = vld [vmem:[#allocation5 + $0x318] sm:$0xff]
    %v230 = vld [vmem:[#allocation5 + $0x320] sm:$0xff]
    %v231 = vld [vmem:[#allocation5 + $0x328] sm:$0xff]
    %v232 = vld [vmem:[#allocation5 + $0x330] sm:$0xff]
    %v233 = vld [vmem:[#allocation5 + $0x338] sm:$0xff]
    %v234 = vld [vmem:[#allocation5 + $0x340] sm:$0xff]
    %v235 = vld [vmem:[#allocation5 + $0x348] sm:$0xff]
    %v236 = vld [vmem:[#allocation5 + $0x350] sm:$0xff]
    %v237 = vld [vmem:[#allocation5 + $0x358] sm:$0xff]
    %v238 = vld [vmem:[#allocation5 + $0x360] sm:$0xff]
    %v239 = vld [vmem:[#allocation5 + $0x368] sm:$0xff]
    %v240 = vld [vmem:[#allocation5 + $0x370] sm:$0xff]
    %v241 = vld [vmem:[#allocation5 + $0x378] sm:$0xff]
    %v242 = vld [vmem:[#allocation5 + $0x380] sm:$0xff]
    %v243 = vld [vmem:[#allocation5 + $0x388] sm:$0xff]
    %v244 = vld [vmem:[#allocation5 + $0x390] sm:$0xff]
    %v245 = vld [vmem:[#allocation5 + $0x398] sm:$0xff]
    %v246 = vld [vmem:[#allocation5 + $0x3a0] sm:$0xff]
    %v247 = vld [vmem:[#allocation5 + $0x3a8] sm:$0xff]
    %v248 = vld [vmem:[#allocation5 + $0x3b0] sm:$0xff]
    %v249 = vld [vmem:[#allocation5 + $0x3b8] sm:$0xff]
    %v250 = vld [vmem:[#allocation5 + $0x3c0] sm:$0xff]
    %v251 = vld [vmem:[#allocation5 + $0x3c8] sm:$0xff]
    %v252 = vld [vmem:[#allocation5 + $0x3d0] sm:$0xff]
    %v253 = vld [vmem:[#allocation5 + $0x3d8] sm:$0xff]
    %v254 = vld [vmem:[#allocation5 + $0x3e0] sm:$0xff]
    %v255 = vld [vmem:[#allocation5 + $0x3e8] sm:$0xff]
    %v256 = vld [vmem:[#allocation5 + $0x3f0] sm:$0xff]
    %v257 = vld [vmem:[#allocation5 + $0x3f8] sm:$0xff]
    %v258 = vld [vmem:[#allocation5 + $0x400] sm:$0xff]
    %v259 = vld [vmem:[#allocation5 + $0x408] sm:$0xff]
    %v260 = vld [vmem:[#allocation5 + $0x410] sm:$0xff]
    %v261 = vld [vmem:[#allocation5 + $0x418] sm:$0xff]
    %v262 = vld [vmem:[#allocation5 + $0x420] sm:$0xff]
    %v263 = vld [vmem:[#allocation5 + $0x428] sm:$0xff]
    %v264 = vld [vmem:[#allocation5 + $0x430] sm:$0xff]
    %v265 = vld [vmem:[#allocation5 + $0x438] sm:$0xff]
    %v266 = vld [vmem:[#allocation5 + $0x440] sm:$0xff]
    %v267 = vld [vmem:[#allocation5 + $0x448] sm:$0xff]
    %v268 = vld [vmem:[#allocation5 + $0x450] sm:$0xff]
    %v269 = vld [vmem:[#allocation5 + $0x458] sm:$0xff]
    %v270 = vld [vmem:[#allocation5 + $0x460] sm:$0xff]
    %v271 = vld [vmem:[#allocation5 + $0x468] sm:$0xff]
    %v272 = vld [vmem:[#allocation5 + $0x470] sm:$0xff]
    %v273 = vld [vmem:[#allocation5 + $0x478] sm:$0xff]
    %v274 = vld [vmem:[#allocation5 + $0x480] sm:$0xff]
    %v275 = vld [vmem:[#allocation5 + $0x488] sm:$0xff]
    %v276 = vld [vmem:[#allocation5 + $0x490] sm:$0xff]
    %v277 = vld [vmem:[#allocation5 + $0x498] sm:$0xff]
    %v278 = vld [vmem:[#allocation5 + $0x4a0] sm:$0xff]
    %v279 = vld [vmem:[#allocation5 + $0x4a8] sm:$0xff]
    %v280 = vld [vmem:[#allocation5 + $0x4b0] sm:$0xff]
    %v281 = vld [vmem:[#allocation5 + $0x4b8] sm:$0xff]
    %v282 = vld [vmem:[#allocation5 + $0x4c0] sm:$0xff]
    %v283 = vld [vmem:[#allocation5 + $0x4c8] sm:$0xff]
    %v284 = vld [vmem:[#allocation5 + $0x4d0] sm:$0xff]
    %v285 = vld [vmem:[#allocation5 + $0x4d8] sm:$0xff]
    %v286 = vld [vmem:[#allocation5 + $0x4e0] sm:$0xff]
    %v287 = vld [vmem:[#allocation5 + $0x4e8] sm:$0xff]
    %v288 = vld [vmem:[#allocation5 + $0x4f0] sm:$0xff]
    %v289 = vld [vmem:[#allocation5 + $0x4f8] sm:$0xff]
    %v290 = vld [vmem:[#allocation5 + $0x500] sm:$0xff]
    %v291 = vld [vmem:[#allocation5 + $0x508] sm:$0xff]
    %v292 = vld [vmem:[#allocation5 + $0x510] sm:$0xff]
    %v293 = vld [vmem:[#allocation5 + $0x518] sm:$0xff]
    %v294 = vld [vmem:[#allocation5 + $0x520] sm:$0xff]
    %v295 = vld [vmem:[#allocation5 + $0x528] sm:$0xff]
    %v296 = vld [vmem:[#allocation5 + $0x530] sm:$0xff]
    %v297 = vld [vmem:[#allocation5 + $0x538] sm:$0xff]
    %v298 = vld [vmem:[#allocation5 + $0x540] sm:$0xff]
    %v299 = vld [vmem:[#allocation5 + $0x548] sm:$0xff]
    %v300 = vld [vmem:[#allocation5 + $0x550] sm:$0xff]
    %v301 = vld [vmem:[#allocation5 + $0x558] sm:$0xff]
    %v302 = vld [vmem:[#allocation5 + $0x560] sm:$0xff]
    %v303 = vld [vmem:[#allocation5 + $0x568] sm:$0xff]
    %v304 = vld [vmem:[#allocation5 + $0x570] sm:$0xff]
    %v305 = vld [vmem:[#allocation5 + $0x578] sm:$0xff]
    %v306 = vld [vmem:[#allocation5 + $0x580] sm:$0xff]
    %v307 = vld [vmem:[#allocation5 + $0x588] sm:$0xff]
    %v308 = vld [vmem:[#allocation5 + $0x590] sm:$0xff]
    %v309 = vld [vmem:[#allocation5 + $0x598] sm:$0xff]
    %v310 = vld [vmem:[#allocation5 + $0x5a0] sm:$0xff]
    %v311 = vld [vmem:[#allocation5 + $0x5a8] sm:$0xff]
    %v312 = vld [vmem:[#allocation5 + $0x5b0] sm:$0xff]
    %v313 = vld [vmem:[#allocation5 + $0x5b8] sm:$0xff]
    %v314 = vld [vmem:[#allocation5 + $0x5c0] sm:$0xff]
    %v315 = vld [vmem:[#allocation5 + $0x5c8] sm:$0xff]
    %v316 = vld [vmem:[#allocation5 + $0x5d0] sm:$0xff]
    %v317 = vld [vmem:[#allocation5 + $0x5d8] sm:$0xff]
    %v318 = vld [vmem:[#allocation5 + $0x5e0] sm:$0xff]
    %v319 = vld [vmem:[#allocation5 + $0x5e8] sm:$0xff]
    %v320 = vld [vmem:[#allocation5 + $0x5f0] sm:$0xff]
    %v321 = vld [vmem:[#allocation5 + $0x5f8] sm:$0xff]
    %v322 = vld [vmem:[#allocation5 + $0x600] sm:$0xff]
    %v323 = vld [vmem:[#allocation5 + $0x608] sm:$0xff]
    %v324 = vld [vmem:[#allocation5 + $0x610] sm:$0xff]
    %v325 = vld [vmem:[#allocation5 + $0x618] sm:$0xff]
    %v326 = vld [vmem:[#allocation5 + $0x620] sm:$0xff]
    %v327 = vld [vmem:[#allocation5 + $0x628] sm:$0xff]
    %v328 = vld [vmem:[#allocation5 + $0x630] sm:$0xff]
    %v329 = vld [vmem:[#allocation5 + $0x638] sm:$0xff]
    %v330 = vld [vmem:[#allocation5 + $0x640] sm:$0xff]
    %v331 = vld [vmem:[#allocation5 + $0x648] sm:$0xff]
    %v332 = vld [vmem:[#allocation5 + $0x650] sm:$0xff]
    %v333 = vld [vmem:[#allocation5 + $0x658] sm:$0xff]
    %v334 = vld [vmem:[#allocation5 + $0x660] sm:$0xff]
    %v335 = vld [vmem:[#allocation5 + $0x668] sm:$0xff]
    %v336 = vld [vmem:[#allocation5 + $0x670] sm:$0xff]
    %v337 = vld [vmem:[#allocation5 + $0x678] sm:$0xff]
    %v338 = vld [vmem:[#allocation5 + $0x680] sm:$0xff]
    %v339 = vld [vmem:[#allocation5 + $0x688] sm:$0xff]
    %v340 = vld [vmem:[#allocation5 + $0x690] sm:$0xff]
    %v341 = vld [vmem:[#allocation5 + $0x698] sm:$0xff]
    %v342 = vld [vmem:[#allocation5 + $0x6a0] sm:$0xff]
    %v343 = vld [vmem:[#allocation5 + $0x6a8] sm:$0xff]
    %v344 = vld [vmem:[#allocation5 + $0x6b0] sm:$0xff]
    %v345 = vld [vmem:[#allocation5 + $0x6b8] sm:$0xff]
    %v346 = vld [vmem:[#allocation5 + $0x6c0] sm:$0xff]
    %v347 = vld [vmem:[#allocation5 + $0x6c8] sm:$0xff]
    %v348 = vld [vmem:[#allocation5 + $0x6d0] sm:$0xff]
    %v349 = vld [vmem:[#allocation5 + $0x6d8] sm:$0xff]
    %v350 = vld [vmem:[#allocation5 + $0x6e0] sm:$0xff]
    %v351 = vld [vmem:[#allocation5 + $0x6e8] sm:$0xff]
    %v352 = vld [vmem:[#allocation5 + $0x6f0] sm:$0xff]
    %v353 = vld [vmem:[#allocation5 + $0x6f8] sm:$0xff]
    %v354 = vld [vmem:[#allocation5 + $0x700] sm:$0xff]
    %v355 = vld [vmem:[#allocation5 + $0x708] sm:$0xff]
    %v356 = vld [vmem:[#allocation5 + $0x710] sm:$0xff]
    %v357 = vld [vmem:[#allocation5 + $0x718] sm:$0xff]
    %v358 = vld [vmem:[#allocation5 + $0x720] sm:$0xff]
    %v359 = vld [vmem:[#allocation5 + $0x728] sm:$0xff]
    %v360 = vld [vmem:[#allocation5 + $0x730] sm:$0xff]
    %v361 = vld [vmem:[#allocation5 + $0x738] sm:$0xff]
    %v362 = vld [vmem:[#allocation5 + $0x740] sm:$0xff]
    %v363 = vld [vmem:[#allocation5 + $0x748] sm:$0xff]
    %v364 = vld [vmem:[#allocation5 + $0x750] sm:$0xff]
    %v365 = vld [vmem:[#allocation5 + $0x758] sm:$0xff]
    %v366 = vld [vmem:[#allocation5 + $0x760] sm:$0xff]
    %v367 = vld [vmem:[#allocation5 + $0x768] sm:$0xff]
    %v368 = vld [vmem:[#allocation5 + $0x770] sm:$0xff]
    %v369 = vld [vmem:[#allocation5 + $0x778] sm:$0xff]
    %v370 = vld [vmem:[#allocation5 + $0x780] sm:$0xff]
    %v371 = vld [vmem:[#allocation5 + $0x788] sm:$0xff]
    %v372 = vld [vmem:[#allocation5 + $0x790] sm:$0xff]
    %v373 = vld [vmem:[#allocation5 + $0x798] sm:$0xff]
    %v374 = vld [vmem:[#allocation5 + $0x7a0] sm:$0xff]
    %v375 = vld [vmem:[#allocation5 + $0x7a8] sm:$0xff]
    %v376 = vld [vmem:[#allocation5 + $0x7b0] sm:$0xff]
    %v377 = vld [vmem:[#allocation5 + $0x7b8] sm:$0xff]
    %v378 = vld [vmem:[#allocation5 + $0x7c0] sm:$0xff]
    %v379 = vld [vmem:[#allocation5 + $0x7c8] sm:$0xff]
    %v380 = vld [vmem:[#allocation5 + $0x7d0] sm:$0xff]
    %v381 = vld [vmem:[#allocation5 + $0x7d8] sm:$0xff]
    %v382 = vld [vmem:[#allocation5 + $0x7e0] sm:$0xff]
    %v383 = vld [vmem:[#allocation5 + $0x7e8] sm:$0xff]
    %v384 = vld [vmem:[#allocation5 + $0x7f0] sm:$0xff]
    %v385 = vld [vmem:[#allocation5 + $0x7f8] sm:$0xff]
    %v386 = vld [vmem:[#allocation7] sm:$0xf]
    %v388 = vperm.slane %v386, 0
    %v389 = vperm.slane %v386, 1
    %v390 = vperm.slane %v386, 2
    %v391 = vperm.slane %v386, 3
    %v652 = vunpack.c.l.b16 %v130
    %v653 = vunpack.c.h.b16 %v130
    %v654 = vunpack.c.l.b16 %v131
    %v655 = vunpack.c.h.b16 %v131
    %v656 = vunpack.c.l.b16 %v132
    %v657 = vunpack.c.h.b16 %v132
    %v658 = vunpack.c.l.b16 %v133
    %v659 = vunpack.c.h.b16 %v133
    %v660 = vunpack.c.l.b16 %v134
    %v661 = vunpack.c.h.b16 %v134
    %v662 = vunpack.c.l.b16 %v135
    %v663 = vunpack.c.h.b16 %v135
    %v664 = vunpack.c.l.b16 %v136
    %v665 = vunpack.c.h.b16 %v136
    %v666 = vunpack.c.l.b16 %v137
    %v667 = vunpack.c.h.b16 %v137
    %v668 = vunpack.c.l.b16 %v138
    %v669 = vunpack.c.h.b16 %v138
    %v670 = vunpack.c.l.b16 %v139
    %v671 = vunpack.c.h.b16 %v139
    %v672 = vunpack.c.l.b16 %v140
    %v673 = vunpack.c.h.b16 %v140
    %v674 = vunpack.c.l.b16 %v141
    %v675 = vunpack.c.h.b16 %v141
    %v676 = vunpack.c.l.b16 %v142
    %v677 = vunpack.c.h.b16 %v142
    %v678 = vunpack.c.l.b16 %v143
    %v679 = vunpack.c.h.b16 %v143
    %v680 = vunpack.c.l.b16 %v144
    %v681 = vunpack.c.h.b16 %v144
    %v682 = vunpack.c.l.b16 %v145
    %v683 = vunpack.c.h.b16 %v145
    %v684 = vunpack.c.l.b16 %v146
    %v685 = vunpack.c.h.b16 %v146
    %v686 = vunpack.c.l.b16 %v147
    %v687 = vunpack.c.h.b16 %v147
    %v688 = vunpack.c.l.b16 %v148
    %v689 = vunpack.c.h.b16 %v148
    %v690 = vunpack.c.l.b16 %v149
    %v691 = vunpack.c.h.b16 %v149
    %v692 = vunpack.c.l.b16 %v150
    %v693 = vunpack.c.h.b16 %v150
    %v694 = vunpack.c.l.b16 %v151
    %v695 = vunpack.c.h.b16 %v151
    %v696 = vunpack.c.l.b16 %v152
    %v697 = vunpack.c.h.b16 %v152
    %v698 = vunpack.c.l.b16 %v153
    %v699 = vunpack.c.h.b16 %v153
    %v700 = vunpack.c.l.b16 %v154
    %v701 = vunpack.c.h.b16 %v154
    %v702 = vunpack.c.l.b16 %v155
    %v703 = vunpack.c.h.b16 %v155
    %v704 = vunpack.c.l.b16 %v156
    %v705 = vunpack.c.h.b16 %v156
    %v706 = vunpack.c.l.b16 %v157
    %v707 = vunpack.c.h.b16 %v157
    %v708 = vunpack.c.l.b16 %v158
    %v709 = vunpack.c.h.b16 %v158
    %v710 = vunpack.c.l.b16 %v159
    %v711 = vunpack.c.h.b16 %v159
    %v712 = vunpack.c.l.b16 %v160
    %v713 = vunpack.c.h.b16 %v160
    %v714 = vunpack.c.l.b16 %v161
    %v715 = vunpack.c.h.b16 %v161
    %v716 = vunpack.c.l.b16 %v162
    %v717 = vunpack.c.h.b16 %v162
    %v718 = vunpack.c.l.b16 %v163
    %v719 = vunpack.c.h.b16 %v163
    %v720 = vunpack.c.l.b16 %v164
    %v721 = vunpack.c.h.b16 %v164
    %v722 = vunpack.c.l.b16 %v165
    %v723 = vunpack.c.h.b16 %v165
    %v724 = vunpack.c.l.b16 %v166
    %v725 = vunpack.c.h.b16 %v166
    %v726 = vunpack.c.l.b16 %v167
    %v727 = vunpack.c.h.b16 %v167
    %v728 = vunpack.c.l.b16 %v168
    %v729 = vunpack.c.h.b16 %v168
    %v730 = vunpack.c.l.b16 %v169
    %v731 = vunpack.c.h.b16 %v169
    %v732 = vunpack.c.l.b16 %v170
    %v733 = vunpack.c.h.b16 %v170
    %v734 = vunpack.c.l.b16 %v171
    %v735 = vunpack.c.h.b16 %v171
    %v736 = vunpack.c.l.b16 %v172
    %v737 = vunpack.c.h.b16 %v172
    %v738 = vunpack.c.l.b16 %v173
    %v739 = vunpack.c.h.b16 %v173
    %v740 = vunpack.c.l.b16 %v174
    %v741 = vunpack.c.h.b16 %v174
    %v742 = vunpack.c.l.b16 %v175
    %v743 = vunpack.c.h.b16 %v175
    %v744 = vunpack.c.l.b16 %v176
    %v745 = vunpack.c.h.b16 %v176
    %v746 = vunpack.c.l.b16 %v177
    %v747 = vunpack.c.h.b16 %v177
    %v748 = vunpack.c.l.b16 %v178
    %v749 = vunpack.c.h.b16 %v178
    %v750 = vunpack.c.l.b16 %v179
    %v751 = vunpack.c.h.b16 %v179
    %v752 = vunpack.c.l.b16 %v180
    %v753 = vunpack.c.h.b16 %v180
    %v754 = vunpack.c.l.b16 %v181
    %v755 = vunpack.c.h.b16 %v181
    %v756 = vunpack.c.l.b16 %v182
    %v757 = vunpack.c.h.b16 %v182
    %v758 = vunpack.c.l.b16 %v183
    %v759 = vunpack.c.h.b16 %v183
    %v760 = vunpack.c.l.b16 %v184
    %v761 = vunpack.c.h.b16 %v184
    %v762 = vunpack.c.l.b16 %v185
    %v763 = vunpack.c.h.b16 %v185
    %v764 = vunpack.c.l.b16 %v186
    %v765 = vunpack.c.h.b16 %v186
    %v766 = vunpack.c.l.b16 %v187
    %v767 = vunpack.c.h.b16 %v187
    %v768 = vunpack.c.l.b16 %v188
    %v769 = vunpack.c.h.b16 %v188
    %v770 = vunpack.c.l.b16 %v189
    %v771 = vunpack.c.h.b16 %v189
    %v772 = vunpack.c.l.b16 %v190
    %v773 = vunpack.c.h.b16 %v190
    %v774 = vunpack.c.l.b16 %v191
    %v775 = vunpack.c.h.b16 %v191
    %v776 = vunpack.c.l.b16 %v192
    %v777 = vunpack.c.h.b16 %v192
    %v778 = vunpack.c.l.b16 %v193
    %v779 = vunpack.c.h.b16 %v193
    %v780 = vunpack.c.l.b16 %v194
    %v781 = vunpack.c.h.b16 %v194
    %v782 = vunpack.c.l.b16 %v195
    %v783 = vunpack.c.h.b16 %v195
    %v784 = vunpack.c.l.b16 %v196
    %v785 = vunpack.c.h.b16 %v196
    %v786 = vunpack.c.l.b16 %v197
    %v787 = vunpack.c.h.b16 %v197
    %v788 = vunpack.c.l.b16 %v198
    %v789 = vunpack.c.h.b16 %v198
    %v790 = vunpack.c.l.b16 %v199
    %v791 = vunpack.c.h.b16 %v199
    %v792 = vunpack.c.l.b16 %v200
    %v793 = vunpack.c.h.b16 %v200
    %v794 = vunpack.c.l.b16 %v201
    %v795 = vunpack.c.h.b16 %v201
    %v796 = vunpack.c.l.b16 %v202
    %v797 = vunpack.c.h.b16 %v202
    %v798 = vunpack.c.l.b16 %v203
    %v799 = vunpack.c.h.b16 %v203
    %v800 = vunpack.c.l.b16 %v204
    %v801 = vunpack.c.h.b16 %v204
    %v802 = vunpack.c.l.b16 %v205
    %v803 = vunpack.c.h.b16 %v205
    %v804 = vunpack.c.l.b16 %v206
    %v805 = vunpack.c.h.b16 %v206
    %v806 = vunpack.c.l.b16 %v207
    %v807 = vunpack.c.h.b16 %v207
    %v808 = vunpack.c.l.b16 %v208
    %v809 = vunpack.c.h.b16 %v208
    %v810 = vunpack.c.l.b16 %v209
    %v811 = vunpack.c.h.b16 %v209
    %v812 = vunpack.c.l.b16 %v210
    %v813 = vunpack.c.h.b16 %v210
    %v814 = vunpack.c.l.b16 %v211
    %v815 = vunpack.c.h.b16 %v211
    %v816 = vunpack.c.l.b16 %v212
    %v817 = vunpack.c.h.b16 %v212
    %v818 = vunpack.c.l.b16 %v213
    %v819 = vunpack.c.h.b16 %v213
    %v820 = vunpack.c.l.b16 %v214
    %v821 = vunpack.c.h.b16 %v214
    %v822 = vunpack.c.l.b16 %v215
    %v823 = vunpack.c.h.b16 %v215
    %v824 = vunpack.c.l.b16 %v216
    %v825 = vunpack.c.h.b16 %v216
    %v826 = vunpack.c.l.b16 %v217
    %v827 = vunpack.c.h.b16 %v217
    %v828 = vunpack.c.l.b16 %v218
    %v829 = vunpack.c.h.b16 %v218
    %v830 = vunpack.c.l.b16 %v219
    %v831 = vunpack.c.h.b16 %v219
    %v832 = vunpack.c.l.b16 %v220
    %v833 = vunpack.c.h.b16 %v220
    %v834 = vunpack.c.l.b16 %v221
    %v835 = vunpack.c.h.b16 %v221
    %v836 = vunpack.c.l.b16 %v222
    %v837 = vunpack.c.h.b16 %v222
    %v838 = vunpack.c.l.b16 %v223
    %v839 = vunpack.c.h.b16 %v223
    %v840 = vunpack.c.l.b16 %v224
    %v841 = vunpack.c.h.b16 %v224
    %v842 = vunpack.c.l.b16 %v225
    %v843 = vunpack.c.h.b16 %v225
    %v844 = vunpack.c.l.b16 %v226
    %v845 = vunpack.c.h.b16 %v226
    %v846 = vunpack.c.l.b16 %v227
    %v847 = vunpack.c.h.b16 %v227
    %v848 = vunpack.c.l.b16 %v228
    %v849 = vunpack.c.h.b16 %v228
    %v850 = vunpack.c.l.b16 %v229
    %v851 = vunpack.c.h.b16 %v229
    %v852 = vunpack.c.l.b16 %v230
    %v853 = vunpack.c.h.b16 %v230
    %v854 = vunpack.c.l.b16 %v231
    %v855 = vunpack.c.h.b16 %v231
    %v856 = vunpack.c.l.b16 %v232
    %v857 = vunpack.c.h.b16 %v232
    %v858 = vunpack.c.l.b16 %v233
    %v859 = vunpack.c.h.b16 %v233
    %v860 = vunpack.c.l.b16 %v234
    %v861 = vunpack.c.h.b16 %v234
    %v862 = vunpack.c.l.b16 %v235
    %v863 = vunpack.c.h.b16 %v235
    %v864 = vunpack.c.l.b16 %v236
    %v865 = vunpack.c.h.b16 %v236
    %v866 = vunpack.c.l.b16 %v237
    %v867 = vunpack.c.h.b16 %v237
    %v868 = vunpack.c.l.b16 %v238
    %v869 = vunpack.c.h.b16 %v238
    %v870 = vunpack.c.l.b16 %v239
    %v871 = vunpack.c.h.b16 %v239
    %v872 = vunpack.c.l.b16 %v240
    %v873 = vunpack.c.h.b16 %v240
    %v874 = vunpack.c.l.b16 %v241
    %v875 = vunpack.c.h.b16 %v241
    %v876 = vunpack.c.l.b16 %v242
    %v877 = vunpack.c.h.b16 %v242
    %v878 = vunpack.c.l.b16 %v243
    %v879 = vunpack.c.h.b16 %v243
    %v880 = vunpack.c.l.b16 %v244
    %v881 = vunpack.c.h.b16 %v244
    %v882 = vunpack.c.l.b16 %v245
    %v883 = vunpack.c.h.b16 %v245
    %v884 = vunpack.c.l.b16 %v246
    %v885 = vunpack.c.h.b16 %v246
    %v886 = vunpack.c.l.b16 %v247
    %v887 = vunpack.c.h.b16 %v247
    %v888 = vunpack.c.l.b16 %v248
    %v889 = vunpack.c.h.b16 %v248
    %v890 = vunpack.c.l.b16 %v249
    %v891 = vunpack.c.h.b16 %v249
    %v892 = vunpack.c.l.b16 %v250
    %v893 = vunpack.c.h.b16 %v250
    %v894 = vunpack.c.l.b16 %v251
    %v895 = vunpack.c.h.b16 %v251
    %v896 = vunpack.c.l.b16 %v252
    %v897 = vunpack.c.h.b16 %v252
    %v898 = vunpack.c.l.b16 %v253
    %v899 = vunpack.c.h.b16 %v253
    %v900 = vunpack.c.l.b16 %v254
    %v901 = vunpack.c.h.b16 %v254
    %v902 = vunpack.c.l.b16 %v255
    %v903 = vunpack.c.h.b16 %v255
    %v904 = vunpack.c.l.b16 %v256
    %v905 = vunpack.c.h.b16 %v256
    %v906 = vunpack.c.l.b16 %v257
    %v907 = vunpack.c.h.b16 %v257
    %v908 = vunpack.c.l.b16 %v258
    %v909 = vunpack.c.h.b16 %v258
    %v910 = vunpack.c.l.b16 %v259
    %v911 = vunpack.c.h.b16 %v259
    %v912 = vunpack.c.l.b16 %v260
    %v913 = vunpack.c.h.b16 %v260
    %v914 = vunpack.c.l.b16 %v261
    %v915 = vunpack.c.h.b16 %v261
    %v916 = vunpack.c.l.b16 %v262
    %v917 = vunpack.c.h.b16 %v262
    %v918 = vunpack.c.l.b16 %v263
    %v919 = vunpack.c.h.b16 %v263
    %v920 = vunpack.c.l.b16 %v264
    %v921 = vunpack.c.h.b16 %v264
    %v922 = vunpack.c.l.b16 %v265
    %v923 = vunpack.c.h.b16 %v265
    %v924 = vunpack.c.l.b16 %v266
    %v925 = vunpack.c.h.b16 %v266
    %v926 = vunpack.c.l.b16 %v267
    %v927 = vunpack.c.h.b16 %v267
    %v928 = vunpack.c.l.b16 %v268
    %v929 = vunpack.c.h.b16 %v268
    %v930 = vunpack.c.l.b16 %v269
    %v931 = vunpack.c.h.b16 %v269
    %v932 = vunpack.c.l.b16 %v270
    %v933 = vunpack.c.h.b16 %v270
    %v934 = vunpack.c.l.b16 %v271
    %v935 = vunpack.c.h.b16 %v271
    %v936 = vunpack.c.l.b16 %v272
    %v937 = vunpack.c.h.b16 %v272
    %v938 = vunpack.c.l.b16 %v273
    %v939 = vunpack.c.h.b16 %v273
    %v940 = vunpack.c.l.b16 %v274
    %v941 = vunpack.c.h.b16 %v274
    %v942 = vunpack.c.l.b16 %v275
    %v943 = vunpack.c.h.b16 %v275
    %v944 = vunpack.c.l.b16 %v276
    %v945 = vunpack.c.h.b16 %v276
    %v946 = vunpack.c.l.b16 %v277
    %v947 = vunpack.c.h.b16 %v277
    %v948 = vunpack.c.l.b16 %v278
    %v949 = vunpack.c.h.b16 %v278
    %v950 = vunpack.c.l.b16 %v279
    %v951 = vunpack.c.h.b16 %v279
    %v952 = vunpack.c.l.b16 %v280
    %v953 = vunpack.c.h.b16 %v280
    %v954 = vunpack.c.l.b16 %v281
    %v955 = vunpack.c.h.b16 %v281
    %v956 = vunpack.c.l.b16 %v282
    %v957 = vunpack.c.h.b16 %v282
    %v958 = vunpack.c.l.b16 %v283
    %v959 = vunpack.c.h.b16 %v283
    %v960 = vunpack.c.l.b16 %v284
    %v961 = vunpack.c.h.b16 %v284
    %v962 = vunpack.c.l.b16 %v285
    %v963 = vunpack.c.h.b16 %v285
    %v964 = vunpack.c.l.b16 %v286
    %v965 = vunpack.c.h.b16 %v286
    %v966 = vunpack.c.l.b16 %v287
    %v967 = vunpack.c.h.b16 %v287
    %v968 = vunpack.c.l.b16 %v288
    %v969 = vunpack.c.h.b16 %v288
    %v970 = vunpack.c.l.b16 %v289
    %v971 = vunpack.c.h.b16 %v289
    %v972 = vunpack.c.l.b16 %v290
    %v973 = vunpack.c.h.b16 %v290
    %v974 = vunpack.c.l.b16 %v291
    %v975 = vunpack.c.h.b16 %v291
    %v976 = vunpack.c.l.b16 %v292
    %v977 = vunpack.c.h.b16 %v292
    %v978 = vunpack.c.l.b16 %v293
    %v979 = vunpack.c.h.b16 %v293
    %v980 = vunpack.c.l.b16 %v294
    %v981 = vunpack.c.h.b16 %v294
    %v982 = vunpack.c.l.b16 %v295
    %v983 = vunpack.c.h.b16 %v295
    %v984 = vunpack.c.l.b16 %v296
    %v985 = vunpack.c.h.b16 %v296
    %v986 = vunpack.c.l.b16 %v297
    %v987 = vunpack.c.h.b16 %v297
    %v988 = vunpack.c.l.b16 %v298
    %v989 = vunpack.c.h.b16 %v298
    %v990 = vunpack.c.l.b16 %v299
    %v991 = vunpack.c.h.b16 %v299
    %v992 = vunpack.c.l.b16 %v300
    %v993 = vunpack.c.h.b16 %v300
    %v994 = vunpack.c.l.b16 %v301
    %v995 = vunpack.c.h.b16 %v301
    %v996 = vunpack.c.l.b16 %v302
    %v997 = vunpack.c.h.b16 %v302
    %v998 = vunpack.c.l.b16 %v303
    %v999 = vunpack.c.h.b16 %v303
    %v1000 = vunpack.c.l.b16 %v304
    %v1001 = vunpack.c.h.b16 %v304
    %v1002 = vunpack.c.l.b16 %v305
    %v1003 = vunpack.c.h.b16 %v305
    %v1004 = vunpack.c.l.b16 %v306
    %v1005 = vunpack.c.h.b16 %v306
    %v1006 = vunpack.c.l.b16 %v307
    %v1007 = vunpack.c.h.b16 %v307
    %v1008 = vunpack.c.l.b16 %v308
    %v1009 = vunpack.c.h.b16 %v308
    %v1010 = vunpack.c.l.b16 %v309
    %v1011 = vunpack.c.h.b16 %v309
    %v1012 = vunpack.c.l.b16 %v310
    %v1013 = vunpack.c.h.b16 %v310
    %v1014 = vunpack.c.l.b16 %v311
    %v1015 = vunpack.c.h.b16 %v311
    %v1016 = vunpack.c.l.b16 %v312
    %v1017 = vunpack.c.h.b16 %v312
    %v1018 = vunpack.c.l.b16 %v313
    %v1019 = vunpack.c.h.b16 %v313
    %v1020 = vunpack.c.l.b16 %v314
    %v1021 = vunpack.c.h.b16 %v314
    %v1022 = vunpack.c.l.b16 %v315
    %v1023 = vunpack.c.h.b16 %v315
    %v1024 = vunpack.c.l.b16 %v316
    %v1025 = vunpack.c.h.b16 %v316
    %v1026 = vunpack.c.l.b16 %v317
    %v1027 = vunpack.c.h.b16 %v317
    %v1028 = vunpack.c.l.b16 %v318
    %v1029 = vunpack.c.h.b16 %v318
    %v1030 = vunpack.c.l.b16 %v319
    %v1031 = vunpack.c.h.b16 %v319
    %v1032 = vunpack.c.l.b16 %v320
    %v1033 = vunpack.c.h.b16 %v320
    %v1034 = vunpack.c.l.b16 %v321
    %v1035 = vunpack.c.h.b16 %v321
    %v1036 = vunpack.c.l.b16 %v322
    %v1037 = vunpack.c.h.b16 %v322
    %v1038 = vunpack.c.l.b16 %v323
    %v1039 = vunpack.c.h.b16 %v323
    %v1040 = vunpack.c.l.b16 %v324
    %v1041 = vunpack.c.h.b16 %v324
    %v1042 = vunpack.c.l.b16 %v325
    %v1043 = vunpack.c.h.b16 %v325
    %v1044 = vunpack.c.l.b16 %v326
    %v1045 = vunpack.c.h.b16 %v326
    %v1046 = vunpack.c.l.b16 %v327
    %v1047 = vunpack.c.h.b16 %v327
    %v1048 = vunpack.c.l.b16 %v328
    %v1049 = vunpack.c.h.b16 %v328
    %v1050 = vunpack.c.l.b16 %v329
    %v1051 = vunpack.c.h.b16 %v329
    %v1052 = vunpack.c.l.b16 %v330
    %v1053 = vunpack.c.h.b16 %v330
    %v1054 = vunpack.c.l.b16 %v331
    %v1055 = vunpack.c.h.b16 %v331
    %v1056 = vunpack.c.l.b16 %v332
    %v1057 = vunpack.c.h.b16 %v332
    %v1058 = vunpack.c.l.b16 %v333
    %v1059 = vunpack.c.h.b16 %v333
    %v1060 = vunpack.c.l.b16 %v334
    %v1061 = vunpack.c.h.b16 %v334
    %v1062 = vunpack.c.l.b16 %v335
    %v1063 = vunpack.c.h.b16 %v335
    %v1064 = vunpack.c.l.b16 %v336
    %v1065 = vunpack.c.h.b16 %v336
    %v1066 = vunpack.c.l.b16 %v337
    %v1067 = vunpack.c.h.b16 %v337
    %v1068 = vunpack.c.l.b16 %v338
    %v1069 = vunpack.c.h.b16 %v338
    %v1070 = vunpack.c.l.b16 %v339
    %v1071 = vunpack.c.h.b16 %v339
    %v1072 = vunpack.c.l.b16 %v340
    %v1073 = vunpack.c.h.b16 %v340
    %v1074 = vunpack.c.l.b16 %v341
    %v1075 = vunpack.c.h.b16 %v341
    %v1076 = vunpack.c.l.b16 %v342
    %v1077 = vunpack.c.h.b16 %v342
    %v1078 = vunpack.c.l.b16 %v343
    %v1079 = vunpack.c.h.b16 %v343
    %v1080 = vunpack.c.l.b16 %v344
    %v1081 = vunpack.c.h.b16 %v344
    %v1082 = vunpack.c.l.b16 %v345
    %v1083 = vunpack.c.h.b16 %v345
    %v1084 = vunpack.c.l.b16 %v346
    %v1085 = vunpack.c.h.b16 %v346
    %v1086 = vunpack.c.l.b16 %v347
    %v1087 = vunpack.c.h.b16 %v347
    %v1088 = vunpack.c.l.b16 %v348
    %v1089 = vunpack.c.h.b16 %v348
    %v1090 = vunpack.c.l.b16 %v349
    %v1091 = vunpack.c.h.b16 %v349
    %v1092 = vunpack.c.l.b16 %v350
    %v1093 = vunpack.c.h.b16 %v350
    %v1094 = vunpack.c.l.b16 %v351
    %v1095 = vunpack.c.h.b16 %v351
    %v1096 = vunpack.c.l.b16 %v352
    %v1097 = vunpack.c.h.b16 %v352
    %v1098 = vunpack.c.l.b16 %v353
    %v1099 = vunpack.c.h.b16 %v353
    %v1100 = vunpack.c.l.b16 %v354
    %v1101 = vunpack.c.h.b16 %v354
    %v1102 = vunpack.c.l.b16 %v355
    %v1103 = vunpack.c.h.b16 %v355
    %v1104 = vunpack.c.l.b16 %v356
    %v1105 = vunpack.c.h.b16 %v356
    %v1106 = vunpack.c.l.b16 %v357
    %v1107 = vunpack.c.h.b16 %v357
    %v1108 = vunpack.c.l.b16 %v358
    %v1109 = vunpack.c.h.b16 %v358
    %v1110 = vunpack.c.l.b16 %v359
    %v1111 = vunpack.c.h.b16 %v359
    %v1112 = vunpack.c.l.b16 %v360
    %v1113 = vunpack.c.h.b16 %v360
    %v1114 = vunpack.c.l.b16 %v361
    %v1115 = vunpack.c.h.b16 %v361
    %v1116 = vunpack.c.l.b16 %v362
    %v1117 = vunpack.c.h.b16 %v362
    %v1118 = vunpack.c.l.b16 %v363
    %v1119 = vunpack.c.h.b16 %v363
    %v1120 = vunpack.c.l.b16 %v364
    %v1121 = vunpack.c.h.b16 %v364
    %v1122 = vunpack.c.l.b16 %v365
    %v1123 = vunpack.c.h.b16 %v365
    %v1124 = vunpack.c.l.b16 %v366
    %v1125 = vunpack.c.h.b16 %v366
    %v1126 = vunpack.c.l.b16 %v367
    %v1127 = vunpack.c.h.b16 %v367
    %v1128 = vunpack.c.l.b16 %v368
    %v1129 = vunpack.c.h.b16 %v368
    %v1130 = vunpack.c.l.b16 %v369
    %v1131 = vunpack.c.h.b16 %v369
    %v1132 = vunpack.c.l.b16 %v370
    %v1133 = vunpack.c.h.b16 %v370
    %v1134 = vunpack.c.l.b16 %v371
    %v1135 = vunpack.c.h.b16 %v371
    %v1136 = vunpack.c.l.b16 %v372
    %v1137 = vunpack.c.h.b16 %v372
    %v1138 = vunpack.c.l.b16 %v373
    %v1139 = vunpack.c.h.b16 %v373
    %v1140 = vunpack.c.l.b16 %v374
    %v1141 = vunpack.c.h.b16 %v374
    %v1142 = vunpack.c.l.b16 %v375
    %v1143 = vunpack.c.h.b16 %v375
    %v1144 = vunpack.c.l.b16 %v376
    %v1145 = vunpack.c.h.b16 %v376
    %v1146 = vunpack.c.l.b16 %v377
    %v1147 = vunpack.c.h.b16 %v377
    %v1148 = vunpack.c.l.b16 %v378
    %v1149 = vunpack.c.h.b16 %v378
    %v1150 = vunpack.c.l.b16 %v379
    %v1151 = vunpack.c.h.b16 %v379
    %v1152 = vunpack.c.l.b16 %v380
    %v1153 = vunpack.c.h.b16 %v380
    %v1154 = vunpack.c.l.b16 %v381
    %v1155 = vunpack.c.h.b16 %v381
    %v1156 = vunpack.c.l.b16 %v382
    %v1157 = vunpack.c.h.b16 %v382
    %v1158 = vunpack.c.l.b16 %v383
    %v1159 = vunpack.c.h.b16 %v383
    %v1160 = vunpack.c.l.b16 %v384
    %v1161 = vunpack.c.h.b16 %v384
    %v1162 = vunpack.c.l.b16 %v385
    %v1163 = vunpack.c.h.b16 %v385
    %v1164 = vpack.c.b16 %v656, %v652
    %v1165 = vpack.c.b16 %v657, %v653
    %v1166 = vpack.c.b16 %v658, %v654
    %v1167 = vpack.c.b16 %v659, %v655
    %v1168 = vpack.c.b16 %v664, %v660
    %v1169 = vpack.c.b16 %v665, %v661
    %v1170 = vpack.c.b16 %v666, %v662
    %v1171 = vpack.c.b16 %v667, %v663
    %v1172 = vpack.c.b16 %v672, %v668
    %v1173 = vpack.c.b16 %v673, %v669
    %v1174 = vpack.c.b16 %v674, %v670
    %v1175 = vpack.c.b16 %v675, %v671
    %v1176 = vpack.c.b16 %v680, %v676
    %v1177 = vpack.c.b16 %v681, %v677
    %v1178 = vpack.c.b16 %v682, %v678
    %v1179 = vpack.c.b16 %v683, %v679
    %v1180 = vpack.c.b16 %v688, %v684
    %v1181 = vpack.c.b16 %v689, %v685
    %v1182 = vpack.c.b16 %v690, %v686
    %v1183 = vpack.c.b16 %v691, %v687
    %v1184 = vpack.c.b16 %v696, %v692
    %v1185 = vpack.c.b16 %v697, %v693
    %v1186 = vpack.c.b16 %v698, %v694
    %v1187 = vpack.c.b16 %v699, %v695
    %v1188 = vpack.c.b16 %v704, %v700
    %v1189 = vpack.c.b16 %v705, %v701
    %v1190 = vpack.c.b16 %v706, %v702
    %v1191 = vpack.c.b16 %v707, %v703
    %v1192 = vpack.c.b16 %v712, %v708
    %v1193 = vpack.c.b16 %v713, %v709
    %v1194 = vpack.c.b16 %v714, %v710
    %v1195 = vpack.c.b16 %v715, %v711
    %v1196 = vpack.c.b16 %v720, %v716
    %v1197 = vpack.c.b16 %v721, %v717
    %v1198 = vpack.c.b16 %v722, %v718
    %v1199 = vpack.c.b16 %v723, %v719
    %v1200 = vpack.c.b16 %v728, %v724
    %v1201 = vpack.c.b16 %v729, %v725
    %v1202 = vpack.c.b16 %v730, %v726
    %v1203 = vpack.c.b16 %v731, %v727
    %v1204 = vpack.c.b16 %v736, %v732
    %v1205 = vpack.c.b16 %v737, %v733
    %v1206 = vpack.c.b16 %v738, %v734
    %v1207 = vpack.c.b16 %v739, %v735
    %v1208 = vpack.c.b16 %v744, %v740
    %v1209 = vpack.c.b16 %v745, %v741
    %v1210 = vpack.c.b16 %v746, %v742
    %v1211 = vpack.c.b16 %v747, %v743
    %v1212 = vpack.c.b16 %v752, %v748
    %v1213 = vpack.c.b16 %v753, %v749
    %v1214 = vpack.c.b16 %v754, %v750
    %v1215 = vpack.c.b16 %v755, %v751
    %v1216 = vpack.c.b16 %v760, %v756
    %v1217 = vpack.c.b16 %v761, %v757
    %v1218 = vpack.c.b16 %v762, %v758
    %v1219 = vpack.c.b16 %v763, %v759
    %v1220 = vpack.c.b16 %v768, %v764
    %v1221 = vpack.c.b16 %v769, %v765
    %v1222 = vpack.c.b16 %v770, %v766
    %v1223 = vpack.c.b16 %v771, %v767
    %v1224 = vpack.c.b16 %v776, %v772
    %v1225 = vpack.c.b16 %v777, %v773
    %v1226 = vpack.c.b16 %v778, %v774
    %v1227 = vpack.c.b16 %v779, %v775
    %v1228 = vpack.c.b16 %v784, %v780
    %v1229 = vpack.c.b16 %v785, %v781
    %v1230 = vpack.c.b16 %v786, %v782
    %v1231 = vpack.c.b16 %v787, %v783
    %v1232 = vpack.c.b16 %v792, %v788
    %v1233 = vpack.c.b16 %v793, %v789
    %v1234 = vpack.c.b16 %v794, %v790
    %v1235 = vpack.c.b16 %v795, %v791
    %v1236 = vpack.c.b16 %v800, %v796
    %v1237 = vpack.c.b16 %v801, %v797
    %v1238 = vpack.c.b16 %v802, %v798
    %v1239 = vpack.c.b16 %v803, %v799
    %v1240 = vpack.c.b16 %v808, %v804
    %v1241 = vpack.c.b16 %v809, %v805
    %v1242 = vpack.c.b16 %v810, %v806
    %v1243 = vpack.c.b16 %v811, %v807
    %v1244 = vpack.c.b16 %v816, %v812
    %v1245 = vpack.c.b16 %v817, %v813
    %v1246 = vpack.c.b16 %v818, %v814
    %v1247 = vpack.c.b16 %v819, %v815
    %v1248 = vpack.c.b16 %v824, %v820
    %v1249 = vpack.c.b16 %v825, %v821
    %v1250 = vpack.c.b16 %v826, %v822
    %v1251 = vpack.c.b16 %v827, %v823
    %v1252 = vpack.c.b16 %v832, %v828
    %v1253 = vpack.c.b16 %v833, %v829
    %v1254 = vpack.c.b16 %v834, %v830
    %v1255 = vpack.c.b16 %v835, %v831
    %v1256 = vpack.c.b16 %v840, %v836
    %v1257 = vpack.c.b16 %v841, %v837
    %v1258 = vpack.c.b16 %v842, %v838
    %v1259 = vpack.c.b16 %v843, %v839
    %v1260 = vpack.c.b16 %v848, %v844
    %v1261 = vpack.c.b16 %v849, %v845
    %v1262 = vpack.c.b16 %v850, %v846
    %v1263 = vpack.c.b16 %v851, %v847
    %v1264 = vpack.c.b16 %v856, %v852
    %v1265 = vpack.c.b16 %v857, %v853
    %v1266 = vpack.c.b16 %v858, %v854
    %v1267 = vpack.c.b16 %v859, %v855
    %v1268 = vpack.c.b16 %v864, %v860
    %v1269 = vpack.c.b16 %v865, %v861
    %v1270 = vpack.c.b16 %v866, %v862
    %v1271 = vpack.c.b16 %v867, %v863
    %v1272 = vpack.c.b16 %v872, %v868
    %v1273 = vpack.c.b16 %v873, %v869
    %v1274 = vpack.c.b16 %v874, %v870
    %v1275 = vpack.c.b16 %v875, %v871
    %v1276 = vpack.c.b16 %v880, %v876
    %v1277 = vpack.c.b16 %v881, %v877
    %v1278 = vpack.c.b16 %v882, %v878
    %v1279 = vpack.c.b16 %v883, %v879
    %v1280 = vpack.c.b16 %v888, %v884
    %v1281 = vpack.c.b16 %v889, %v885
    %v1282 = vpack.c.b16 %v890, %v886
    %v1283 = vpack.c.b16 %v891, %v887
    %v1284 = vpack.c.b16 %v896, %v892
    %v1285 = vpack.c.b16 %v897, %v893
    %v1286 = vpack.c.b16 %v898, %v894
    %v1287 = vpack.c.b16 %v899, %v895
    %v1288 = vpack.c.b16 %v904, %v900
    %v1289 = vpack.c.b16 %v905, %v901
    %v1290 = vpack.c.b16 %v906, %v902
    %v1291 = vpack.c.b16 %v907, %v903
    %v1292 = vpack.c.b16 %v912, %v908
    %v1293 = vpack.c.b16 %v913, %v909
    %v1294 = vpack.c.b16 %v914, %v910
    %v1295 = vpack.c.b16 %v915, %v911
    %v1296 = vpack.c.b16 %v920, %v916
    %v1297 = vpack.c.b16 %v921, %v917
    %v1298 = vpack.c.b16 %v922, %v918
    %v1299 = vpack.c.b16 %v923, %v919
    %v1300 = vpack.c.b16 %v928, %v924
    %v1301 = vpack.c.b16 %v929, %v925
    %v1302 = vpack.c.b16 %v930, %v926
    %v1303 = vpack.c.b16 %v931, %v927
    %v1304 = vpack.c.b16 %v936, %v932
    %v1305 = vpack.c.b16 %v937, %v933
    %v1306 = vpack.c.b16 %v938, %v934
    %v1307 = vpack.c.b16 %v939, %v935
    %v1308 = vpack.c.b16 %v944, %v940
    %v1309 = vpack.c.b16 %v945, %v941
    %v1310 = vpack.c.b16 %v946, %v942
    %v1311 = vpack.c.b16 %v947, %v943
    %v1312 = vpack.c.b16 %v952, %v948
    %v1313 = vpack.c.b16 %v953, %v949
    %v1314 = vpack.c.b16 %v954, %v950
    %v1315 = vpack.c.b16 %v955, %v951
    %v1316 = vpack.c.b16 %v960, %v956
    %v1317 = vpack.c.b16 %v961, %v957
    %v1318 = vpack.c.b16 %v962, %v958
    %v1319 = vpack.c.b16 %v963, %v959
    %v1320 = vpack.c.b16 %v968, %v964
    %v1321 = vpack.c.b16 %v969, %v965
    %v1322 = vpack.c.b16 %v970, %v966
    %v1323 = vpack.c.b16 %v971, %v967
    %v1324 = vpack.c.b16 %v976, %v972
    %v1325 = vpack.c.b16 %v977, %v973
    %v1326 = vpack.c.b16 %v978, %v974
    %v1327 = vpack.c.b16 %v979, %v975
    %v1328 = vpack.c.b16 %v984, %v980
    %v1329 = vpack.c.b16 %v985, %v981
    %v1330 = vpack.c.b16 %v986, %v982
    %v1331 = vpack.c.b16 %v987, %v983
    %v1332 = vpack.c.b16 %v992, %v988
    %v1333 = vpack.c.b16 %v993, %v989
    %v1334 = vpack.c.b16 %v994, %v990
    %v1335 = vpack.c.b16 %v995, %v991
    %v1336 = vpack.c.b16 %v1000, %v996
    %v1337 = vpack.c.b16 %v1001, %v997
    %v1338 = vpack.c.b16 %v1002, %v998
    %v1339 = vpack.c.b16 %v1003, %v999
    %v1340 = vpack.c.b16 %v1008, %v1004
    %v1341 = vpack.c.b16 %v1009, %v1005
    %v1342 = vpack.c.b16 %v1010, %v1006
    %v1343 = vpack.c.b16 %v1011, %v1007
    %v1344 = vpack.c.b16 %v1016, %v1012
    %v1345 = vpack.c.b16 %v1017, %v1013
    %v1346 = vpack.c.b16 %v1018, %v1014
    %v1347 = vpack.c.b16 %v1019, %v1015
    %v1348 = vpack.c.b16 %v1024, %v1020
    %v1349 = vpack.c.b16 %v1025, %v1021
    %v1350 = vpack.c.b16 %v1026, %v1022
    %v1351 = vpack.c.b16 %v1027, %v1023
    %v1352 = vpack.c.b16 %v1032, %v1028
    %v1353 = vpack.c.b16 %v1033, %v1029
    %v1354 = vpack.c.b16 %v1034, %v1030
    %v1355 = vpack.c.b16 %v1035, %v1031
    %v1356 = vpack.c.b16 %v1040, %v1036
    %v1357 = vpack.c.b16 %v1041, %v1037
    %v1358 = vpack.c.b16 %v1042, %v1038
    %v1359 = vpack.c.b16 %v1043, %v1039
    %v1360 = vpack.c.b16 %v1048, %v1044
    %v1361 = vpack.c.b16 %v1049, %v1045
    %v1362 = vpack.c.b16 %v1050, %v1046
    %v1363 = vpack.c.b16 %v1051, %v1047
    %v1364 = vpack.c.b16 %v1056, %v1052
    %v1365 = vpack.c.b16 %v1057, %v1053
    %v1366 = vpack.c.b16 %v1058, %v1054
    %v1367 = vpack.c.b16 %v1059, %v1055
    %v1368 = vpack.c.b16 %v1064, %v1060
    %v1369 = vpack.c.b16 %v1065, %v1061
    %v1370 = vpack.c.b16 %v1066, %v1062
    %v1371 = vpack.c.b16 %v1067, %v1063
    %v1372 = vpack.c.b16 %v1072, %v1068
    %v1373 = vpack.c.b16 %v1073, %v1069
    %v1374 = vpack.c.b16 %v1074, %v1070
    %v1375 = vpack.c.b16 %v1075, %v1071
    %v1376 = vpack.c.b16 %v1080, %v1076
    %v1377 = vpack.c.b16 %v1081, %v1077
    %v1378 = vpack.c.b16 %v1082, %v1078
    %v1379 = vpack.c.b16 %v1083, %v1079
    %v1380 = vpack.c.b16 %v1088, %v1084
    %v1381 = vpack.c.b16 %v1089, %v1085
    %v1382 = vpack.c.b16 %v1090, %v1086
    %v1383 = vpack.c.b16 %v1091, %v1087
    %v1384 = vpack.c.b16 %v1096, %v1092
    %v1385 = vpack.c.b16 %v1097, %v1093
    %v1386 = vpack.c.b16 %v1098, %v1094
    %v1387 = vpack.c.b16 %v1099, %v1095
    %v1388 = vpack.c.b16 %v1104, %v1100
    %v1389 = vpack.c.b16 %v1105, %v1101
    %v1390 = vpack.c.b16 %v1106, %v1102
    %v1391 = vpack.c.b16 %v1107, %v1103
    %v1392 = vpack.c.b16 %v1112, %v1108
    %v1393 = vpack.c.b16 %v1113, %v1109
    %v1394 = vpack.c.b16 %v1114, %v1110
    %v1395 = vpack.c.b16 %v1115, %v1111
    %v1396 = vpack.c.b16 %v1120, %v1116
    %v1397 = vpack.c.b16 %v1121, %v1117
    %v1398 = vpack.c.b16 %v1122, %v1118
    %v1399 = vpack.c.b16 %v1123, %v1119
    %v1400 = vpack.c.b16 %v1128, %v1124
    %v1401 = vpack.c.b16 %v1129, %v1125
    %v1402 = vpack.c.b16 %v1130, %v1126
    %v1403 = vpack.c.b16 %v1131, %v1127
    %v1404 = vpack.c.b16 %v1136, %v1132
    %v1405 = vpack.c.b16 %v1137, %v1133
    %v1406 = vpack.c.b16 %v1138, %v1134
    %v1407 = vpack.c.b16 %v1139, %v1135
    %v1408 = vpack.c.b16 %v1144, %v1140
    %v1409 = vpack.c.b16 %v1145, %v1141
    %v1410 = vpack.c.b16 %v1146, %v1142
    %v1411 = vpack.c.b16 %v1147, %v1143
    %v1412 = vpack.c.b16 %v1152, %v1148
    %v1413 = vpack.c.b16 %v1153, %v1149
    %v1414 = vpack.c.b16 %v1154, %v1150
    %v1415 = vpack.c.b16 %v1155, %v1151
    %v1416 = vpack.c.b16 %v1160, %v1156
    %v1417 = vpack.c.b16 %v1161, %v1157
    %v1418 = vpack.c.b16 %v1162, %v1158
    %v1419 = vpack.c.b16 %v1163, %v1159
    %1676 = vmatpush.bf16.msra.mxu0 %v1192
    %1677 = vmatpush.bf16.msra.mxu0 %v1188
    %1678 = vmatpush.bf16.msra.mxu0 %v1184
    %1679 = vmatpush.bf16.msra.mxu0 %v1180
    %1680 = vmatpush.bf16.msra.mxu0 %v1176
    %1681 = vmatpush.bf16.msra.mxu0 %v1172
    %1682 = vmatpush.bf16.msra.mxu0 %v1168
    %1683 = vmatpush.bf16.msra.mxu0 %v1164
    %1684 = vmatmul.bf16.gmra.mxu0 %v122
    %v1685 = vpop.f32.mrf.mxu0
    %v1686 = vadd.f32 %v388, %v1685
    %v1687 = vpop.f32.mrf.mxu0
    %v1688 = vadd.f32 %v388, %v1687
    %1689 = vdwg.mxu0
    %1690 = vmatpush.bf16.msra.mxu0 %v1224
    %1691 = vmatpush.bf16.msra.mxu0 %v1220
    %1692 = vmatpush.bf16.msra.mxu0 %v1216
    %1693 = vmatpush.bf16.msra.mxu0 %v1212
    %1694 = vmatpush.bf16.msra.mxu0 %v1208
    %1695 = vmatpush.bf16.msra.mxu0 %v1204
    %1696 = vmatpush.bf16.msra.mxu0 %v1200
    %1697 = vmatpush.bf16.msra.mxu0 %v1196
    %1698 = vmatmul.bf16.gmra.mxu0 %v123
    %v1699 = vpop.f32.mrf.mxu0
    %v1700 = vadd.f32 %v1686, %v1699
    %v1701 = vpop.f32.mrf.mxu0
    %v1702 = vadd.f32 %v1688, %v1701
    %1703 = vdwg.mxu0
    %1704 = vmatpush.bf16.msra.mxu0 %v1256
    %1705 = vmatpush.bf16.msra.mxu0 %v1252
    %1706 = vmatpush.bf16.msra.mxu0 %v1248
    %1707 = vmatpush.bf16.msra.mxu0 %v1244
    %1708 = vmatpush.bf16.msra.mxu0 %v1240
    %1709 = vmatpush.bf16.msra.mxu0 %v1236
    %1710 = vmatpush.bf16.msra.mxu0 %v1232
    %1711 = vmatpush.bf16.msra.mxu0 %v1228
    %1712 = vmatmul.bf16.gmra.mxu0 %v124
    %v1713 = vpop.f32.mrf.mxu0
    %v1714 = vadd.f32 %v1700, %v1713
    %v1715 = vpop.f32.mrf.mxu0
    %v1716 = vadd.f32 %v1702, %v1715
    %1717 = vdwg.mxu0
    %1718 = vmatpush.bf16.msra.mxu0 %v1288
    %1719 = vmatpush.bf16.msra.mxu0 %v1284
    %1720 = vmatpush.bf16.msra.mxu0 %v1280
    %1721 = vmatpush.bf16.msra.mxu0 %v1276
    %1722 = vmatpush.bf16.msra.mxu0 %v1272
    %1723 = vmatpush.bf16.msra.mxu0 %v1268
    %1724 = vmatpush.bf16.msra.mxu0 %v1264
    %1725 = vmatpush.bf16.msra.mxu0 %v1260
    %1726 = vmatmul.bf16.gmra.mxu0 %v125
    %v1727 = vpop.f32.mrf.mxu0
    %v1728 = vadd.f32 %v1714, %v1727
    %v1729 = vpop.f32.mrf.mxu0
    %v1730 = vadd.f32 %v1716, %v1729
    %1731 = vdwg.mxu0
    %1732 = vmatpush.bf16.msra.mxu0 %v1320
    %1733 = vmatpush.bf16.msra.mxu0 %v1316
    %1734 = vmatpush.bf16.msra.mxu0 %v1312
    %1735 = vmatpush.bf16.msra.mxu0 %v1308
    %1736 = vmatpush.bf16.msra.mxu0 %v1304
    %1737 = vmatpush.bf16.msra.mxu0 %v1300
    %1738 = vmatpush.bf16.msra.mxu0 %v1296
    %1739 = vmatpush.bf16.msra.mxu0 %v1292
    %1740 = vmatmul.bf16.gmra.mxu0 %v126
    %v1741 = vpop.f32.mrf.mxu0
    %v1742 = vadd.f32 %v1728, %v1741
    %v1743 = vpop.f32.mrf.mxu0
    %v1744 = vadd.f32 %v1730, %v1743
    %1745 = vdwg.mxu0
    %1746 = vmatpush.bf16.msra.mxu0 %v1352
    %1747 = vmatpush.bf16.msra.mxu0 %v1348
    %1748 = vmatpush.bf16.msra.mxu0 %v1344
    %1749 = vmatpush.bf16.msra.mxu0 %v1340
    %1750 = vmatpush.bf16.msra.mxu0 %v1336
    %1751 = vmatpush.bf16.msra.mxu0 %v1332
    %1752 = vmatpush.bf16.msra.mxu0 %v1328
    %1753 = vmatpush.bf16.msra.mxu0 %v1324
    %1754 = vmatmul.bf16.gmra.mxu0 %v127
    %v1755 = vpop.f32.mrf.mxu0
    %v1756 = vadd.f32 %v1742, %v1755
    %v1757 = vpop.f32.mrf.mxu0
    %v1758 = vadd.f32 %v1744, %v1757
    %1759 = vdwg.mxu0
    %1760 = vmatpush.bf16.msra.mxu0 %v1384
    %1761 = vmatpush.bf16.msra.mxu0 %v1380
    %1762 = vmatpush.bf16.msra.mxu0 %v1376
    %1763 = vmatpush.bf16.msra.mxu0 %v1372
    %1764 = vmatpush.bf16.msra.mxu0 %v1368
    %1765 = vmatpush.bf16.msra.mxu0 %v1364
    %1766 = vmatpush.bf16.msra.mxu0 %v1360
    %1767 = vmatpush.bf16.msra.mxu0 %v1356
    %1768 = vmatmul.bf16.gmra.mxu0 %v128
    %v1769 = vpop.f32.mrf.mxu0
    %v1770 = vadd.f32 %v1756, %v1769
    %v1771 = vpop.f32.mrf.mxu0
    %v1772 = vadd.f32 %v1758, %v1771
    %1773 = vdwg.mxu0
    %1774 = vmatpush.bf16.msra.mxu0 %v1416
    %1775 = vmatpush.bf16.msra.mxu0 %v1412
    %1776 = vmatpush.bf16.msra.mxu0 %v1408
    %1777 = vmatpush.bf16.msra.mxu0 %v1404
    %1778 = vmatpush.bf16.msra.mxu0 %v1400
    %1779 = vmatpush.bf16.msra.mxu0 %v1396
    %1780 = vmatpush.bf16.msra.mxu0 %v1392
    %1781 = vmatpush.bf16.msra.mxu0 %v1388
    %1782 = vmatmul.bf16.gmra.mxu0 %v129
    %v1783 = vpop.f32.mrf.mxu0
    %v1784 = vadd.f32 %v1770, %v1783
    %v1785 = vpop.f32.mrf.mxu0
    %v1786 = vadd.f32 %v1772, %v1785
    %1787 = vdwg.mxu0
    %1788 = vmatpush.bf16.msra.mxu0 %v1193
    %1789 = vmatpush.bf16.msra.mxu0 %v1189
    %1790 = vmatpush.bf16.msra.mxu0 %v1185
    %1791 = vmatpush.bf16.msra.mxu0 %v1181
    %1792 = vmatpush.bf16.msra.mxu0 %v1177
    %1793 = vmatpush.bf16.msra.mxu0 %v1173
    %1794 = vmatpush.bf16.msra.mxu0 %v1169
    %1795 = vmatpush.bf16.msra.mxu0 %v1165
    %1796 = vmatmul.bf16.gmra.mxu0 %v122
    %v1797 = vpop.f32.mrf.mxu0
    %v1798 = vadd.f32 %v389, %v1797
    %v1799 = vpop.f32.mrf.mxu0
    %v1800 = vadd.f32 %v389, %v1799
    %1801 = vdwg.mxu0
    %1802 = vmatpush.bf16.msra.mxu0 %v1225
    %1803 = vmatpush.bf16.msra.mxu0 %v1221
    %1804 = vmatpush.bf16.msra.mxu0 %v1217
    %1805 = vmatpush.bf16.msra.mxu0 %v1213
    %1806 = vmatpush.bf16.msra.mxu0 %v1209
    %1807 = vmatpush.bf16.msra.mxu0 %v1205
    %1808 = vmatpush.bf16.msra.mxu0 %v1201
    %1809 = vmatpush.bf16.msra.mxu0 %v1197
    %1810 = vmatmul.bf16.gmra.mxu0 %v123
    %v1811 = vpop.f32.mrf.mxu0
    %v1812 = vadd.f32 %v1798, %v1811
    %v1813 = vpop.f32.mrf.mxu0
    %v1814 = vadd.f32 %v1800, %v1813
    %1815 = vdwg.mxu0
    %1816 = vmatpush.bf16.msra.mxu0 %v1257
    %1817 = vmatpush.bf16.msra.mxu0 %v1253
    %1818 = vmatpush.bf16.msra.mxu0 %v1249
    %1819 = vmatpush.bf16.msra.mxu0 %v1245
    %1820 = vmatpush.bf16.msra.mxu0 %v1241
    %1821 = vmatpush.bf16.msra.mxu0 %v1237
    %1822 = vmatpush.bf16.msra.mxu0 %v1233
    %1823 = vmatpush.bf16.msra.mxu0 %v1229
    %1824 = vmatmul.bf16.gmra.mxu0 %v124
    %v1825 = vpop.f32.mrf.mxu0
    %v1826 = vadd.f32 %v1812, %v1825
    %v1827 = vpop.f32.mrf.mxu0
    %v1828 = vadd.f32 %v1814, %v1827
    %1829 = vdwg.mxu0
    %1830 = vmatpush.bf16.msra.mxu0 %v1289
    %1831 = vmatpush.bf16.msra.mxu0 %v1285
    %1832 = vmatpush.bf16.msra.mxu0 %v1281
    %1833 = vmatpush.bf16.msra.mxu0 %v1277
    %1834 = vmatpush.bf16.msra.mxu0 %v1273
    %1835 = vmatpush.bf16.msra.mxu0 %v1269
    %1836 = vmatpush.bf16.msra.mxu0 %v1265
    %1837 = vmatpush.bf16.msra.mxu0 %v1261
    %1838 = vmatmul.bf16.gmra.mxu0 %v125
    %v1839 = vpop.f32.mrf.mxu0
    %v1840 = vadd.f32 %v1826, %v1839
    %v1841 = vpop.f32.mrf.mxu0
    %v1842 = vadd.f32 %v1828, %v1841
    %1843 = vdwg.mxu0
    %1844 = vmatpush.bf16.msra.mxu0 %v1321
    %1845 = vmatpush.bf16.msra.mxu0 %v1317
    %1846 = vmatpush.bf16.msra.mxu0 %v1313
    %1847 = vmatpush.bf16.msra.mxu0 %v1309
    %1848 = vmatpush.bf16.msra.mxu0 %v1305
    %1849 = vmatpush.bf16.msra.mxu0 %v1301
    %1850 = vmatpush.bf16.msra.mxu0 %v1297
    %1851 = vmatpush.bf16.msra.mxu0 %v1293
    %1852 = vmatmul.bf16.gmra.mxu0 %v126
    %v1853 = vpop.f32.mrf.mxu0
    %v1854 = vadd.f32 %v1840, %v1853
    %v1855 = vpop.f32.mrf.mxu0
    %v1856 = vadd.f32 %v1842, %v1855
    %1857 = vdwg.mxu0
    %1858 = vmatpush.bf16.msra.mxu0 %v1353
    %1859 = vmatpush.bf16.msra.mxu0 %v1349
    %1860 = vmatpush.bf16.msra.mxu0 %v1345
    %1861 = vmatpush.bf16.msra.mxu0 %v1341
    %1862 = vmatpush.bf16.msra.mxu0 %v1337
    %1863 = vmatpush.bf16.msra.mxu0 %v1333
    %1864 = vmatpush.bf16.msra.mxu0 %v1329
    %1865 = vmatpush.bf16.msra.mxu0 %v1325
    %1866 = vmatmul.bf16.gmra.mxu0 %v127
    %v1867 = vpop.f32.mrf.mxu0
    %v1868 = vadd.f32 %v1854, %v1867
    %v1869 = vpop.f32.mrf.mxu0
    %v1870 = vadd.f32 %v1856, %v1869
    %1871 = vdwg.mxu0
    %1872 = vmatpush.bf16.msra.mxu0 %v1385
    %1873 = vmatpush.bf16.msra.mxu0 %v1381
    %1874 = vmatpush.bf16.msra.mxu0 %v1377
    %1875 = vmatpush.bf16.msra.mxu0 %v1373
    %1876 = vmatpush.bf16.msra.mxu0 %v1369
    %1877 = vmatpush.bf16.msra.mxu0 %v1365
    %1878 = vmatpush.bf16.msra.mxu0 %v1361
    %1879 = vmatpush.bf16.msra.mxu0 %v1357
    %1880 = vmatmul.bf16.gmra.mxu0 %v128
    %v1881 = vpop.f32.mrf.mxu0
    %v1882 = vadd.f32 %v1868, %v1881
    %v1883 = vpop.f32.mrf.mxu0
    %v1884 = vadd.f32 %v1870, %v1883
    %1885 = vdwg.mxu0
    %1886 = vmatpush.bf16.msra.mxu0 %v1417
    %1887 = vmatpush.bf16.msra.mxu0 %v1413
    %1888 = vmatpush.bf16.msra.mxu0 %v1409
    %1889 = vmatpush.bf16.msra.mxu0 %v1405
    %1890 = vmatpush.bf16.msra.mxu0 %v1401
    %1891 = vmatpush.bf16.msra.mxu0 %v1397
    %1892 = vmatpush.bf16.msra.mxu0 %v1393
    %1893 = vmatpush.bf16.msra.mxu0 %v1389
    %1894 = vmatmul.bf16.gmra.mxu0 %v129
    %v1895 = vpop.f32.mrf.mxu0
    %v1896 = vadd.f32 %v1882, %v1895
    %v1897 = vpop.f32.mrf.mxu0
    %v1898 = vadd.f32 %v1884, %v1897
    %1899 = vdwg.mxu0
    %1900 = vmatpush.bf16.msra.mxu0 %v1194
    %1901 = vmatpush.bf16.msra.mxu0 %v1190
    %1902 = vmatpush.bf16.msra.mxu0 %v1186
    %1903 = vmatpush.bf16.msra.mxu0 %v1182
    %1904 = vmatpush.bf16.msra.mxu0 %v1178
    %1905 = vmatpush.bf16.msra.mxu0 %v1174
    %1906 = vmatpush.bf16.msra.mxu0 %v1170
    %1907 = vmatpush.bf16.msra.mxu0 %v1166
    %1908 = vmatmul.bf16.gmra.mxu0 %v122
    %v1909 = vpop.f32.mrf.mxu0
    %v1910 = vadd.f32 %v390, %v1909
    %v1911 = vpop.f32.mrf.mxu0
    %v1912 = vadd.f32 %v390, %v1911
    %1913 = vdwg.mxu0
    %1914 = vmatpush.bf16.msra.mxu0 %v1226
    %1915 = vmatpush.bf16.msra.mxu0 %v1222
    %1916 = vmatpush.bf16.msra.mxu0 %v1218
    %1917 = vmatpush.bf16.msra.mxu0 %v1214
    %1918 = vmatpush.bf16.msra.mxu0 %v1210
    %1919 = vmatpush.bf16.msra.mxu0 %v1206
    %1920 = vmatpush.bf16.msra.mxu0 %v1202
    %1921 = vmatpush.bf16.msra.mxu0 %v1198
    %1922 = vmatmul.bf16.gmra.mxu0 %v123
    %v1923 = vpop.f32.mrf.mxu0
    %v1924 = vadd.f32 %v1910, %v1923
    %v1925 = vpop.f32.mrf.mxu0
    %v1926 = vadd.f32 %v1912, %v1925
    %1927 = vdwg.mxu0
    %1928 = vmatpush.bf16.msra.mxu0 %v1258
    %1929 = vmatpush.bf16.msra.mxu0 %v1254
    %1930 = vmatpush.bf16.msra.mxu0 %v1250
    %1931 = vmatpush.bf16.msra.mxu0 %v1246
    %1932 = vmatpush.bf16.msra.mxu0 %v1242
    %1933 = vmatpush.bf16.msra.mxu0 %v1238
    %1934 = vmatpush.bf16.msra.mxu0 %v1234
    %1935 = vmatpush.bf16.msra.mxu0 %v1230
    %1936 = vmatmul.bf16.gmra.mxu0 %v124
    %v1937 = vpop.f32.mrf.mxu0
    %v1938 = vadd.f32 %v1924, %v1937
    %v1939 = vpop.f32.mrf.mxu0
    %v1940 = vadd.f32 %v1926, %v1939
    %1941 = vdwg.mxu0
    %1942 = vmatpush.bf16.msra.mxu0 %v1290
    %1943 = vmatpush.bf16.msra.mxu0 %v1286
    %1944 = vmatpush.bf16.msra.mxu0 %v1282
    %1945 = vmatpush.bf16.msra.mxu0 %v1278
    %1946 = vmatpush.bf16.msra.mxu0 %v1274
    %1947 = vmatpush.bf16.msra.mxu0 %v1270
    %1948 = vmatpush.bf16.msra.mxu0 %v1266
    %1949 = vmatpush.bf16.msra.mxu0 %v1262
    %1950 = vmatmul.bf16.gmra.mxu0 %v125
    %v1951 = vpop.f32.mrf.mxu0
    %v1952 = vadd.f32 %v1938, %v1951
    %v1953 = vpop.f32.mrf.mxu0
    %v1954 = vadd.f32 %v1940, %v1953
    %1955 = vdwg.mxu0
    %1956 = vmatpush.bf16.msra.mxu0 %v1322
    %1957 = vmatpush.bf16.msra.mxu0 %v1318
    %1958 = vmatpush.bf16.msra.mxu0 %v1314
    %1959 = vmatpush.bf16.msra.mxu0 %v1310
    %1960 = vmatpush.bf16.msra.mxu0 %v1306
    %1961 = vmatpush.bf16.msra.mxu0 %v1302
    %1962 = vmatpush.bf16.msra.mxu0 %v1298
    %1963 = vmatpush.bf16.msra.mxu0 %v1294
    %1964 = vmatmul.bf16.gmra.mxu0 %v126
    %v1965 = vpop.f32.mrf.mxu0
    %v1966 = vadd.f32 %v1952, %v1965
    %v1967 = vpop.f32.mrf.mxu0
    %v1968 = vadd.f32 %v1954, %v1967
    %1969 = vdwg.mxu0
    %1970 = vmatpush.bf16.msra.mxu0 %v1354
    %1971 = vmatpush.bf16.msra.mxu0 %v1350
    %1972 = vmatpush.bf16.msra.mxu0 %v1346
    %1973 = vmatpush.bf16.msra.mxu0 %v1342
    %1974 = vmatpush.bf16.msra.mxu0 %v1338
    %1975 = vmatpush.bf16.msra.mxu0 %v1334
    %1976 = vmatpush.bf16.msra.mxu0 %v1330
    %1977 = vmatpush.bf16.msra.mxu0 %v1326
    %1978 = vmatmul.bf16.gmra.mxu0 %v127
    %v1979 = vpop.f32.mrf.mxu0
    %v1980 = vadd.f32 %v1966, %v1979
    %v1981 = vpop.f32.mrf.mxu0
    %v1982 = vadd.f32 %v1968, %v1981
    %1983 = vdwg.mxu0
    %1984 = vmatpush.bf16.msra.mxu0 %v1386
    %1985 = vmatpush.bf16.msra.mxu0 %v1382
    %1986 = vmatpush.bf16.msra.mxu0 %v1378
    %1987 = vmatpush.bf16.msra.mxu0 %v1374
    %1988 = vmatpush.bf16.msra.mxu0 %v1370
    %1989 = vmatpush.bf16.msra.mxu0 %v1366
    %1990 = vmatpush.bf16.msra.mxu0 %v1362
    %1991 = vmatpush.bf16.msra.mxu0 %v1358
    %1992 = vmatmul.bf16.gmra.mxu0 %v128
    %v1993 = vpop.f32.mrf.mxu0
    %v1994 = vadd.f32 %v1980, %v1993
    %v1995 = vpop.f32.mrf.mxu0
    %v1996 = vadd.f32 %v1982, %v1995
    %1997 = vdwg.mxu0
    %1998 = vmatpush.bf16.msra.mxu0 %v1418
    %1999 = vmatpush.bf16.msra.mxu0 %v1414
    %2000 = vmatpush.bf16.msra.mxu0 %v1410
    %2001 = vmatpush.bf16.msra.mxu0 %v1406
    %2002 = vmatpush.bf16.msra.mxu0 %v1402
    %2003 = vmatpush.bf16.msra.mxu0 %v1398
    %2004 = vmatpush.bf16.msra.mxu0 %v1394
    %2005 = vmatpush.bf16.msra.mxu0 %v1390
    %2006 = vmatmul.bf16.gmra.mxu0 %v129
    %v2007 = vpop.f32.mrf.mxu0
    %v2008 = vadd.f32 %v1994, %v2007
    %v2009 = vpop.f32.mrf.mxu0
    %v2010 = vadd.f32 %v1996, %v2009
    %2011 = vdwg.mxu0
    %2012 = vmatpush.bf16.msra.mxu0 %v1195
    %2013 = vmatpush.bf16.msra.mxu0 %v1191
    %2014 = vmatpush.bf16.msra.mxu0 %v1187
    %2015 = vmatpush.bf16.msra.mxu0 %v1183
    %2016 = vmatpush.bf16.msra.mxu0 %v1179
    %2017 = vmatpush.bf16.msra.mxu0 %v1175
    %2018 = vmatpush.bf16.msra.mxu0 %v1171
    %2019 = vmatpush.bf16.msra.mxu0 %v1167
    %2020 = vmatmul.bf16.gmra.mxu0 %v122
    %v2021 = vpop.f32.mrf.mxu0
    %v2022 = vadd.f32 %v391, %v2021
    %v2023 = vpop.f32.mrf.mxu0
    %v2024 = vadd.f32 %v391, %v2023
    %2025 = vdwg.mxu0
    %2026 = vmatpush.bf16.msra.mxu0 %v1227
    %2027 = vmatpush.bf16.msra.mxu0 %v1223
    %2028 = vmatpush.bf16.msra.mxu0 %v1219
    %2029 = vmatpush.bf16.msra.mxu0 %v1215
    %2030 = vmatpush.bf16.msra.mxu0 %v1211
    %2031 = vmatpush.bf16.msra.mxu0 %v1207
    %2032 = vmatpush.bf16.msra.mxu0 %v1203
    %2033 = vmatpush.bf16.msra.mxu0 %v1199
    %2034 = vmatmul.bf16.gmra.mxu0 %v123
    %v2035 = vpop.f32.mrf.mxu0
    %v2036 = vadd.f32 %v2022, %v2035
    %v2037 = vpop.f32.mrf.mxu0
    %v2038 = vadd.f32 %v2024, %v2037
    %2039 = vdwg.mxu0
    %2040 = vmatpush.bf16.msra.mxu0 %v1259
    %2041 = vmatpush.bf16.msra.mxu0 %v1255
    %2042 = vmatpush.bf16.msra.mxu0 %v1251
    %2043 = vmatpush.bf16.msra.mxu0 %v1247
    %2044 = vmatpush.bf16.msra.mxu0 %v1243
    %2045 = vmatpush.bf16.msra.mxu0 %v1239
    %2046 = vmatpush.bf16.msra.mxu0 %v1235
    %2047 = vmatpush.bf16.msra.mxu0 %v1231
    %2048 = vmatmul.bf16.gmra.mxu0 %v124
    %v2049 = vpop.f32.mrf.mxu0
    %v2050 = vadd.f32 %v2036, %v2049
    %v2051 = vpop.f32.mrf.mxu0
    %v2052 = vadd.f32 %v2038, %v2051
    %2053 = vdwg.mxu0
    %2054 = vmatpush.bf16.msra.mxu0 %v1291
    %2055 = vmatpush.bf16.msra.mxu0 %v1287
    %2056 = vmatpush.bf16.msra.mxu0 %v1283
    %2057 = vmatpush.bf16.msra.mxu0 %v1279
    %2058 = vmatpush.bf16.msra.mxu0 %v1275
    %2059 = vmatpush.bf16.msra.mxu0 %v1271
    %2060 = vmatpush.bf16.msra.mxu0 %v1267
    %2061 = vmatpush.bf16.msra.mxu0 %v1263
    %2062 = vmatmul.bf16.gmra.mxu0 %v125
    %v2063 = vpop.f32.mrf.mxu0
    %v2064 = vadd.f32 %v2050, %v2063
    %v2065 = vpop.f32.mrf.mxu0
    %v2066 = vadd.f32 %v2052, %v2065
    %2067 = vdwg.mxu0
    %2068 = vmatpush.bf16.msra.mxu0 %v1323
    %2069 = vmatpush.bf16.msra.mxu0 %v1319
    %2070 = vmatpush.bf16.msra.mxu0 %v1315
    %2071 = vmatpush.bf16.msra.mxu0 %v1311
    %2072 = vmatpush.bf16.msra.mxu0 %v1307
    %2073 = vmatpush.bf16.msra.mxu0 %v1303
    %2074 = vmatpush.bf16.msra.mxu0 %v1299
    %2075 = vmatpush.bf16.msra.mxu0 %v1295
    %2076 = vmatmul.bf16.gmra.mxu0 %v126
    %v2077 = vpop.f32.mrf.mxu0
    %v2078 = vadd.f32 %v2064, %v2077
    %v2079 = vpop.f32.mrf.mxu0
    %v2080 = vadd.f32 %v2066, %v2079
    %2081 = vdwg.mxu0
    %2082 = vmatpush.bf16.msra.mxu0 %v1355
    %2083 = vmatpush.bf16.msra.mxu0 %v1351
    %2084 = vmatpush.bf16.msra.mxu0 %v1347
    %2085 = vmatpush.bf16.msra.mxu0 %v1343
    %2086 = vmatpush.bf16.msra.mxu0 %v1339
    %2087 = vmatpush.bf16.msra.mxu0 %v1335
    %2088 = vmatpush.bf16.msra.mxu0 %v1331
    %2089 = vmatpush.bf16.msra.mxu0 %v1327
    %2090 = vmatmul.bf16.gmra.mxu0 %v127
    %v2091 = vpop.f32.mrf.mxu0
    %v2092 = vadd.f32 %v2078, %v2091
    %v2093 = vpop.f32.mrf.mxu0
    %v2094 = vadd.f32 %v2080, %v2093
    %2095 = vdwg.mxu0
    %2096 = vmatpush.bf16.msra.mxu0 %v1387
    %2097 = vmatpush.bf16.msra.mxu0 %v1383
    %2098 = vmatpush.bf16.msra.mxu0 %v1379
    %2099 = vmatpush.bf16.msra.mxu0 %v1375
    %2100 = vmatpush.bf16.msra.mxu0 %v1371
    %2101 = vmatpush.bf16.msra.mxu0 %v1367
    %2102 = vmatpush.bf16.msra.mxu0 %v1363
    %2103 = vmatpush.bf16.msra.mxu0 %v1359
    %2104 = vmatmul.bf16.gmra.mxu0 %v128
    %v2105 = vpop.f32.mrf.mxu0
    %v2106 = vadd.f32 %v2092, %v2105
    %v2107 = vpop.f32.mrf.mxu0
    %v2108 = vadd.f32 %v2094, %v2107
    %2109 = vdwg.mxu0
    %2110 = vmatpush.bf16.msra.mxu0 %v1419
    %2111 = vmatpush.bf16.msra.mxu0 %v1415
    %2112 = vmatpush.bf16.msra.mxu0 %v1411
    %2113 = vmatpush.bf16.msra.mxu0 %v1407
    %2114 = vmatpush.bf16.msra.mxu0 %v1403
    %2115 = vmatpush.bf16.msra.mxu0 %v1399
    %2116 = vmatpush.bf16.msra.mxu0 %v1395
    %2117 = vmatpush.bf16.msra.mxu0 %v1391
    %2118 = vmatmul.bf16.gmra.mxu0 %v129
    %v2119 = vpop.f32.mrf.mxu0
    %v2120 = vadd.f32 %v2106, %v2119
    %v2121 = vpop.f32.mrf.mxu0
    %v2122 = vadd.f32 %v2108, %v2121
    %2123 = vdwg.mxu0
    %v2124 = vmax.f32 %v1784, 0.0
    %v2125 = vmax.f32 %v1896, 0.0
    %v2126 = vmax.f32 %v2008, 0.0
    %v2127 = vmax.f32 %v2120, 0.0
    %v2128 = vmax.f32 %v1786, 0.0
    %v2129 = vmax.f32 %v1898, 0.0
    %v2130 = vmax.f32 %v2010, 0.0
    %v2131 = vmax.f32 %v2122, 0.0
    %v2132 = vpack.c.bf16 %v2128, %v2124
    %v2133 = vpack.c.bf16 %v2129, %v2125
    %v2134 = vpack.c.bf16 %v2130, %v2126
    %v2135 = vpack.c.bf16 %v2131, %v2127
    %v2136 = vld [vmem:[#allocation8] sm:$0xf]
    %v2137 = vld [vmem:[#allocation8 + $0x4] sm:$0xf]
    %v2138 = vld [vmem:[#allocation8 + $0x8] sm:$0xf]
    %v2139 = vld [vmem:[#allocation8 + $0xc] sm:$0xf]
    %v2140 = vld [vmem:[#allocation8 + $0x10] sm:$0xf]
    %v2141 = vld [vmem:[#allocation8 + $0x14] sm:$0xf]
    %v2142 = vld [vmem:[#allocation8 + $0x18] sm:$0xf]
    %v2143 = vld [vmem:[#allocation8 + $0x1c] sm:$0xf]
    %v2144 = vld [vmem:[#allocation8 + $0x20] sm:$0xf]
    %v2145 = vld [vmem:[#allocation8 + $0x24] sm:$0xf]
    %v2146 = vld [vmem:[#allocation8 + $0x28] sm:$0xf]
    %v2147 = vld [vmem:[#allocation8 + $0x2c] sm:$0xf]
    %v2148 = vld [vmem:[#allocation8 + $0x30] sm:$0xf]
    %v2149 = vld [vmem:[#allocation8 + $0x34] sm:$0xf]
    %v2150 = vld [vmem:[#allocation8 + $0x38] sm:$0xf]
    %v2151 = vld [vmem:[#allocation8 + $0x3c] sm:$0xf]
    %v2152 = vld [vmem:[#allocation8 + $0x40] sm:$0xf]
    %v2153 = vld [vmem:[#allocation8 + $0x44] sm:$0xf]
    %v2154 = vld [vmem:[#allocation8 + $0x48] sm:$0xf]
    %v2155 = vld [vmem:[#allocation8 + $0x4c] sm:$0xf]
    %v2156 = vld [vmem:[#allocation8 + $0x50] sm:$0xf]
    %v2157 = vld [vmem:[#allocation8 + $0x54] sm:$0xf]
    %v2158 = vld [vmem:[#allocation8 + $0x58] sm:$0xf]
    %v2159 = vld [vmem:[#allocation8 + $0x5c] sm:$0xf]
    %v2160 = vld [vmem:[#allocation8 + $0x60] sm:$0xf]
    %v2161 = vld [vmem:[#allocation8 + $0x64] sm:$0xf]
    %v2162 = vld [vmem:[#allocation8 + $0x68] sm:$0xf]
    %v2163 = vld [vmem:[#allocation8 + $0x6c] sm:$0xf]
    %v2164 = vld [vmem:[#allocation8 + $0x70] sm:$0xf]
    %v2165 = vld [vmem:[#allocation8 + $0x74] sm:$0xf]
    %v2166 = vld [vmem:[#allocation8 + $0x78] sm:$0xf]
    %v2167 = vld [vmem:[#allocation8 + $0x7c] sm:$0xf]
    %v2168 = vld [vmem:[#allocation8 + $0x80] sm:$0xf]
    %v2169 = vld [vmem:[#allocation8 + $0x84] sm:$0xf]
    %v2170 = vld [vmem:[#allocation8 + $0x88] sm:$0xf]
    %v2171 = vld [vmem:[#allocation8 + $0x8c] sm:$0xf]
    %v2172 = vld [vmem:[#allocation8 + $0x90] sm:$0xf]
    %v2173 = vld [vmem:[#allocation8 + $0x94] sm:$0xf]
    %v2174 = vld [vmem:[#allocation8 + $0x98] sm:$0xf]
    %v2175 = vld [vmem:[#allocation8 + $0x9c] sm:$0xf]
    %v2176 = vld [vmem:[#allocation8 + $0xa0] sm:$0xf]
    %v2177 = vld [vmem:[#allocation8 + $0xa4] sm:$0xf]
    %v2178 = vld [vmem:[#allocation8 + $0xa8] sm:$0xf]
    %v2179 = vld [vmem:[#allocation8 + $0xac] sm:$0xf]
    %v2180 = vld [vmem:[#allocation8 + $0xb0] sm:$0xf]
    %v2181 = vld [vmem:[#allocation8 + $0xb4] sm:$0xf]
    %v2182 = vld [vmem:[#allocation8 + $0xb8] sm:$0xf]
    %v2183 = vld [vmem:[#allocation8 + $0xbc] sm:$0xf]
    %v2184 = vld [vmem:[#allocation8 + $0xc0] sm:$0xf]
    %v2185 = vld [vmem:[#allocation8 + $0xc4] sm:$0xf]
    %v2186 = vld [vmem:[#allocation8 + $0xc8] sm:$0xf]
    %v2187 = vld [vmem:[#allocation8 + $0xcc] sm:$0xf]
    %v2188 = vld [vmem:[#allocation8 + $0xd0] sm:$0xf]
    %v2189 = vld [vmem:[#allocation8 + $0xd4] sm:$0xf]
    %v2190 = vld [vmem:[#allocation8 + $0xd8] sm:$0xf]
    %v2191 = vld [vmem:[#allocation8 + $0xdc] sm:$0xf]
    %v2192 = vld [vmem:[#allocation8 + $0xe0] sm:$0xf]
    %v2193 = vld [vmem:[#allocation8 + $0xe4] sm:$0xf]
    %v2194 = vld [vmem:[#allocation8 + $0xe8] sm:$0xf]
    %v2195 = vld [vmem:[#allocation8 + $0xec] sm:$0xf]
    %v2196 = vld [vmem:[#allocation8 + $0xf0] sm:$0xf]
    %v2197 = vld [vmem:[#allocation8 + $0xf4] sm:$0xf]
    %v2198 = vld [vmem:[#allocation8 + $0xf8] sm:$0xf]
    %v2199 = vld [vmem:[#allocation8 + $0xfc] sm:$0xf]
    %v2200 = vld [vmem:[%s4] sm:$0x1]
    %v2202 = vperm.slane %v2200, 0
    %v2268 = vunpack.c.l.b16 %v2136
    %v2269 = vunpack.c.l.b16 %v2137
    %v2270 = vunpack.c.l.b16 %v2138
    %v2271 = vunpack.c.l.b16 %v2139
    %v2272 = vunpack.c.l.b16 %v2140
    %v2273 = vunpack.c.l.b16 %v2141
    %v2274 = vunpack.c.l.b16 %v2142
    %v2275 = vunpack.c.l.b16 %v2143
    %v2276 = vunpack.c.l.b16 %v2144
    %v2277 = vunpack.c.l.b16 %v2145
    %v2278 = vunpack.c.l.b16 %v2146
    %v2279 = vunpack.c.l.b16 %v2147
    %v2280 = vunpack.c.l.b16 %v2148
    %v2281 = vunpack.c.l.b16 %v2149
    %v2282 = vunpack.c.l.b16 %v2150
    %v2283 = vunpack.c.l.b16 %v2151
    %v2284 = vunpack.c.l.b16 %v2152
    %v2285 = vunpack.c.l.b16 %v2153
    %v2286 = vunpack.c.l.b16 %v2154
    %v2287 = vunpack.c.l.b16 %v2155
    %v2288 = vunpack.c.l.b16 %v2156
    %v2289 = vunpack.c.l.b16 %v2157
    %v2290 = vunpack.c.l.b16 %v2158
    %v2291 = vunpack.c.l.b16 %v2159
    %v2292 = vunpack.c.l.b16 %v2160
    %v2293 = vunpack.c.l.b16 %v2161
    %v2294 = vunpack.c.l.b16 %v2162
    %v2295 = vunpack.c.l.b16 %v2163
    %v2296 = vunpack.c.l.b16 %v2164
    %v2297 = vunpack.c.l.b16 %v2165
    %v2298 = vunpack.c.l.b16 %v2166
    %v2299 = vunpack.c.l.b16 %v2167
    %v2300 = vunpack.c.l.b16 %v2168
    %v2301 = vunpack.c.l.b16 %v2169
    %v2302 = vunpack.c.l.b16 %v2170
    %v2303 = vunpack.c.l.b16 %v2171
    %v2304 = vunpack.c.l.b16 %v2172
    %v2305 = vunpack.c.l.b16 %v2173
    %v2306 = vunpack.c.l.b16 %v2174
    %v2307 = vunpack.c.l.b16 %v2175
    %v2308 = vunpack.c.l.b16 %v2176
    %v2309 = vunpack.c.l.b16 %v2177
    %v2310 = vunpack.c.l.b16 %v2178
    %v2311 = vunpack.c.l.b16 %v2179
    %v2312 = vunpack.c.l.b16 %v2180
    %v2313 = vunpack.c.l.b16 %v2181
    %v2314 = vunpack.c.l.b16 %v2182
    %v2315 = vunpack.c.l.b16 %v2183
    %v2316 = vunpack.c.l.b16 %v2184
    %v2317 = vunpack.c.l.b16 %v2185
    %v2318 = vunpack.c.l.b16 %v2186
    %v2319 = vunpack.c.l.b16 %v2187
    %v2320 = vunpack.c.l.b16 %v2188
    %v2321 = vunpack.c.l.b16 %v2189
    %v2322 = vunpack.c.l.b16 %v2190
    %v2323 = vunpack.c.l.b16 %v2191
    %v2324 = vunpack.c.l.b16 %v2192
    %v2325 = vunpack.c.l.b16 %v2193
    %v2326 = vunpack.c.l.b16 %v2194
    %v2327 = vunpack.c.l.b16 %v2195
    %v2328 = vunpack.c.l.b16 %v2196
    %v2329 = vunpack.c.l.b16 %v2197
    %v2330 = vunpack.c.l.b16 %v2198
    %v2331 = vunpack.c.l.b16 %v2199
    %v2332 = vpack.c.b16 %v2269, %v2268
    %v2333 = vpack.c.b16 %v2271, %v2270
    %v2334 = vpack.c.b16 %v2273, %v2272
    %v2335 = vpack.c.b16 %v2275, %v2274
    %v2336 = vpack.c.b16 %v2277, %v2276
    %v2337 = vpack.c.b16 %v2279, %v2278
    %v2338 = vpack.c.b16 %v2281, %v2280
    %v2339 = vpack.c.b16 %v2283, %v2282
    %v2340 = vpack.c.b16 %v2285, %v2284
    %v2341 = vpack.c.b16 %v2287, %v2286
    %v2342 = vpack.c.b16 %v2289, %v2288
    %v2343 = vpack.c.b16 %v2291, %v2290
    %v2344 = vpack.c.b16 %v2293, %v2292
    %v2345 = vpack.c.b16 %v2295, %v2294
    %v2346 = vpack.c.b16 %v2297, %v2296
    %v2347 = vpack.c.b16 %v2299, %v2298
    %v2348 = vpack.c.b16 %v2301, %v2300
    %v2349 = vpack.c.b16 %v2303, %v2302
    %v2350 = vpack.c.b16 %v2305, %v2304
    %v2351 = vpack.c.b16 %v2307, %v2306
    %v2352 = vpack.c.b16 %v2309, %v2308
    %v2353 = vpack.c.b16 %v2311, %v2310
    %v2354 = vpack.c.b16 %v2313, %v2312
    %v2355 = vpack.c.b16 %v2315, %v2314
    %v2356 = vpack.c.b16 %v2317, %v2316
    %v2357 = vpack.c.b16 %v2319, %v2318
    %v2358 = vpack.c.b16 %v2321, %v2320
    %v2359 = vpack.c.b16 %v2323, %v2322
    %v2360 = vpack.c.b16 %v2325, %v2324
    %v2361 = vpack.c.b16 %v2327, %v2326
    %v2362 = vpack.c.b16 %v2329, %v2328
    %v2363 = vpack.c.b16 %v2331, %v2330
    %2396 = vmatpush.bf16.msra.mxu0 %v2339
    %2397 = vmatpush.bf16.msra.mxu0 %v2338
    %2398 = vmatpush.bf16.msra.mxu0 %v2337
    %2399 = vmatpush.bf16.msra.mxu0 %v2336
    %2400 = vmatpush.bf16.msra.mxu0 %v2335
    %2401 = vmatpush.bf16.msra.mxu0 %v2334
    %2402 = vmatpush.bf16.msra.mxu0 %v2333
    %2403 = vmatpush.bf16.msra.mxu0 %v2332
    %2404 = vmatmul.bf16.gmra.mxu0 %v2132
    %v2405 = vpop.f32.mrf.mxu0
    %v2406 = vadd.f32 %v2202, %v2405
    %v2407 = vpop.f32.mrf.mxu0
    %v2408 = vadd.f32 %v2202, %v2407
    %2409 = vdwg.mxu0
    %2410 = vmatpush.bf16.msra.mxu0 %v2347
    %2411 = vmatpush.bf16.msra.mxu0 %v2346
    %2412 = vmatpush.bf16.msra.mxu0 %v2345
    %2413 = vmatpush.bf16.msra.mxu0 %v2344
    %2414 = vmatpush.bf16.msra.mxu0 %v2343
    %2415 = vmatpush.bf16.msra.mxu0 %v2342
    %2416 = vmatpush.bf16.msra.mxu0 %v2341
    %2417 = vmatpush.bf16.msra.mxu0 %v2340
    %2418 = vmatmul.bf16.gmra.mxu0 %v2133
    %v2419 = vpop.f32.mrf.mxu0
    %v2420 = vadd.f32 %v2406, %v2419
    %v2421 = vpop.f32.mrf.mxu0
    %v2422 = vadd.f32 %v2408, %v2421
    %2423 = vdwg.mxu0
    %2424 = vmatpush.bf16.msra.mxu0 %v2355
    %2425 = vmatpush.bf16.msra.mxu0 %v2354
    %2426 = vmatpush.bf16.msra.mxu0 %v2353
    %2427 = vmatpush.bf16.msra.mxu0 %v2352
    %2428 = vmatpush.bf16.msra.mxu0 %v2351
    %2429 = vmatpush.bf16.msra.mxu0 %v2350
    %2430 = vmatpush.bf16.msra.mxu0 %v2349
    %2431 = vmatpush.bf16.msra.mxu0 %v2348
    %2432 = vmatmul.bf16.gmra.mxu0 %v2134
    %v2433 = vpop.f32.mrf.mxu0
    %v2434 = vadd.f32 %v2420, %v2433
    %v2435 = vpop.f32.mrf.mxu0
    %v2436 = vadd.f32 %v2422, %v2435
    %2437 = vdwg.mxu0
    %2438 = vmatpush.bf16.msra.mxu0 %v2363
    %2439 = vmatpush.bf16.msra.mxu0 %v2362
    %2440 = vmatpush.bf16.msra.mxu0 %v2361
    %2441 = vmatpush.bf16.msra.mxu0 %v2360
    %2442 = vmatpush.bf16.msra.mxu0 %v2359
    %2443 = vmatpush.bf16.msra.mxu0 %v2358
    %2444 = vmatpush.bf16.msra.mxu0 %v2357
    %2445 = vmatpush.bf16.msra.mxu0 %v2356
    %2446 = vmatmul.bf16.gmra.mxu0 %v2135
    %v2447 = vpop.f32.mrf.mxu0
    %v2448 = vadd.f32 %v2434, %v2447
    %v2449 = vpop.f32.mrf.mxu0
    %v2450 = vadd.f32 %v2436, %v2449
    %2451 = vdwg.mxu0
    %2452 = vst [vmem:[#allocation10] sm:$0xff] %v2448
    %2453 = vst [vmem:[#allocation10 + $0x8] sm:$0xff] %v2450
    // Predicated region
    $region38: #{tpu_custom_call.1} parent=1 // pred_check
      _
    $region39: #{tpu_custom_call.1} parent=1 // pred_check_branch
      %2455 = sbr.rel (0) target = $region41
    $region40: #{tpu_custom_call.1} parent=1 // pred_region
      %2457 = vsyncadd [#allocation4], 0
      %s2458 = sshll.u32 [#allocation10], 4
      %s2459 = int_to_ptr.vmem [resolvable:$true] %s2458
      %s2460 = sshll.u32 %s5, 4
      %s2461 = int_to_ptr.hbm [resolvable:$true] %s2460
      %2466 = dma.vmem_to_hbm [thread:$0]  %s2459, 256, %s2461, [#allocation4], 128, 128, 8
    $region41: #{tpu_custom_call.1} parent=1 // pred_fallthru
      _
    // Predicated region
    $region42: #{tpu_custom_call.1} parent=1 // pred_check
      _
    $region43: #{tpu_custom_call.1} parent=1 // pred_check_branch
      %2468 = sbr.rel (0) target = $region45
    $region44: #{tpu_custom_call.1} parent=1 // pred_region
      %2470 = dma.done [#allocation4], 256
    $region45: #{tpu_custom_call.1} parent=1 // pred_fallthru
      _
    %2471 = vsyncpa [#allocation3], 1
    %2472 = vsyncpa [#allocation6], 1
    %2473 = vsyncpa [#allocation9], 1
    %2474 = vsyncpa [#allocation4], 1

</llo_original>
